<compile_context>
chip_gen: v6e
topology: v6e:2x2x1
jax: 0.10.0
libtpu: 0.0.40
codegen_flags: <defaults>
</compile_context>

<pallas_src>
import jax
import jax.numpy as jnp
from jax import lax
from jax.experimental import pallas as pl
from jax.experimental.pallas import tpu as pltpu

VMEM_SPEC = pl.BlockSpec(memory_space=pltpu.MemorySpace.VMEM)

# Default scoped VMEM is 16 MiB (v5e) / 32 MiB (v6e/v7x); raise explicitly so
# larger tiles compile without falling back to tiny blocks.
_VMEM_LIMIT = 64 * 1024 * 1024


def _mosaic(dims=None, vmem_bytes=_VMEM_LIMIT):
    return pltpu.CompilerParams(dimension_semantics=dims,
                                vmem_limit_bytes=vmem_bytes)


# --------------------------------------------------------------------------
# Shared gate math (PyTorch LSTM gate order: i, f, g, o)
# --------------------------------------------------------------------------
def _sigmoid(x):
    # sigmoid via tanh: 1 EUP op per element instead of exp + divide (2).
    return 0.5 * jnp.tanh(0.5 * x) + 0.5


def _gates(pre, H):
    i = _sigmoid(pre[:, 0 * H:1 * H])
    f = _sigmoid(pre[:, 1 * H:2 * H])
    g = jnp.tanh(pre[:, 2 * H:3 * H])
    o = _sigmoid(pre[:, 3 * H:4 * H])
    return i, f, g, o


# --------------------------------------------------------------------------
# Kernel 1: fused image front-end
#   imageEmbed = image @ Wimg + bimg                     (imgNet, eval: dropout = id)
#   [fe0 | h0 | c0] = imageEmbed @ [Wh | Ws0 | Ws1] + b  (im2hids / im2states fused)
# --------------------------------------------------------------------------
def _img_frontend_kernel(img_ref, wimg_ref, bimg_ref, wf_ref, bf_ref, proj_ref):
    wimg = wimg_ref[...]
    wf = wf_ref[...]
    ie = (jnp.dot(img_ref[...].astype(wimg.dtype), wimg,
                  preferred_element_type=jnp.float32) + bimg_ref[...])
    proj_ref[...] = (jnp.dot(ie.astype(wf.dtype), wf,
                             preferred_element_type=jnp.float32) + bf_ref[...])


def img_frontend(image, params):
    B = image.shape[0]
    H3 = params["im2_fused_w"].shape[1]
    return pl.pallas_call(
        _img_frontend_kernel,
        out_shape=jax.ShapeDtypeStruct((B, H3), jnp.float32),
        in_specs=[VMEM_SPEC] * 5,
        out_specs=VMEM_SPEC,
        compiler_params=_mosaic(),
    )(image, params["imgNet_w"], params["imgNet_b"],
      params["im2_fused_w"], params["im2_fused_b"])


# --------------------------------------------------------------------------
# Kernel 2a: hoisted factRNN layer-0 input projection, streamed over T.
#   xp[t] = x[t] @ Wih0 + (b_ih0 + b_hh0)      x: (T, N, E) bf16 -> xp f32
# --------------------------------------------------------------------------
def _inproj_kernel(x_ref, w_ref, b_ref, o_ref):
    o_ref[0] = (jnp.dot(x_ref[0], w_ref[...],
                        preferred_element_type=jnp.float32) + b_ref[...])


# --------------------------------------------------------------------------
# Kernel 2b: 2-layer dynamicRNN (factRNN) recurrence, grid=(N_blocks, T).
#   xp blocks stream in per step; h/c in persistent VMEM scratch;
#   per-example final states latched into VMEM-resident hn/cn output blocks.
# --------------------------------------------------------------------------
def _fact_lstm_kernel(xp_ref, lens_ref, whh0_ref, wl1_ref, b1_ref,
                      hn_ref, cn_ref, h0_ref, c0_ref, h1_ref, c1_ref):
    t = pl.program_id(1)
    H = whh0_ref.shape[0]
    whh0 = whh0_ref[...]
    wl1 = wl1_ref[...]
    b1 = b1_ref[...]

    @pl.when(t == 0)
    def _():
        h0_ref[...] = jnp.zeros_like(h0_ref)
        c0_ref[...] = jnp.zeros_like(c0_ref)
        h1_ref[...] = jnp.zeros_like(h1_ref)
        c1_ref[...] = jnp.zeros_like(c1_ref)
        hn_ref[...] = jnp.zeros_like(hn_ref)
        cn_ref[...] = jnp.zeros_like(cn_ref)

    # layer 0: hoisted input projection streams in; only the recurrent matmul
    # stays on the serial critical path.
    pre0 = xp_ref[0] + jnp.dot(h0_ref[...].astype(whh0.dtype), whh0,
                               preferred_element_type=jnp.float32)
    i0, f0, g0, o0 = _gates(pre0, H)
    c0 = f0 * c0_ref[...] + i0 * g0
    h0 = o0 * jnp.tanh(c0)

    # layer 1: wih1/whh1 fused into a single (2H, 4H) weight -> one MXU push.
    hcat = jnp.concatenate([h0, h1_ref[...]], axis=-1).astype(wl1.dtype)
    pre1 = jnp.dot(hcat, wl1, preferred_element_type=jnp.float32) + b1
    i1, f1, g1, o1 = _gates(pre1, H)
    c1 = f1 * c1_ref[...] + i1 * g1
    h1 = o1 * jnp.tanh(c1)

    h0_ref[...] = h0
    c0_ref[...] = c0
    h1_ref[...] = h1
    c1_ref[...] = c1

    # latch per-example final states (dynamicRNN semantics) directly into the
    # resident output blocks (no extra carried arrays).
    last = lens_ref[...] == (t + 1)                 # (nb, 1), broadcasts over H
    hn_ref[0] = jnp.where(last, h0, hn_ref[0])
    cn_ref[0] = jnp.where(last, c0, cn_ref[0])
    hn_ref[1] = jnp.where(last, h1, hn_ref[1])
    cn_ref[1] = jnp.where(last, c1, cn_ref[1])


def _pick_n_block(N):
    # Split N (= rounds*batch, independent rows) across a leading "parallel"
    # grid axis (megacore on v7x) when it divides into sublane-friendly
    # chunks; otherwise keep one block covering all of N.
    for nb in (256, 128, 64, 32, 16, 8):
        if N % nb == 0:
            return nb
    return N


def fact_lstm(x_tm, lens, p):
    """2-layer dynamicRNN over a time-major batch.
    x_tm: (T, N, E) bf16 embedded tokens; lens: (N,) valid lengths.
    Returns (h_n, c_n), each (numLayers=2, N, H) (nn.LSTM state layout)."""
    T, N, E = x_tm.shape
    H = p["whh0"].shape[0]
    H4 = 4 * H

    # Stage 1: hoisted layer-0 projection as its own streamed matmul.
    xp = pl.pallas_call(
        _inproj_kernel,
        out_shape=jax.ShapeDtypeStruct((T, N, H4), jnp.float32),
        grid=(T,),
        in_specs=[pl.BlockSpec((1, N, E), lambda t: (t, 0, 0)),
                  pl.BlockSpec((E, H4), lambda t: (0, 0)),
                  pl.BlockSpec((1, H4), lambda t: (0, 0))],
        out_specs=pl.BlockSpec((1, N, H4), lambda t: (t, 0, 0)),
        compiler_params=_mosaic(("parallel",)),
    )(x_tm, p["wih0"], p["b0"])

    # Stage 2: recurrence over T with streamed per-step xp blocks.
    nb = _pick_n_block(N)
    lens2 = lens.reshape(N, 1).astype(jnp.int32)
    # TODO(synk): on v7x, consider pipeline_mode=pl.Buffered(3) on the xp spec
    # once VMEM headroom is verified; and fuse the embedding gather into this
    # pipeline via scalar-prefetched token ids to avoid the HBM round-trip.
    hn, cn = pl.pallas_call(
        _fact_lstm_kernel,
        out_shape=(jax.ShapeDtypeStruct((2, N, H), jnp.float32),
                   jax.ShapeDtypeStruct((2, N, H), jnp.float32)),
        grid=(N // nb, T),
        in_specs=[pl.BlockSpec((1, nb, H4), lambda n, t: (t, n, 0)),
                  pl.BlockSpec((nb, 1), lambda n, t: (n, 0)),
                  pl.BlockSpec((H, H4), lambda n, t: (0, 0)),
                  pl.BlockSpec((2 * H, H4), lambda n, t: (0, 0)),
                  pl.BlockSpec((1, H4), lambda n, t: (0, 0))],
        out_specs=(pl.BlockSpec((2, nb, H), lambda n, t: (0, n, 0)),
                   pl.BlockSpec((2, nb, H), lambda n, t: (0, n, 0))),
        scratch_shapes=[pltpu.VMEM((nb, H), jnp.float32)] * 4,
        compiler_params=_mosaic(("parallel", "arbitrary")),
    )(xp, lens2, p["whh0"], p["w_l1"], p["b1"])
    return hn, cn


# --------------------------------------------------------------------------
# Kernel 3: dialogRNN (nn.LSTMCell iterated over rounds, zero init state).
#   grid=(T,); state lives in the VMEM-resident h/c output blocks;
#   wih/whh fused into one (2H, 4H) weight.
# --------------------------------------------------------------------------
def _dialog_kernel(x_ref, w_ref, b_ref, h_ref, c_ref):
    t = pl.program_id(0)
    H = h_ref.shape[1]
    w = w_ref[...]

    @pl.when(t == 0)
    def _():
        h_ref[...] = jnp.zeros_like(h_ref)
        c_ref[...] = jnp.zeros_like(c_ref)

    xin = jnp.concatenate([x_ref[0], h_ref[...]], axis=-1).astype(w.dtype)
    pre = jnp.dot(xin, w, preferred_element_type=jnp.float32) + b_ref[...]
    i, f, g, o = _gates(pre, H)
    c = f * c_ref[...] + i * g
    h_ref[...] = o * jnp.tanh(c)
    c_ref[...] = c


def dialog_rnn(x_3d, p):
    T, B, H = x_3d.shape
    return pl.pallas_call(
        _dialog_kernel,
        out_shape=(jax.ShapeDtypeStruct((B, H), jnp.float32),
                   jax.ShapeDtypeStruct((B, H), jnp.float32)),
        grid=(T,),
        in_specs=[pl.BlockSpec((1, B, H), lambda t: (t, 0, 0)),
                  pl.BlockSpec((2 * H, 4 * H), lambda t: (0, 0)),
                  pl.BlockSpec((1, 4 * H), lambda t: (0, 0))],
        out_specs=(pl.BlockSpec((B, H), lambda t: (0, 0)),
                   pl.BlockSpec((B, H), lambda t: (0, 0))),
        compiler_params=_mosaic(("arbitrary",)),
    )(x_3d, p["w"], p["b"])


# --------------------------------------------------------------------------
# Glue (token concat, embedding gather, parameters, forward orchestration)
# --------------------------------------------------------------------------
def concat_padded(seqs, lens):
    """utils.concatPaddedSequences with padding='right' (pure index glue)."""
    B = seqs[0].shape[0]
    total_T = sum(int(s.shape[1]) for s in seqs)
    out = jnp.zeros((B, total_T), jnp.int32)
    pos = jnp.arange(total_T, dtype=jnp.int32)[None, :]
    offset = jnp.zeros((B, 1), jnp.int32)
    for s, l in zip(seqs, lens):
        l = l.reshape(B, 1).astype(jnp.int32)
        idx = pos - offset
        valid = (idx >= 0) & (idx < l)
        idx_c = jnp.clip(idx, 0, s.shape[1] - 1)
        gathered = jnp.take_along_axis(s, idx_c, axis=1)
        out = jnp.where(valid, gathered, out)
        offset = offset + l
    return out


def init_params(key, cfg):
    V, E, H = cfg["vocabSize"], cfg["embedSize"], cfg["rnnHiddenSize"]
    IE, IF = cfg["imgEmbedSize"], cfg["imgFeatureSize"]
    ks = iter(jax.random.split(key, 48))
    WDT = jnp.bfloat16      # matmul-operand dtype; accumulation stays f32

    def nrm(shape, dtype=jnp.float32):
        return (jax.random.normal(next(ks), shape, jnp.float32) * 0.1).astype(dtype)

    table = nrm((V, E), WDT).at[0].set(0.0)      # padding_idx=0 -> zero row

    # factRNN (weights transposed; fused bias = b_ih + b_hh)
    wih0 = nrm((E, 4 * H), WDT)
    whh0 = nrm((H, 4 * H), WDT)
    b0 = nrm((1, 4 * H)) + nrm((1, 4 * H))
    w_l1 = jnp.concatenate([nrm((H, 4 * H), WDT), nrm((H, 4 * H), WDT)], axis=0)
    b1 = nrm((1, 4 * H)) + nrm((1, 4 * H))

    # dialogRNN LSTMCell (wih/whh fused into one (2H, 4H) weight)
    w_d = jnp.concatenate([nrm((H, 4 * H), WDT), nrm((H, 4 * H), WDT)], axis=0)
    b_d = nrm((1, 4 * H)) + nrm((1, 4 * H))

    # im2hids / im2states[0] / im2states[1] fused into one (IE, 3H) projection
    im2_ws = [nrm((IE, H), WDT) for _ in range(3)]
    im2_bs = [nrm((1, H)) for _ in range(3)]

    # NOTE: quesRNN parameters are omitted: the reference forward runs
    # embedQuestion but its results never reach (H_link, C_link) (dead code).
    return {
        "wordEmbed": table,
        "imgNet_w": nrm((IF, IE), WDT), "imgNet_b": nrm((1, IE)),
        "im2_fused_w": jnp.concatenate(im2_ws, axis=1),   # (IE, 3H)
        "im2_fused_b": jnp.concatenate(im2_bs, axis=1),   # (1, 3H)
        "factRNN": {"wih0": wih0, "whh0": whh0, "b0": b0, "w_l1": w_l1, "b1": b1},
        "dialogRNN": {"w": w_d, "b": b_d},
    }


def encoder_forward(params, image, ques, quesLens, ans, ansLens, ans2, ansLens2):
    """Encoder.forward after observing `image` and R rounds of (ques, ans, ans2).
    useIm == 'early', numLayers == 2, eval mode (imgEmbedDropout is identity)."""
    B = image.shape[0]
    R = len(ques)
    H = params["factRNN"]["whh0"].shape[0]

    # embedInputDialog + embedFact(0): imgNet / im2hids / im2states fused
    img_proj = img_frontend(image, params)
    fe0 = img_proj[:, 0 * H:1 * H]
    h0_img = img_proj[:, 1 * H:2 * H]
    c0_img = img_proj[:, 2 * H:3 * H]

    if R > 0:
        # embedFact(1..R): all rounds batched into one gather + one fact LSTM
        qaa_tok = jnp.stack(
            [concat_padded([ques[r], ans[r], ans2[r]],
                           [quesLens[r], ansLens[r], ansLens2[r]])
             for r in range(R)], axis=0)                      # (R, B, Tqaa)
        qaa_len = jnp.stack(
            [quesLens[r] + ansLens[r] + ansLens2[r] for r in range(R)],
            axis=0).reshape(R * B).astype(jnp.int32)          # (R*B,)
        Tqaa = qaa_tok.shape[-1]
        # time-major token ids -> (T, N, E) embedded slab for the LSTM kernels.
        # TODO(synk): fuse this gather into the fact-LSTM pipeline via scalar-
        # prefetched token ids to avoid the extra HBM write/read of the slab.
        tok_tm = qaa_tok.reshape(R * B, Tqaa).T               # (Tqaa, R*B)
        qaa_emb = jnp.take(params["wordEmbed"], tok_tm, axis=0)   # (T, N, E) bf16
        hn, cn = fact_lstm(qaa_emb, qaa_len, params["factRNN"])
        hn = hn.reshape(2, R, B, H)
        cn = cn.reshape(2, R, B, H)
        fact_h = hn[1]                                        # (R, B, H) layer-1 final hidden
        # concatDialogRNNInput (useIm=='early': just the fact embedding), time-major
        dialog_in = jnp.concatenate([fe0[None], fact_h], axis=0)   # (R+1, B, H)
        hn_last = hn[:, R - 1]                                # (2, B, H)
        cn_last = cn[:, R - 1]
    else:
        dialog_in = fe0[None]
        hn_last = h0_img
        cn_last = c0_img

    # NOTE: embedQuestion / quesRNN of the reference never reaches the returned
    # (H_link, C_link); under jit it is dead code, so it is skipped here.

    # embedDialog
    dialogHidden, _dialogCell = dialog_rnn(dialog_in, params["dialogRNN"])

    if R == 0:
        C_link = cn_last                                       # (B, H)
        H_link = jnp.concatenate([hn_last, dialogHidden], axis=0)
    else:
        C_link = cn_last                                       # (numLayers, B, H)
        # TODO(synk): reference does torch.cat([h_n, dialogHidden], 0) which is
        # rank-inconsistent for round > 0; we follow the documented intent:
        # layer 0 = factRNN hidden state, layer 1 = dialogRNN hidden state.
        H_link = jnp.concatenate([hn_last[:-1], dialogHidden[None]], axis=0)
    return H_link, C_link


# --------------------------------------------------------------------------
# Main
# --------------------------------------------------------------------------
if __name__ == "__main__":
    # H=128 / IE=128 keep every gate slice, output slab and the fused (IE,3H)
    # projection lane-dense (multiples of 128) per the perf review.
    cfg = dict(vocabSize=64, embedSize=64, rnnHiddenSize=128, numLayers=2,
               useIm=True, imgEmbedSize=128, imgFeatureSize=256, numRounds=3)
    B, Tq, Ta, Ta2 = 2, 6, 6, 6
    R = cfg["numRounds"]

    key = jax.random.PRNGKey(0)
    k_par, k_img, k_seq = jax.random.split(key, 3)
    params = init_params(k_par, cfg)

    image = jax.random.normal(k_img, (B, cfg["imgFeatureSize"]), jnp.float32)

    def make_seq(k, T):
        k1, k2 = jax.random.split(k)
        lens = jax.random.randint(k1, (B,), 2, T + 1).astype(jnp.int32)
        toks = jax.random.randint(k2, (B, T), 1, cfg["vocabSize"]).astype(jnp.int32)
        mask = jnp.arange(T)[None, :] < lens[:, None]
        return jnp.where(mask, toks, 0).astype(jnp.int32), lens

    ques, quesLens, ans, ansLens, ans2, ansLens2 = [], [], [], [], [], []
    seq_keys = jax.random.split(k_seq, 3 * R)
    for r in range(R):
        q, ql = make_seq(seq_keys[3 * r + 0], Tq)
        a, al = make_seq(seq_keys[3 * r + 1], Ta)
        a2, al2 = make_seq(seq_keys[3 * r + 2], Ta2)
        ques.append(q); quesLens.append(ql)
        ans.append(a); ansLens.append(al)
        ans2.append(a2); ansLens2.append(al2)

    forward = jax.jit(encoder_forward)
    H_link, C_link = forward(params, image, ques, quesLens,
                             ans, ansLens, ans2, ansLens2)
    jax.block_until_ready((H_link, C_link))
    assert H_link.shape == (cfg["numLayers"], B, cfg["rnnHiddenSize"])
    assert C_link.shape == (cfg["numLayers"], B, cfg["rnnHiddenSize"])
    print("KERNEL_OK")
</pallas_src>

<mosaic_0001>
module attributes {stable_mosaic.version = 11 : i64} {
  func.func @_inproj_kernel(%arg0: i32, %arg1: memref<1x6x64xbf16, #tpu.memory_space<vmem>>, %arg2: memref<64x512xbf16, #tpu.memory_space<vmem>>, %arg3: memref<1x512xf32, #tpu.memory_space<vmem>>, %arg4: memref<1x6x512xf32, #tpu.memory_space<vmem>>) attributes {dimension_semantics = [#tpu.dimension_semantics<parallel>], iteration_bounds = array<i64: 18>, scalar_prefetch = 0 : i64, scratch_operands = 0 : i64, tpu.core_type = #tpu.core_type<tc>, window_params = [{transform_indices = @transform_0, window_bounds = array<i64: 1, 6, 64>}, {pipeline_mode = #tpu.pipeline_mode<synchronous>, transform_indices = @transform_1, window_bounds = array<i64: 64, 512>}, {pipeline_mode = #tpu.pipeline_mode<synchronous>, transform_indices = @transform_2, window_bounds = array<i64: 1, 512>}, {transform_indices = @transform_3, window_bounds = array<i64: 1, 6, 512>}]} {
    %c0 = arith.constant 0 : index
    %c0_0 = arith.constant 0 : index
    %c0_1 = arith.constant 0 : index
    %0 = vector.load %arg1[%c0, %c0_0, %c0_1] : memref<1x6x64xbf16, #tpu.memory_space<vmem>>, vector<1x6x64xbf16>
    %1 = vector.shape_cast %0 : vector<1x6x64xbf16> to vector<6x64xbf16>
    %c0_2 = arith.constant 0 : index
    %c0_3 = arith.constant 0 : index
    %2 = vector.load %arg2[%c0_2, %c0_3] : memref<64x512xbf16, #tpu.memory_space<vmem>>, vector<64x512xbf16>
    %cst = arith.constant dense<0.000000e+00> : vector<6x512xf32>
    %3 = tpu.matmul %1, %2, %cst {dimension_numbers = #tpu.dot_dimension_numbers<[1], [0], [0], [1], [0, 0, 1, 1], [], []>} : vector<6x64xbf16>, vector<64x512xbf16>, vector<6x512xf32> -> vector<6x512xf32>
    %c0_4 = arith.constant 0 : index
    %c0_5 = arith.constant 0 : index
    %4 = vector.load %arg3[%c0_4, %c0_5] : memref<1x512xf32, #tpu.memory_space<vmem>>, vector<1x512xf32>
    %5 = vector.broadcast %4 : vector<1x512xf32> to vector<6x512xf32>
    %6 = arith.addf %3, %5 : vector<6x512xf32>
    %c0_6 = arith.constant 0 : index
    %c0_7 = arith.constant 0 : index
    %c0_8 = arith.constant 0 : index
    %7 = vector.load %arg4[%c0_6, %c0_7, %c0_8] : memref<1x6x512xf32, #tpu.memory_space<vmem>>, vector<1x6x512xf32>
    %8 = vector.shape_cast %7 : vector<1x6x512xf32> to vector<6x512xf32>
    %9 = vector.shape_cast %6 : vector<6x512xf32> to vector<1x6x512xf32>
    tpu.vector_store %arg4[%c0_6, %c0_7, %c0_8], %9 {strides = array<i32>} : memref<1x6x512xf32, #tpu.memory_space<vmem>>, vector<1x6x512xf32>,
    return
  }
  func.func @transform_0(%arg0: i32) -> (i32, i32, i32) {
    %c0_i32 = arith.constant 0 : i32
    %c0_i32_0 = arith.constant 0 : i32
    %c0_i32_1 = arith.constant 0 : i32
    return %arg0, %c0_i32, %c0_i32_0 : i32, i32, i32
  }
  func.func @transform_1(%arg0: i32) -> (i32, i32) {
    %c0_i32 = arith.constant 0 : i32
    %c0_i32_0 = arith.constant 0 : i32
    %c0_i32_1 = arith.constant 0 : i32
    return %c0_i32, %c0_i32_0 : i32, i32
  }
  func.func @transform_2(%arg0: i32) -> (i32, i32) {
    %c0_i32 = arith.constant 0 : i32
    %c0_i32_0 = arith.constant 0 : i32
    %c0_i32_1 = arith.constant 0 : i32
    return %c0_i32, %c0_i32_0 : i32, i32
  }
  func.func @transform_3(%arg0: i32) -> (i32, i32, i32) {
    %c0_i32 = arith.constant 0 : i32
    %c0_i32_0 = arith.constant 0 : i32
    %c0_i32_1 = arith.constant 0 : i32
    return %arg0, %c0_i32, %c0_i32_0 : i32, i32, i32
  }
}

module attributes {stable_mosaic.version = 11 : i64} {
  func.func @_fact_lstm_kernel(%arg0: i32, %arg1: i32, %arg2: memref<1x6x512xf32, #tpu.memory_space<vmem>>, %arg3: memref<6x1xi32, #tpu.memory_space<vmem>>, %arg4: memref<128x512xbf16, #tpu.memory_space<vmem>>, %arg5: memref<256x512xbf16, #tpu.memory_space<vmem>>, %arg6: memref<1x512xf32, #tpu.memory_space<vmem>>, %arg7: memref<2x6x128xf32, #tpu.memory_space<vmem>>, %arg8: memref<2x6x128xf32, #tpu.memory_space<vmem>>, %arg9: memref<6x128xf32, #tpu.memory_space<vmem>>, %arg10: memref<6x128xf32, #tpu.memory_space<vmem>>, %arg11: memref<6x128xf32, #tpu.memory_space<vmem>>, %arg12: memref<6x128xf32, #tpu.memory_space<vmem>>) attributes {dimension_semantics = [#tpu.dimension_semantics<parallel>, #tpu.dimension_semantics<arbitrary>], iteration_bounds = array<i64: 1, 18>, scalar_prefetch = 0 : i64, scratch_operands = 4 : i64, tpu.core_type = #tpu.core_type<tc>, window_params = [{transform_indices = @transform_0, window_bounds = array<i64: 1, 6, 512>}, {transform_indices = @transform_1, window_bounds = array<i64: 6, 1>}, {pipeline_mode = #tpu.pipeline_mode<synchronous>, transform_indices = @transform_2, window_bounds = array<i64: 128, 512>}, {pipeline_mode = #tpu.pipeline_mode<synchronous>, transform_indices = @transform_3, window_bounds = array<i64: 256, 512>}, {pipeline_mode = #tpu.pipeline_mode<synchronous>, transform_indices = @transform_4, window_bounds = array<i64: 1, 512>}, {transform_indices = @transform_5, window_bounds = array<i64: 2, 6, 128>}, {transform_indices = @transform_6, window_bounds = array<i64: 2, 6, 128>}]} {
    %c0 = arith.constant 0 : index
    %c0_0 = arith.constant 0 : index
    %0 = vector.load %arg4[%c0, %c0_0] : memref<128x512xbf16, #tpu.memory_space<vmem>>, vector<128x512xbf16>
    %c0_1 = arith.constant 0 : index
    %c0_2 = arith.constant 0 : index
    %1 = vector.load %arg5[%c0_1, %c0_2] : memref<256x512xbf16, #tpu.memory_space<vmem>>, vector<256x512xbf16>
    %c0_3 = arith.constant 0 : index
    %c0_4 = arith.constant 0 : index
    %2 = vector.load %arg6[%c0_3, %c0_4] : memref<1x512xf32, #tpu.memory_space<vmem>>, vector<1x512xf32>
    %c0_i32 = arith.constant 0 : i32
    %3 = arith.cmpi eq, %arg1, %c0_i32 : i32
    %4 = arith.extui %3 : i1 to i32
    %c0_i32_5 = arith.constant 0 : i32
    %5 = arith.cmpi ne, %4, %c0_i32_5 : i32
    scf.if %5 {
      %cst_69 = arith.constant 0.000000e+00 : f32
      %122 = vector.broadcast %cst_69 : f32 to vector<6x128xf32>
      %c0_70 = arith.constant 0 : index
      %c0_71 = arith.constant 0 : index
      %123 = vector.load %arg9[%c0_70, %c0_71] : memref<6x128xf32, #tpu.memory_space<vmem>>, vector<6x128xf32>
      tpu.vector_store %arg9[%c0_70, %c0_71], %122 {strides = array<i32>} : memref<6x128xf32, #tpu.memory_space<vmem>>, vector<6x128xf32>,
      %cst_72 = arith.constant 0.000000e+00 : f32
      %124 = vector.broadcast %cst_72 : f32 to vector<6x128xf32>
      %c0_73 = arith.constant 0 : index
      %c0_74 = arith.constant 0 : index
      %125 = vector.load %arg10[%c0_73, %c0_74] : memref<6x128xf32, #tpu.memory_space<vmem>>, vector<6x128xf32>
      tpu.vector_store %arg10[%c0_73, %c0_74], %124 {strides = array<i32>} : memref<6x128xf32, #tpu.memory_space<vmem>>, vector<6x128xf32>,
      %cst_75 = arith.constant 0.000000e+00 : f32
      %126 = vector.broadcast %cst_75 : f32 to vector<6x128xf32>
      %c0_76 = arith.constant 0 : index
      %c0_77 = arith.constant 0 : index
      %127 = vector.load %arg11[%c0_76, %c0_77] : memref<6x128xf32, #tpu.memory_space<vmem>>, vector<6x128xf32>
      tpu.vector_store %arg11[%c0_76, %c0_77], %126 {strides = array<i32>} : memref<6x128xf32, #tpu.memory_space<vmem>>, vector<6x128xf32>,
      %cst_78 = arith.constant 0.000000e+00 : f32
      %128 = vector.broadcast %cst_78 : f32 to vector<6x128xf32>
      %c0_79 = arith.constant 0 : index
      %c0_80 = arith.constant 0 : index
      %129 = vector.load %arg12[%c0_79, %c0_80] : memref<6x128xf32, #tpu.memory_space<vmem>>, vector<6x128xf32>
      tpu.vector_store %arg12[%c0_79, %c0_80], %128 {strides = array<i32>} : memref<6x128xf32, #tpu.memory_space<vmem>>, vector<6x128xf32>,
      %cst_81 = arith.constant 0.000000e+00 : f32
      %130 = vector.broadcast %cst_81 : f32 to vector<2x6x128xf32>
      %c0_82 = arith.constant 0 : index
      %c0_83 = arith.constant 0 : index
      %c0_84 = arith.constant 0 : index
      %131 = vector.load %arg7[%c0_82, %c0_83, %c0_84] : memref<2x6x128xf32, #tpu.memory_space<vmem>>, vector<2x6x128xf32>
      tpu.vector_store %arg7[%c0_82, %c0_83, %c0_84], %130 {strides = array<i32>} : memref<2x6x128xf32, #tpu.memory_space<vmem>>, vector<2x6x128xf32>,
      %cst_85 = arith.constant 0.000000e+00 : f32
      %132 = vector.broadcast %cst_85 : f32 to vector<2x6x128xf32>
      %c0_86 = arith.constant 0 : index
      %c0_87 = arith.constant 0 : index
      %c0_88 = arith.constant 0 : index
      %133 = vector.load %arg8[%c0_86, %c0_87, %c0_88] : memref<2x6x128xf32, #tpu.memory_space<vmem>>, vector<2x6x128xf32>
      tpu.vector_store %arg8[%c0_86, %c0_87, %c0_88], %132 {strides = array<i32>} : memref<2x6x128xf32, #tpu.memory_space<vmem>>, vector<2x6x128xf32>,
    } else {
    }
    %c0_6 = arith.constant 0 : index
    %c0_7 = arith.constant 0 : index
    %c0_8 = arith.constant 0 : index
    %6 = vector.load %arg2[%c0_6, %c0_7, %c0_8] : memref<1x6x512xf32, #tpu.memory_space<vmem>>, vector<1x6x512xf32>
    %7 = vector.shape_cast %6 : vector<1x6x512xf32> to vector<6x512xf32>
    %c0_9 = arith.constant 0 : index
    %c0_10 = arith.constant 0 : index
    %8 = vector.load %arg9[%c0_9, %c0_10] : memref<6x128xf32, #tpu.memory_space<vmem>>, vector<6x128xf32>
    %9 = arith.truncf %8 : vector<6x128xf32> to vector<6x128xbf16>
    %cst = arith.constant dense<0.000000e+00> : vector<6x512xf32>
    %10 = tpu.matmul %9, %0, %cst {dimension_numbers = #tpu.dot_dimension_numbers<[1], [0], [0], [1], [0, 0, 1, 1], [], []>} : vector<6x128xbf16>, vector<128x512xbf16>, vector<6x512xf32> -> vector<6x512xf32>
    %11 = arith.addf %7, %10 : vector<6x512xf32>
    %12 = vector.extract_strided_slice %11 {offsets = [0, 0], sizes = [6, 128], strides = [1, 1]} : vector<6x512xf32> to vector<6x128xf32>
    %cst_11 = arith.constant 5.000000e-01 : f32
    %13 = vector.broadcast %cst_11 : f32 to vector<6x128xf32>
    %14 = arith.mulf %13, %12 : vector<6x128xf32>
    %15 = math.tanh %14 : vector<6x128xf32>
    %cst_12 = arith.constant 5.000000e-01 : f32
    %16 = vector.broadcast %cst_12 : f32 to vector<6x128xf32>
    %17 = arith.mulf %16, %15 : vector<6x128xf32>
    %cst_13 = arith.constant 5.000000e-01 : f32
    %18 = vector.broadcast %cst_13 : f32 to vector<6x128xf32>
    %19 = arith.addf %17, %18 : vector<6x128xf32>
    %20 = vector.extract_strided_slice %11 {offsets = [0, 128], sizes = [6, 128], strides = [1, 1]} : vector<6x512xf32> to vector<6x128xf32>
    %cst_14 = arith.constant 5.000000e-01 : f32
    %21 = vector.broadcast %cst_14 : f32 to vector<6x128xf32>
    %22 = arith.mulf %21, %20 : vector<6x128xf32>
    %23 = math.tanh %22 : vector<6x128xf32>
    %cst_15 = arith.constant 5.000000e-01 : f32
    %24 = vector.broadcast %cst_15 : f32 to vector<6x128xf32>
    %25 = arith.mulf %24, %23 : vector<6x128xf32>
    %cst_16 = arith.constant 5.000000e-01 : f32
    %26 = vector.broadcast %cst_16 : f32 to vector<6x128xf32>
    %27 = arith.addf %25, %26 : vector<6x128xf32>
    %28 = vector.extract_strided_slice %11 {offsets = [0, 256], sizes = [6, 128], strides = [1, 1]} : vector<6x512xf32> to vector<6x128xf32>
    %29 = math.tanh %28 : vector<6x128xf32>
    %30 = vector.extract_strided_slice %11 {offsets = [0, 384], sizes = [6, 128], strides = [1, 1]} : vector<6x512xf32> to vector<6x128xf32>
    %cst_17 = arith.constant 5.000000e-01 : f32
    %31 = vector.broadcast %cst_17 : f32 to vector<6x128xf32>
    %32 = arith.mulf %31, %30 : vector<6x128xf32>
    %33 = math.tanh %32 : vector<6x128xf32>
    %cst_18 = arith.constant 5.000000e-01 : f32
    %34 = vector.broadcast %cst_18 : f32 to vector<6x128xf32>
    %35 = arith.mulf %34, %33 : vector<6x128xf32>
    %cst_19 = arith.constant 5.000000e-01 : f32
    %36 = vector.broadcast %cst_19 : f32 to vector<6x128xf32>
    %37 = arith.addf %35, %36 : vector<6x128xf32>
    %c0_20 = arith.constant 0 : index
    %c0_21 = arith.constant 0 : index
    %38 = vector.load %arg10[%c0_20, %c0_21] : memref<6x128xf32, #tpu.memory_space<vmem>>, vector<6x128xf32>
    %39 = arith.mulf %27, %38 : vector<6x128xf32>
    %40 = arith.mulf %19, %29 : vector<6x128xf32>
    %41 = arith.addf %39, %40 : vector<6x128xf32>
    %42 = math.tanh %41 : vector<6x128xf32>
    %43 = arith.mulf %37, %42 : vector<6x128xf32>
    %c0_22 = arith.constant 0 : index
    %c0_23 = arith.constant 0 : index
    %44 = vector.load %arg11[%c0_22, %c0_23] : memref<6x128xf32, #tpu.memory_space<vmem>>, vector<6x128xf32>
    %45 = tpu.concatenate %43, %44 in 1 : vector<6x128xf32>, vector<6x128xf32> -> vector<6x256xf32>
    %46 = arith.truncf %45 : vector<6x256xf32> to vector<6x256xbf16>
    %cst_24 = arith.constant dense<0.000000e+00> : vector<6x512xf32>
    %47 = tpu.matmul %46, %1, %cst_24 {dimension_numbers = #tpu.dot_dimension_numbers<[1], [0], [0], [1], [0, 0, 1, 1], [], []>} : vector<6x256xbf16>, vector<256x512xbf16>, vector<6x512xf32> -> vector<6x512xf32>
    %48 = vector.broadcast %2 : vector<1x512xf32> to vector<6x512xf32>
    %49 = arith.addf %47, %48 : vector<6x512xf32>
    %50 = vector.extract_strided_slice %49 {offsets = [0, 0], sizes = [6, 128], strides = [1, 1]} : vector<6x512xf32> to vector<6x128xf32>
    %cst_25 = arith.constant 5.000000e-01 : f32
    %51 = vector.broadcast %cst_25 : f32 to vector<6x128xf32>
    %52 = arith.mulf %51, %50 : vector<6x128xf32>
    %53 = math.tanh %52 : vector<6x128xf32>
    %cst_26 = arith.constant 5.000000e-01 : f32
    %54 = vector.broadcast %cst_26 : f32 to vector<6x128xf32>
    %55 = arith.mulf %54, %53 : vector<6x128xf32>
    %cst_27 = arith.constant 5.000000e-01 : f32
    %56 = vector.broadcast %cst_27 : f32 to vector<6x128xf32>
    %57 = arith.addf %55, %56 : vector<6x128xf32>
    %58 = vector.extract_strided_slice %49 {offsets = [0, 128], sizes = [6, 128], strides = [1, 1]} : vector<6x512xf32> to vector<6x128xf32>
    %cst_28 = arith.constant 5.000000e-01 : f32
    %59 = vector.broadcast %cst_28 : f32 to vector<6x128xf32>
    %60 = arith.mulf %59, %58 : vector<6x128xf32>
    %61 = math.tanh %60 : vector<6x128xf32>
    %cst_29 = arith.constant 5.000000e-01 : f32
    %62 = vector.broadcast %cst_29 : f32 to vector<6x128xf32>
    %63 = arith.mulf %62, %61 : vector<6x128xf32>
    %cst_30 = arith.constant 5.000000e-01 : f32
    %64 = vector.broadcast %cst_30 : f32 to vector<6x128xf32>
    %65 = arith.addf %63, %64 : vector<6x128xf32>
    %66 = vector.extract_strided_slice %49 {offsets = [0, 256], sizes = [6, 128], strides = [1, 1]} : vector<6x512xf32> to vector<6x128xf32>
    %67 = math.tanh %66 : vector<6x128xf32>
    %68 = vector.extract_strided_slice %49 {offsets = [0, 384], sizes = [6, 128], strides = [1, 1]} : vector<6x512xf32> to vector<6x128xf32>
    %cst_31 = arith.constant 5.000000e-01 : f32
    %69 = vector.broadcast %cst_31 : f32 to vector<6x128xf32>
    %70 = arith.mulf %69, %68 : vector<6x128xf32>
    %71 = math.tanh %70 : vector<6x128xf32>
    %cst_32 = arith.constant 5.000000e-01 : f32
    %72 = vector.broadcast %cst_32 : f32 to vector<6x128xf32>
    %73 = arith.mulf %72, %71 : vector<6x128xf32>
    %cst_33 = arith.constant 5.000000e-01 : f32
    %74 = vector.broadcast %cst_33 : f32 to vector<6x128xf32>
    %75 = arith.addf %73, %74 : vector<6x128xf32>
    %c0_34 = arith.constant 0 : index
    %c0_35 = arith.constant 0 : index
    %76 = vector.load %arg12[%c0_34, %c0_35] : memref<6x128xf32, #tpu.memory_space<vmem>>, vector<6x128xf32>
    %77 = arith.mulf %65, %76 : vector<6x128xf32>
    %78 = arith.mulf %57, %67 : vector<6x128xf32>
    %79 = arith.addf %77, %78 : vector<6x128xf32>
    %80 = math.tanh %79 : vector<6x128xf32>
    %81 = arith.mulf %75, %80 : vector<6x128xf32>
    %c0_36 = arith.constant 0 : index
    %c0_37 = arith.constant 0 : index
    %82 = vector.load %arg9[%c0_36, %c0_37] : memref<6x128xf32, #tpu.memory_space<vmem>>, vector<6x128xf32>
    tpu.vector_store %arg9[%c0_36, %c0_37], %43 {strides = array<i32>} : memref<6x128xf32, #tpu.memory_space<vmem>>, vector<6x128xf32>,
    %c0_38 = arith.constant 0 : index
    %c0_39 = arith.constant 0 : index
    %83 = vector.load %arg10[%c0_38, %c0_39] : memref<6x128xf32, #tpu.memory_space<vmem>>, vector<6x128xf32>
    tpu.vector_store %arg10[%c0_38, %c0_39], %41 {strides = array<i32>} : memref<6x128xf32, #tpu.memory_space<vmem>>, vector<6x128xf32>,
    %c0_40 = arith.constant 0 : index
    %c0_41 = arith.constant 0 : index
    %84 = vector.load %arg11[%c0_40, %c0_41] : memref<6x128xf32, #tpu.memory_space<vmem>>, vector<6x128xf32>
    tpu.vector_store %arg11[%c0_40, %c0_41], %81 {strides = array<i32>} : memref<6x128xf32, #tpu.memory_space<vmem>>, vector<6x128xf32>,
    %c0_42 = arith.constant 0 : index
    %c0_43 = arith.constant 0 : index
    %85 = vector.load %arg12[%c0_42, %c0_43] : memref<6x128xf32, #tpu.memory_space<vmem>>, vector<6x128xf32>
    tpu.vector_store %arg12[%c0_42, %c0_43], %79 {strides = array<i32>} : memref<6x128xf32, #tpu.memory_space<vmem>>, vector<6x128xf32>,
    %c0_44 = arith.constant 0 : index
    %c0_45 = arith.constant 0 : index
    %86 = vector.load %arg3[%c0_44, %c0_45] : memref<6x1xi32, #tpu.memory_space<vmem>>, vector<6x1xi32>
    %c1_i32 = arith.constant 1 : i32
    %87 = arith.addi %arg1, %c1_i32 : i32
    %88 = vector.broadcast %87 : i32 to vector<6x1xi32>
    %89 = arith.cmpi eq, %86, %88 : vector<6x1xi32>
    %c0_46 = arith.constant 0 : index
    %c0_47 = arith.constant 0 : index
    %c0_48 = arith.constant 0 : index
    %90 = vector.load %arg7[%c0_46, %c0_47, %c0_48] : memref<2x6x128xf32, #tpu.memory_space<vmem>>, vector<1x6x128xf32>
    %91 = vector.shape_cast %90 : vector<1x6x128xf32> to vector<6x128xf32>
    %92 = vector.shape_cast %89 : vector<6x1xi1> to vector<6x1xi1>
    %93 = vector.broadcast %92 : vector<6x1xi1> to vector<6x128xi1>
    %94 = arith.select %93, %43, %91 : vector<6x128xi1>, vector<6x128xf32>
    %c0_49 = arith.constant 0 : index
    %c0_50 = arith.constant 0 : index
    %c0_51 = arith.constant 0 : index
    %95 = vector.load %arg7[%c0_49, %c0_50, %c0_51] : memref<2x6x128xf32, #tpu.memory_space<vmem>>, vector<1x6x128xf32>
    %96 = vector.shape_cast %95 : vector<1x6x128xf32> to vector<6x128xf32>
    %97 = vector.shape_cast %94 : vector<6x128xf32> to vector<1x6x128xf32>
    tpu.vector_store %arg7[%c0_49, %c0_50, %c0_51], %97 {strides = array<i32>} : memref<2x6x128xf32, #tpu.memory_space<vmem>>, vector<1x6x128xf32>,
    %c0_52 = arith.constant 0 : index
    %c0_53 = arith.constant 0 : index
    %c0_54 = arith.constant 0 : index
    %98 = vector.load %arg8[%c0_52, %c0_53, %c0_54] : memref<2x6x128xf32, #tpu.memory_space<vmem>>, vector<1x6x128xf32>
    %99 = vector.shape_cast %98 : vector<1x6x128xf32> to vector<6x128xf32>
    %100 = vector.shape_cast %89 : vector<6x1xi1> to vector<6x1xi1>
    %101 = vector.broadcast %100 : vector<6x1xi1> to vector<6x128xi1>
    %102 = arith.select %101, %41, %99 : vector<6x128xi1>, vector<6x128xf32>
    %c0_55 = arith.constant 0 : index
    %c0_56 = arith.constant 0 : index
    %c0_57 = arith.constant 0 : index
    %103 = vector.load %arg8[%c0_55, %c0_56, %c0_57] : memref<2x6x128xf32, #tpu.memory_space<vmem>>, vector<1x6x128xf32>
    %104 = vector.shape_cast %103 : vector<1x6x128xf32> to vector<6x128xf32>
    %105 = vector.shape_cast %102 : vector<6x128xf32> to vector<1x6x128xf32>
    tpu.vector_store %arg8[%c0_55, %c0_56, %c0_57], %105 {strides = array<i32>} : memref<2x6x128xf32, #tpu.memory_space<vmem>>, vector<1x6x128xf32>,
    %c1 = arith.constant 1 : index
    %c0_58 = arith.constant 0 : index
    %c0_59 = arith.constant 0 : index
    %106 = vector.load %arg7[%c1, %c0_58, %c0_59] : memref<2x6x128xf32, #tpu.memory_space<vmem>>, vector<1x6x128xf32>
    %107 = vector.shape_cast %106 : vector<1x6x128xf32> to vector<6x128xf32>
    %108 = vector.shape_cast %89 : vector<6x1xi1> to vector<6x1xi1>
    %109 = vector.broadcast %108 : vector<6x1xi1> to vector<6x128xi1>
    %110 = arith.select %109, %81, %107 : vector<6x128xi1>, vector<6x128xf32>
    %c1_60 = arith.constant 1 : index
    %c0_61 = arith.constant 0 : index
    %c0_62 = arith.constant 0 : index
    %111 = vector.load %arg7[%c1_60, %c0_61, %c0_62] : memref<2x6x128xf32, #tpu.memory_space<vmem>>, vector<1x6x128xf32>
    %112 = vector.shape_cast %111 : vector<1x6x128xf32> to vector<6x128xf32>
    %113 = vector.shape_cast %110 : vector<6x128xf32> to vector<1x6x128xf32>
    tpu.vector_store %arg7[%c1_60, %c0_61, %c0_62], %113 {strides = array<i32>} : memref<2x6x128xf32, #tpu.memory_space<vmem>>, vector<1x6x128xf32>,
    %c1_63 = arith.constant 1 : index
    %c0_64 = arith.constant 0 : index
    %c0_65 = arith.constant 0 : index
    %114 = vector.load %arg8[%c1_63, %c0_64, %c0_65] : memref<2x6x128xf32, #tpu.memory_space<vmem>>, vector<1x6x128xf32>
    %115 = vector.shape_cast %114 : vector<1x6x128xf32> to vector<6x128xf32>
    %116 = vector.shape_cast %89 : vector<6x1xi1> to vector<6x1xi1>
    %117 = vector.broadcast %116 : vector<6x1xi1> to vector<6x128xi1>
    %118 = arith.select %117, %79, %115 : vector<6x128xi1>, vector<6x128xf32>
    %c1_66 = arith.constant 1 : index
    %c0_67 = arith.constant 0 : index
    %c0_68 = arith.constant 0 : index
    %119 = vector.load %arg8[%c1_66, %c0_67, %c0_68] : memref<2x6x128xf32, #tpu.memory_space<vmem>>, vector<1x6x128xf32>
    %120 = vector.shape_cast %119 : vector<1x6x128xf32> to vector<6x128xf32>
    %121 = vector.shape_cast %118 : vector<6x128xf32> to vector<1x6x128xf32>
    tpu.vector_store %arg8[%c1_66, %c0_67, %c0_68], %121 {strides = array<i32>} : memref<2x6x128xf32, #tpu.memory_space<vmem>>, vector<1x6x128xf32>,
    return
  }
  func.func @transform_0(%arg0: i32, %arg1: i32) -> (i32, i32, i32) {
    %c0_i32 = arith.constant 0 : i32
    %c0_i32_0 = arith.constant 0 : i32
    return %arg1, %arg0, %c0_i32 : i32, i32, i32
  }
  func.func @transform_1(%arg0: i32, %arg1: i32) -> (i32, i32) {
    %c0_i32 = arith.constant 0 : i32
    %c0_i32_0 = arith.constant 0 : i32
    return %arg0, %c0_i32 : i32, i32
  }
  func.func @transform_2(%arg0: i32, %arg1: i32) -> (i32, i32) {
    %c0_i32 = arith.constant 0 : i32
    %c0_i32_0 = arith.constant 0 : i32
    %c0_i32_1 = arith.constant 0 : i32
    return %c0_i32, %c0_i32_0 : i32, i32
  }
  func.func @transform_3(%arg0: i32, %arg1: i32) -> (i32, i32) {
    %c0_i32 = arith.constant 0 : i32
    %c0_i32_0 = arith.constant 0 : i32
    %c0_i32_1 = arith.constant 0 : i32
    return %c0_i32, %c0_i32_0 : i32, i32
  }
  func.func @transform_4(%arg0: i32, %arg1: i32) -> (i32, i32) {
    %c0_i32 = arith.constant 0 : i32
    %c0_i32_0 = arith.constant 0 : i32
    %c0_i32_1 = arith.constant 0 : i32
    return %c0_i32, %c0_i32_0 : i32, i32
  }
  func.func @transform_5(%arg0: i32, %arg1: i32) -> (i32, i32, i32) {
    %c0_i32 = arith.constant 0 : i32
    %c0_i32_0 = arith.constant 0 : i32
    %c0_i32_1 = arith.constant 0 : i32
    return %c0_i32, %arg0, %c0_i32_0 : i32, i32, i32
  }
  func.func @transform_6(%arg0: i32, %arg1: i32) -> (i32, i32, i32) {
    %c0_i32 = arith.constant 0 : i32
    %c0_i32_0 = arith.constant 0 : i32
    %c0_i32_1 = arith.constant 0 : i32
    return %c0_i32, %arg0, %c0_i32_0 : i32, i32, i32
  }
}

module attributes {stable_mosaic.version = 11 : i64} {
  func.func @_img_frontend_kernel(%arg0: memref<2x256xf32, #tpu.memory_space<vmem>>, %arg1: memref<256x128xbf16, #tpu.memory_space<vmem>>, %arg2: memref<1x128xf32, #tpu.memory_space<vmem>>, %arg3: memref<128x384xbf16, #tpu.memory_space<vmem>>, %arg4: memref<1x384xf32, #tpu.memory_space<vmem>>, %arg5: memref<2x384xf32, #tpu.memory_space<vmem>>) attributes {dimension_semantics = [], scalar_prefetch = 0 : i64, scratch_operands = 0 : i64, tpu.core_type = #tpu.core_type<tc>} {
    %c0 = arith.constant 0 : index
    %c0_0 = arith.constant 0 : index
    %0 = vector.load %arg1[%c0, %c0_0] : memref<256x128xbf16, #tpu.memory_space<vmem>>, vector<256x128xbf16>
    %c0_1 = arith.constant 0 : index
    %c0_2 = arith.constant 0 : index
    %1 = vector.load %arg3[%c0_1, %c0_2] : memref<128x384xbf16, #tpu.memory_space<vmem>>, vector<128x384xbf16>
    %c0_3 = arith.constant 0 : index
    %c0_4 = arith.constant 0 : index
    %2 = vector.load %arg0[%c0_3, %c0_4] : memref<2x256xf32, #tpu.memory_space<vmem>>, vector<2x256xf32>
    %3 = arith.truncf %2 : vector<2x256xf32> to vector<2x256xbf16>
    %cst = arith.constant dense<0.000000e+00> : vector<2x128xf32>
    %4 = tpu.matmul %3, %0, %cst {dimension_numbers = #tpu.dot_dimension_numbers<[1], [0], [0], [1], [0, 0, 1, 1], [], []>} : vector<2x256xbf16>, vector<256x128xbf16>, vector<2x128xf32> -> vector<2x128xf32>
    %c0_5 = arith.constant 0 : index
    %c0_6 = arith.constant 0 : index
    %5 = vector.load %arg2[%c0_5, %c0_6] : memref<1x128xf32, #tpu.memory_space<vmem>>, vector<1x128xf32>
    %6 = vector.broadcast %5 : vector<1x128xf32> to vector<2x128xf32>
    %7 = arith.addf %4, %6 : vector<2x128xf32>
    %8 = arith.truncf %7 : vector<2x128xf32> to vector<2x128xbf16>
    %cst_7 = arith.constant dense<0.000000e+00> : vector<2x384xf32>
    %9 = tpu.matmul %8, %1, %cst_7 {dimension_numbers = #tpu.dot_dimension_numbers<[1], [0], [0], [1], [0, 0, 1, 1], [], []>} : vector<2x128xbf16>, vector<128x384xbf16>, vector<2x384xf32> -> vector<2x384xf32>
    %c0_8 = arith.constant 0 : index
    %c0_9 = arith.constant 0 : index
    %10 = vector.load %arg4[%c0_8, %c0_9] : memref<1x384xf32, #tpu.memory_space<vmem>>, vector<1x384xf32>
    %11 = vector.broadcast %10 : vector<1x384xf32> to vector<2x384xf32>
    %12 = arith.addf %9, %11 : vector<2x384xf32>
    %c0_10 = arith.constant 0 : index
    %c0_11 = arith.constant 0 : index
    %13 = vector.load %arg5[%c0_10, %c0_11] : memref<2x384xf32, #tpu.memory_space<vmem>>, vector<2x384xf32>
    tpu.vector_store %arg5[%c0_10, %c0_11], %12 {strides = array<i32>} : memref<2x384xf32, #tpu.memory_space<vmem>>, vector<2x384xf32>,
    return
  }
}

module attributes {stable_mosaic.version = 11 : i64} {
  func.func @_dialog_kernel(%arg0: i32, %arg1: memref<1x2x128xf32, #tpu.memory_space<vmem>>, %arg2: memref<256x512xbf16, #tpu.memory_space<vmem>>, %arg3: memref<1x512xf32, #tpu.memory_space<vmem>>, %arg4: memref<2x128xf32, #tpu.memory_space<vmem>>, %arg5: memref<2x128xf32, #tpu.memory_space<vmem>>) attributes {dimension_semantics = [#tpu.dimension_semantics<arbitrary>], iteration_bounds = array<i64: 4>, scalar_prefetch = 0 : i64, scratch_operands = 0 : i64, tpu.core_type = #tpu.core_type<tc>, window_params = [{transform_indices = @transform_0, window_bounds = array<i64: 1, 2, 128>}, {pipeline_mode = #tpu.pipeline_mode<synchronous>, transform_indices = @transform_1, window_bounds = array<i64: 256, 512>}, {pipeline_mode = #tpu.pipeline_mode<synchronous>, transform_indices = @transform_2, window_bounds = array<i64: 1, 512>}, {pipeline_mode = #tpu.pipeline_mode<synchronous>, transform_indices = @transform_3, window_bounds = array<i64: 2, 128>}, {pipeline_mode = #tpu.pipeline_mode<synchronous>, transform_indices = @transform_4, window_bounds = array<i64: 2, 128>}]} {
    %c0 = arith.constant 0 : index
    %c0_0 = arith.constant 0 : index
    %0 = vector.load %arg2[%c0, %c0_0] : memref<256x512xbf16, #tpu.memory_space<vmem>>, vector<256x512xbf16>
    %c0_i32 = arith.constant 0 : i32
    %1 = arith.cmpi eq, %arg0, %c0_i32 : i32
    %2 = arith.extui %1 : i1 to i32
    %c0_i32_1 = arith.constant 0 : i32
    %3 = arith.cmpi ne, %2, %c0_i32_1 : i32
    scf.if %3 {
      %cst_24 = arith.constant 0.000000e+00 : f32
      %47 = vector.broadcast %cst_24 : f32 to vector<2x128xf32>
      %c0_25 = arith.constant 0 : index
      %c0_26 = arith.constant 0 : index
      %48 = vector.load %arg4[%c0_25, %c0_26] : memref<2x128xf32, #tpu.memory_space<vmem>>, vector<2x128xf32>
      tpu.vector_store %arg4[%c0_25, %c0_26], %47 {strides = array<i32>} : memref<2x128xf32, #tpu.memory_space<vmem>>, vector<2x128xf32>,
      %cst_27 = arith.constant 0.000000e+00 : f32
      %49 = vector.broadcast %cst_27 : f32 to vector<2x128xf32>
      %c0_28 = arith.constant 0 : index
      %c0_29 = arith.constant 0 : index
      %50 = vector.load %arg5[%c0_28, %c0_29] : memref<2x128xf32, #tpu.memory_space<vmem>>, vector<2x128xf32>
      tpu.vector_store %arg5[%c0_28, %c0_29], %49 {strides = array<i32>} : memref<2x128xf32, #tpu.memory_space<vmem>>, vector<2x128xf32>,
    } else {
    }
    %c0_2 = arith.constant 0 : index
    %c0_3 = arith.constant 0 : index
    %c0_4 = arith.constant 0 : index
    %4 = vector.load %arg1[%c0_2, %c0_3, %c0_4] : memref<1x2x128xf32, #tpu.memory_space<vmem>>, vector<1x2x128xf32>
    %5 = vector.shape_cast %4 : vector<1x2x128xf32> to vector<2x128xf32>
    %c0_5 = arith.constant 0 : index
    %c0_6 = arith.constant 0 : index
    %6 = vector.load %arg4[%c0_5, %c0_6] : memref<2x128xf32, #tpu.memory_space<vmem>>, vector<2x128xf32>
    %7 = tpu.concatenate %5, %6 in 1 : vector<2x128xf32>, vector<2x128xf32> -> vector<2x256xf32>
    %8 = arith.truncf %7 : vector<2x256xf32> to vector<2x256xbf16>
    %cst = arith.constant dense<0.000000e+00> : vector<2x512xf32>
    %9 = tpu.matmul %8, %0, %cst {dimension_numbers = #tpu.dot_dimension_numbers<[1], [0], [0], [1], [0, 0, 1, 1], [], []>} : vector<2x256xbf16>, vector<256x512xbf16>, vector<2x512xf32> -> vector<2x512xf32>
    %c0_7 = arith.constant 0 : index
    %c0_8 = arith.constant 0 : index
    %10 = vector.load %arg3[%c0_7, %c0_8] : memref<1x512xf32, #tpu.memory_space<vmem>>, vector<1x512xf32>
    %11 = vector.broadcast %10 : vector<1x512xf32> to vector<2x512xf32>
    %12 = arith.addf %9, %11 : vector<2x512xf32>
    %13 = vector.extract_strided_slice %12 {offsets = [0, 0], sizes = [2, 128], strides = [1, 1]} : vector<2x512xf32> to vector<2x128xf32>
    %cst_9 = arith.constant 5.000000e-01 : f32
    %14 = vector.broadcast %cst_9 : f32 to vector<2x128xf32>
    %15 = arith.mulf %14, %13 : vector<2x128xf32>
    %16 = math.tanh %15 : vector<2x128xf32>
    %cst_10 = arith.constant 5.000000e-01 : f32
    %17 = vector.broadcast %cst_10 : f32 to vector<2x128xf32>
    %18 = arith.mulf %17, %16 : vector<2x128xf32>
    %cst_11 = arith.constant 5.000000e-01 : f32
    %19 = vector.broadcast %cst_11 : f32 to vector<2x128xf32>
    %20 = arith.addf %18, %19 : vector<2x128xf32>
    %21 = vector.extract_strided_slice %12 {offsets = [0, 128], sizes = [2, 128], strides = [1, 1]} : vector<2x512xf32> to vector<2x128xf32>
    %cst_12 = arith.constant 5.000000e-01 : f32
    %22 = vector.broadcast %cst_12 : f32 to vector<2x128xf32>
    %23 = arith.mulf %22, %21 : vector<2x128xf32>
    %24 = math.tanh %23 : vector<2x128xf32>
    %cst_13 = arith.constant 5.000000e-01 : f32
    %25 = vector.broadcast %cst_13 : f32 to vector<2x128xf32>
    %26 = arith.mulf %25, %24 : vector<2x128xf32>
    %cst_14 = arith.constant 5.000000e-01 : f32
    %27 = vector.broadcast %cst_14 : f32 to vector<2x128xf32>
    %28 = arith.addf %26, %27 : vector<2x128xf32>
    %29 = vector.extract_strided_slice %12 {offsets = [0, 256], sizes = [2, 128], strides = [1, 1]} : vector<2x512xf32> to vector<2x128xf32>
    %30 = math.tanh %29 : vector<2x128xf32>
    %31 = vector.extract_strided_slice %12 {offsets = [0, 384], sizes = [2, 128], strides = [1, 1]} : vector<2x512xf32> to vector<2x128xf32>
    %cst_15 = arith.constant 5.000000e-01 : f32
    %32 = vector.broadcast %cst_15 : f32 to vector<2x128xf32>
    %33 = arith.mulf %32, %31 : vector<2x128xf32>
    %34 = math.tanh %33 : vector<2x128xf32>
    %cst_16 = arith.constant 5.000000e-01 : f32
    %35 = vector.broadcast %cst_16 : f32 to vector<2x128xf32>
    %36 = arith.mulf %35, %34 : vector<2x128xf32>
    %cst_17 = arith.constant 5.000000e-01 : f32
    %37 = vector.broadcast %cst_17 : f32 to vector<2x128xf32>
    %38 = arith.addf %36, %37 : vector<2x128xf32>
    %c0_18 = arith.constant 0 : index
    %c0_19 = arith.constant 0 : index
    %39 = vector.load %arg5[%c0_18, %c0_19] : memref<2x128xf32, #tpu.memory_space<vmem>>, vector<2x128xf32>
    %40 = arith.mulf %28, %39 : vector<2x128xf32>
    %41 = arith.mulf %20, %30 : vector<2x128xf32>
    %42 = arith.addf %40, %41 : vector<2x128xf32>
    %43 = math.tanh %42 : vector<2x128xf32>
    %44 = arith.mulf %38, %43 : vector<2x128xf32>
    %c0_20 = arith.constant 0 : index
    %c0_21 = arith.constant 0 : index
    %45 = vector.load %arg4[%c0_20, %c0_21] : memref<2x128xf32, #tpu.memory_space<vmem>>, vector<2x128xf32>
    tpu.vector_store %arg4[%c0_20, %c0_21], %44 {strides = array<i32>} : memref<2x128xf32, #tpu.memory_space<vmem>>, vector<2x128xf32>,
    %c0_22 = arith.constant 0 : index
    %c0_23 = arith.constant 0 : index
    %46 = vector.load %arg5[%c0_22, %c0_23] : memref<2x128xf32, #tpu.memory_space<vmem>>, vector<2x128xf32>
    tpu.vector_store %arg5[%c0_22, %c0_23], %42 {strides = array<i32>} : memref<2x128xf32, #tpu.memory_space<vmem>>, vector<2x128xf32>,
    return
  }
  func.func @transform_0(%arg0: i32) -> (i32, i32, i32) {
    %c0_i32 = arith.constant 0 : i32
    %c0_i32_0 = arith.constant 0 : i32
    %c0_i32_1 = arith.constant 0 : i32
    return %arg0, %c0_i32, %c0_i32_0 : i32, i32, i32
  }
  func.func @transform_1(%arg0: i32) -> (i32, i32) {
    %c0_i32 = arith.constant 0 : i32
    %c0_i32_0 = arith.constant 0 : i32
    %c0_i32_1 = arith.constant 0 : i32
    return %c0_i32, %c0_i32_0 : i32, i32
  }
  func.func @transform_2(%arg0: i32) -> (i32, i32) {
    %c0_i32 = arith.constant 0 : i32
    %c0_i32_0 = arith.constant 0 : i32
    %c0_i32_1 = arith.constant 0 : i32
    return %c0_i32, %c0_i32_0 : i32, i32
  }
  func.func @transform_3(%arg0: i32) -> (i32, i32) {
    %c0_i32 = arith.constant 0 : i32
    %c0_i32_0 = arith.constant 0 : i32
    %c0_i32_1 = arith.constant 0 : i32
    return %c0_i32, %c0_i32_0 : i32, i32
  }
  func.func @transform_4(%arg0: i32) -> (i32, i32) {
    %c0_i32 = arith.constant 0 : i32
    %c0_i32_0 = arith.constant 0 : i32
    %c0_i32_1 = arith.constant 0 : i32
    return %c0_i32, %c0_i32_0 : i32, i32
  }
}

</mosaic_0001>

<llo_original>
// kernel: encoder_forward.5
$region0: #{encoder_forward.5}
  #allocation0 [shape = 'u32[]', space=smem, size = 0x4, offset = 0x4, fixed_abs, tag = 'smem constant byte address 0x4 - core index']
  #allocation1 [shape = 'u32[144,128]{1,0:T(1,128)}', space=vmem, size = 0x12000, scoped, tag = 'internal scratch']
  %s0 = inlined_call_operand.vmem [shape: bf16[18,6,64], index: 0, kind: input, shape index: {}]
  %s1 = inlined_call_operand.vmem [shape: bf16[64,512], index: 1, kind: input, shape index: {}]
  %s2 = inlined_call_operand.vmem [shape: f32[1,512], index: 2, kind: input, shape index: {}]
  %s3 = inlined_call_operand.vmem [shape: f32[18,6,512], index: 3, kind: output, shape index: {}]
  %s4 = sld [smem:[#allocation0]]
  $region45: #{encoder_forward.5} parent=0
    _
  %s6 = ssub.s32 1, %s4
  %s7 = scalar_select 0, %s6, %s4
  loop: start=0, step=1, limit=20
  $region2: #{encoder_forward.5} parent=0 // loop_pre_header
    _
  $region3: #{encoder_forward.5} parent=0 // loop_header
    %s9 = sphi 0, %s13
    %p10 = scmp.ge.s32.totalorder %s9, 20
    %s19 = sphi 0, %s21
    %s22 = sphi 0, %s19
    %s23 = sphi 0, %s22
    %s39 = sphi 0, %s23
    %s43 = sphi 0, %s43
    %s45 = sphi 0, %s43
    %s46 = sphi 0, %s45
    %s60 = sphi 0, %s46
    %s64 = sphi 0, %s64
    %s66 = sphi 0, %s64
    %s67 = sphi 0, %s66
    %s81 = sphi 0, %s67
    %s87 = sphi 0, %s89
    %s90 = sphi 0, %s87
    %s91 = sphi 0, %s90
    %s107 = sphi 0, %s91
  $region4: #{encoder_forward.5} parent=0 // loop_header_branch
    %12 = sbr.rel (%p10) target = $region8
  $region5: #{encoder_forward.5} parent=0 // loop_body
    %s14 = ssub.s32 %s9, 1
    %s15 = ssub.s32 %s9, 2
    %s16 = sadd.s32 %s9, 1
    %s17 = ssub.s32 %s9, %s16
    %p18 = scmp.eq.s32.totalorder %s17, 0
    %s20 = sadd.s32 %s19, 1
    %s21 = scalar_select %p18, %s19, %s20
    %p24 = pneg %p18
    %p25 = scmp.eq.s32.totalorder %s9, 17
    %p26 = por %p24, %p25
    %p27 = scmp.ne.s32.totalorder %s19, %s22
    %p28 = scmp.eq.s32.totalorder %s9, 0
    %p29 = por %p27, %p28
    %p30 = scmp.ne.s32.totalorder %s19, %s22
    %p31 = scmp.eq.s32.totalorder %s14, 17
    %p32 = por %p30, %p31
    %p33 = scmp.ne.s32.totalorder %s22, %s23
    %p34 = scmp.eq.s32.totalorder %s14, 0
    %p35 = por %p33, %p34
    %p36 = scmp.ne.s32.totalorder %s22, %s23
    %p37 = scmp.eq.s32.totalorder %s15, 17
    %p38 = por %p36, %p37
    %p40 = scmp.ne.s32.totalorder %s23, %s39
    %p41 = scmp.eq.s32.totalorder %s15, 0
    %p42 = por %p40, %p41
    %s44 = sadd.s32 %s43, 1
    %p47 = scmp.eq.s32.totalorder %s9, 17
    %p48 = scmp.ne.s32.totalorder %s43, %s45
    %p49 = scmp.eq.s32.totalorder %s9, 0
    %p50 = por %p48, %p49
    %p51 = scmp.ne.s32.totalorder %s43, %s45
    %p52 = scmp.eq.s32.totalorder %s14, 17
    %p53 = por %p51, %p52
    %p54 = scmp.ne.s32.totalorder %s45, %s46
    %p55 = scmp.eq.s32.totalorder %s14, 0
    %p56 = por %p54, %p55
    %p57 = scmp.ne.s32.totalorder %s45, %s46
    %p58 = scmp.eq.s32.totalorder %s15, 17
    %p59 = por %p57, %p58
    %p61 = scmp.ne.s32.totalorder %s46, %s60
    %p62 = scmp.eq.s32.totalorder %s15, 0
    %p63 = por %p61, %p62
    %s65 = sadd.s32 %s64, 1
    %p68 = scmp.eq.s32.totalorder %s9, 17
    %p69 = scmp.ne.s32.totalorder %s64, %s66
    %p70 = scmp.eq.s32.totalorder %s9, 0
    %p71 = por %p69, %p70
    %p72 = scmp.ne.s32.totalorder %s64, %s66
    %p73 = scmp.eq.s32.totalorder %s14, 17
    %p74 = por %p72, %p73
    %p75 = scmp.ne.s32.totalorder %s66, %s67
    %p76 = scmp.eq.s32.totalorder %s14, 0
    %p77 = por %p75, %p76
    %p78 = scmp.ne.s32.totalorder %s66, %s67
    %p79 = scmp.eq.s32.totalorder %s15, 17
    %p80 = por %p78, %p79
    %p82 = scmp.ne.s32.totalorder %s67, %s81
    %p83 = scmp.eq.s32.totalorder %s15, 0
    %p84 = por %p82, %p83
    %s85 = ssub.s32 %s9, %s16
    %p86 = scmp.eq.s32.totalorder %s85, 0
    %s88 = sadd.s32 %s87, 1
    %s89 = scalar_select %p86, %s87, %s88
    %p92 = pneg %p86
    %p93 = scmp.eq.s32.totalorder %s9, 17
    %p94 = por %p92, %p93
    %p95 = scmp.ne.s32.totalorder %s87, %s90
    %p96 = scmp.eq.s32.totalorder %s9, 0
    %p97 = por %p95, %p96
    %p98 = scmp.ne.s32.totalorder %s87, %s90
    %p99 = scmp.eq.s32.totalorder %s14, 17
    %p100 = por %p98, %p99
    %p101 = scmp.ne.s32.totalorder %s90, %s91
    %p102 = scmp.eq.s32.totalorder %s14, 0
    %p103 = por %p101, %p102
    %p104 = scmp.ne.s32.totalorder %s90, %s91
    %p105 = scmp.eq.s32.totalorder %s15, 17
    %p106 = por %p104, %p105
    %p108 = scmp.ne.s32.totalorder %s91, %s107
    %p109 = scmp.eq.s32.totalorder %s15, 0
    %p110 = por %p108, %p109
    %p111 = scmp.le.s32.totalorder 1, %s9
    %p112 = scmp.lt.s32.totalorder %s9, 19
    %p113 = pnand %p111, %p112
    %p114 = pneg %p113
    // Predicated region
    $region9: #{encoder_forward.5} parent=5 // pred_check
      _
    $region10: #{encoder_forward.5} parent=5 // pred_check_branch
      %116 = sbr.rel (%p113) target = $region12
    $region11: #{encoder_forward.5} parent=5 // pred_region
      %s117 = ssub.s32 %s9, 1
      // Predicated region
      $region13: #{encoder_forward.5} parent=11 // pred_check
        %p118 = pneg %p56
      $region14: #{encoder_forward.5} parent=11 // pred_check_branch
        %120 = sbr.rel (%p118) target = $region16
      $region15: #{encoder_forward.5} parent=11 // pred_region
        _
      $region16: #{encoder_forward.5} parent=11 // pred_fallthru
        _
      // Predicated region
      $region17: #{encoder_forward.5} parent=11 // pred_check
        %p121 = pneg %p77
      $region18: #{encoder_forward.5} parent=11 // pred_check_branch
        %123 = sbr.rel (%p121) target = $region20
      $region19: #{encoder_forward.5} parent=11 // pred_region
        _
      $region20: #{encoder_forward.5} parent=11 // pred_fallthru
        _
    $region12: #{encoder_forward.5} parent=5 // pred_fallthru
      _
    %p124 = scmp.lt.s32.totalorder %s9, 18
    // Predicated region
    $region21: #{encoder_forward.5} parent=5 // pred_check
      %p125 = pneg %p124
    $region22: #{encoder_forward.5} parent=5 // pred_check_branch
      %127 = sbr.rel (%p125) target = $region24
    $region23: #{encoder_forward.5} parent=5 // pred_region
      // Predicated region
      $region25: #{encoder_forward.5} parent=23 // pred_check
        %p128 = pneg %p29
      $region26: #{encoder_forward.5} parent=23 // pred_check_branch
        %130 = sbr.rel (%p128) target = $region28
      $region27: #{encoder_forward.5} parent=23 // pred_region
        %p131 = scmp.lt.s32.totalorder %s9, 17
        %s132 = scalar_select %p131, %s9, 17
        %s133 = smul.addr %s132, 4
        %s134 = scalar_lea.vmem %s0, %s133
      $region28: #{encoder_forward.5} parent=23 // pred_fallthru
        _
    $region24: #{encoder_forward.5} parent=5 // pred_fallthru
      _
    %p135 = scmp.le.s32.totalorder 1, %s9
    %p136 = scmp.lt.s32.totalorder %s9, 19
    %p137 = pnand %p135, %p136
    %p138 = pneg %p137
    // Predicated region
    $region29: #{encoder_forward.5} parent=5 // pred_check
      _
    $region30: #{encoder_forward.5} parent=5 // pred_check_branch
      %140 = sbr.rel (%p137) target = $region32
    $region31: #{encoder_forward.5} parent=5 // pred_region
      %s141 = ssub.s32 %s9, 1
      %p142 = scmp.lt.s32.totalorder %s14, 17
      %s143 = scalar_select %p142, %s14, 17
      %s144 = smul.addr %s143, 4
      %s145 = scalar_lea.vmem %s0, %s144
      %p146 = pneg %p35
      %p147 = pneg %p32
      %p148 = pneg %p56
      %p149 = pneg %p53
      %p150 = pneg %p77
      %p151 = pneg %p74
      %p152 = pneg %p103
      %p153 = pneg %p100
      %p154 = scmp.lt.s32.totalorder %s14, 17
      %s155 = scalar_select %p154, %s14, 17
      %s156 = smul.addr %s155, 4
      %s157 = smul.addr %s156, 8
      %s158 = scalar_lea.vmem %s3, %s157
      %p159 = scmp.lt.s32.totalorder %s14, 17
      %s160 = scalar_select %p159, %s14, 17
      %s161 = smul.addr %s160, 4
      %s162 = scalar_lea.vmem %s0, %s161
      %p163 = scmp.lt.s32.totalorder %s14, 17
      %s164 = scalar_select %p163, %s14, 17
      %s165 = smul.addr %s164, 4
      %s166 = smul.addr %s165, 8
      %s167 = scalar_lea.vmem %s3, %s166
      %v169 = vld [vmem:[%s162] sm:$0x7]
      %v170 = vld [vmem:[%s1] sm:$0xff]
      %v171 = vld [vmem:[%s1 + $0x8] sm:$0xff]
      %v172 = vld [vmem:[%s1 + $0x10] sm:$0xff]
      %v173 = vld [vmem:[%s1 + $0x18] sm:$0xff]
      %v174 = vld [vmem:[%s1 + $0x20] sm:$0xff]
      %v175 = vld [vmem:[%s1 + $0x28] sm:$0xff]
      %v176 = vld [vmem:[%s1 + $0x30] sm:$0xff]
      %v177 = vld [vmem:[%s1 + $0x38] sm:$0xff]
      %v178 = vld [vmem:[%s1 + $0x40] sm:$0xff]
      %v179 = vld [vmem:[%s1 + $0x48] sm:$0xff]
      %v180 = vld [vmem:[%s1 + $0x50] sm:$0xff]
      %v181 = vld [vmem:[%s1 + $0x58] sm:$0xff]
      %v182 = vld [vmem:[%s1 + $0x60] sm:$0xff]
      %v183 = vld [vmem:[%s1 + $0x68] sm:$0xff]
      %v184 = vld [vmem:[%s1 + $0x70] sm:$0xff]
      %v185 = vld [vmem:[%s1 + $0x78] sm:$0xff]
      %v186 = vld [vmem:[%s2] sm:$0xf]
      %v188 = vlaneseq
      %v189 = vshrl.u32 %v188, 7
      %v190 = vsub.s32 0, %v189
      %v191 = vrot.slane %v186, %v190
      %v192 = vlaneseq
      %v193 = vshrl.u32 %v192, 7
      %v194 = vsub.s32 1, %v193
      %v195 = vrot.slane %v186, %v194
      %v196 = vlaneseq
      %v197 = vshrl.u32 %v196, 7
      %v198 = vsub.s32 2, %v197
      %v199 = vrot.slane %v186, %v198
      %v200 = vlaneseq
      %v201 = vshrl.u32 %v200, 7
      %v202 = vsub.s32 3, %v201
      %v203 = vrot.slane %v186, %v202
      %v224 = vunpack.c.l.b16 %v170
      %v225 = vunpack.c.h.b16 %v170
      %v226 = vunpack.c.l.b16 %v171
      %v227 = vunpack.c.h.b16 %v171
      %v228 = vunpack.c.l.b16 %v172
      %v229 = vunpack.c.h.b16 %v172
      %v230 = vunpack.c.l.b16 %v173
      %v231 = vunpack.c.h.b16 %v173
      %v232 = vunpack.c.l.b16 %v174
      %v233 = vunpack.c.h.b16 %v174
      %v234 = vunpack.c.l.b16 %v175
      %v235 = vunpack.c.h.b16 %v175
      %v236 = vunpack.c.l.b16 %v176
      %v237 = vunpack.c.h.b16 %v176
      %v238 = vunpack.c.l.b16 %v177
      %v239 = vunpack.c.h.b16 %v177
      %v240 = vunpack.c.l.b16 %v178
      %v241 = vunpack.c.h.b16 %v178
      %v242 = vunpack.c.l.b16 %v179
      %v243 = vunpack.c.h.b16 %v179
      %v244 = vunpack.c.l.b16 %v180
      %v245 = vunpack.c.h.b16 %v180
      %v246 = vunpack.c.l.b16 %v181
      %v247 = vunpack.c.h.b16 %v181
      %v248 = vunpack.c.l.b16 %v182
      %v249 = vunpack.c.h.b16 %v182
      %v250 = vunpack.c.l.b16 %v183
      %v251 = vunpack.c.h.b16 %v183
      %v252 = vunpack.c.l.b16 %v184
      %v253 = vunpack.c.h.b16 %v184
      %v254 = vunpack.c.l.b16 %v185
      %v255 = vunpack.c.h.b16 %v185
      %v256 = vpack.c.b16 %v228, %v224
      %v257 = vpack.c.b16 %v229, %v225
      %v258 = vpack.c.b16 %v230, %v226
      %v259 = vpack.c.b16 %v231, %v227
      %v260 = vpack.c.b16 %v236, %v232
      %v261 = vpack.c.b16 %v237, %v233
      %v262 = vpack.c.b16 %v238, %v234
      %v263 = vpack.c.b16 %v239, %v235
      %v264 = vpack.c.b16 %v244, %v240
      %v265 = vpack.c.b16 %v245, %v241
      %v266 = vpack.c.b16 %v246, %v242
      %v267 = vpack.c.b16 %v247, %v243
      %v268 = vpack.c.b16 %v252, %v248
      %v269 = vpack.c.b16 %v253, %v249
      %v270 = vpack.c.b16 %v254, %v250
      %v271 = vpack.c.b16 %v255, %v251
      %vm288 = vcmask 523264
      %v290 = vsel %vm288, %v169, 0
      %292 = vmatprep.subr.bf16.mxu0 0
      %293 = vmatpush1.bf16.msra.mxu0 0
      %294 = vmatprep.subr.bf16.mxu0 0
      %295 = vmatpush1.bf16.msra.mxu0 0
      %296 = vmatprep.subr.bf16.mxu0 0
      %297 = vmatpush1.bf16.msra.mxu0 0
      %298 = vmatprep.subr.bf16.mxu0 0
      %299 = vmatpush1.bf16.msra.mxu0 0
      %300 = vmatprep.subr.bf16.mxu0 %v269
      %301 = vmatpush1.bf16.msra.mxu0 %v268
      %302 = vmatprep.subr.bf16.mxu0 %v265
      %303 = vmatpush1.bf16.msra.mxu0 %v264
      %304 = vmatprep.subr.bf16.mxu0 %v261
      %305 = vmatpush1.bf16.msra.mxu0 %v260
      %306 = vmatprep.subr.bf16.mxu0 %v257
      %307 = vmatpush1.bf16.msra.mxu0 %v256
      %308 = vmatprep.subr.bf16.mxu0 0
      %309 = vmatpush2.bf16.msra.mxu0 0
      %310 = vmatprep.subr.bf16.mxu0 0
      %311 = vmatpush2.bf16.msra.mxu0 0
      %312 = vmatprep.subr.bf16.mxu0 0
      %313 = vmatpush2.bf16.msra.mxu0 0
      %314 = vmatprep.subr.bf16.mxu0 0
      %315 = vmatpush2.bf16.msra.mxu0 0
      %316 = vmatprep.subr.bf16.mxu0 0
      %317 = vmatpush2.bf16.msra.mxu0 0
      %318 = vmatprep.subr.bf16.mxu0 0
      %319 = vmatpush2.bf16.msra.mxu0 0
      %320 = vmatprep.subr.bf16.mxu0 0
      %321 = vmatpush2.bf16.msra.mxu0 0
      %322 = vmatprep.subr.bf16.mxu0 0
      %323 = vmatpush2.bf16.msra.mxu0 0
      %324 = vmatprep.mubr.bf16.mxu0 0
      %325 = vmatmul.mubr.bf16.gmra.mxu0 %v290
      %v326 = vpop.f32.mrf.mxu0
      %v327 = vadd.f32 %v191, %v326
      %v328 = vpop.f32.mrf.mxu0
      %v329 = vadd.f32 %v195, %v328
      %v330 = vpop.f32.mrf.mxu0
      %v331 = vpop.f32.mrf.mxu0
      %332 = vdwg.mxu0
      %333 = vmatprep.subr.bf16.mxu0 0
      %334 = vmatpush1.bf16.msra.mxu0 0
      %335 = vmatprep.subr.bf16.mxu0 0
      %336 = vmatpush1.bf16.msra.mxu0 0
      %337 = vmatprep.subr.bf16.mxu0 0
      %338 = vmatpush1.bf16.msra.mxu0 0
      %339 = vmatprep.subr.bf16.mxu0 0
      %340 = vmatpush1.bf16.msra.mxu0 0
      %341 = vmatprep.subr.bf16.mxu0 %v271
      %342 = vmatpush1.bf16.msra.mxu0 %v270
      %343 = vmatprep.subr.bf16.mxu0 %v267
      %344 = vmatpush1.bf16.msra.mxu0 %v266
      %345 = vmatprep.subr.bf16.mxu0 %v263
      %346 = vmatpush1.bf16.msra.mxu0 %v262
      %347 = vmatprep.subr.bf16.mxu0 %v259
      %348 = vmatpush1.bf16.msra.mxu0 %v258
      %349 = vmatprep.subr.bf16.mxu0 0
      %350 = vmatpush2.bf16.msra.mxu0 0
      %351 = vmatprep.subr.bf16.mxu0 0
      %352 = vmatpush2.bf16.msra.mxu0 0
      %353 = vmatprep.subr.bf16.mxu0 0
      %354 = vmatpush2.bf16.msra.mxu0 0
      %355 = vmatprep.subr.bf16.mxu0 0
      %356 = vmatpush2.bf16.msra.mxu0 0
      %357 = vmatprep.subr.bf16.mxu0 0
      %358 = vmatpush2.bf16.msra.mxu0 0
      %359 = vmatprep.subr.bf16.mxu0 0
      %360 = vmatpush2.bf16.msra.mxu0 0
      %361 = vmatprep.subr.bf16.mxu0 0
      %362 = vmatpush2.bf16.msra.mxu0 0
      %363 = vmatprep.subr.bf16.mxu0 0
      %364 = vmatpush2.bf16.msra.mxu0 0
      %365 = vmatprep.mubr.bf16.mxu0 0
      %366 = vmatmul.mubr.bf16.gmra.mxu0 %v290
      %v367 = vpop.f32.mrf.mxu0
      %v368 = vadd.f32 %v199, %v367
      %v369 = vpop.f32.mrf.mxu0
      %v370 = vadd.f32 %v203, %v369
      %v371 = vpop.f32.mrf.mxu0
      %v372 = vpop.f32.mrf.mxu0
      %373 = vdwg.mxu0
      %374 = vst [vmem:[%s167] sm:$0x3f] %v327
      %375 = vst [vmem:[%s167 + $0x8] sm:$0x3f] %v329
      %376 = vst [vmem:[%s167 + $0x10] sm:$0x3f] %v368
      %377 = vst [vmem:[%s167 + $0x18] sm:$0x3f] %v370
      %p378 = scmp.lt.s32.totalorder %s14, 17
      %s379 = scalar_select %p378, %s14, 17
      %s380 = smul.addr %s379, 4
      %s381 = smul.addr %s380, 8
      %s382 = scalar_lea.vmem %s3, %s381
      // Predicated region
      $region33: #{encoder_forward.5} parent=31 // pred_check
        %p383 = pneg %p100
      $region34: #{encoder_forward.5} parent=31 // pred_check_branch
        %385 = sbr.rel (%p383) target = $region36
      $region35: #{encoder_forward.5} parent=31 // pred_region
        _
      $region36: #{encoder_forward.5} parent=31 // pred_fallthru
        _
    $region32: #{encoder_forward.5} parent=5 // pred_fallthru
      _
    %p386 = scmp.le.s32.totalorder 2, %s9
    // Predicated region
    $region37: #{encoder_forward.5} parent=5 // pred_check
      %p387 = pneg %p386
    $region38: #{encoder_forward.5} parent=5 // pred_check_branch
      %389 = sbr.rel (%p387) target = $region40
    $region39: #{encoder_forward.5} parent=5 // pred_region
      %s390 = ssub.s32 %s9, 2
      // Predicated region
      $region41: #{encoder_forward.5} parent=39 // pred_check
        %p391 = pneg %p106
      $region42: #{encoder_forward.5} parent=39 // pred_check_branch
        %393 = sbr.rel (%p391) target = $region44
      $region43: #{encoder_forward.5} parent=39 // pred_region
        %p394 = scmp.lt.s32.totalorder %s15, 17
        %s395 = scalar_select %p394, %s15, 17
        %s396 = smul.addr %s395, 4
        %s397 = smul.addr %s396, 8
        %s398 = scalar_lea.vmem %s3, %s397
      $region44: #{encoder_forward.5} parent=39 // pred_fallthru
        _
    $region40: #{encoder_forward.5} parent=5 // pred_fallthru
      _
  $region6: #{encoder_forward.5} parent=0 // loop_footer
    %s13 = sadd.s32 1, %s9
  $region7: #{encoder_forward.5} parent=0 // loop_footer_branch
    %8 = sbr.rel target = $region3
  $region8: #{encoder_forward.5} parent=0 // loop_exit
    _

// kernel: encoder_forward.4
$region0: #{encoder_forward.4}
  #allocation0 [shape = 'u32[]', space=smem, size = 0x4, offset = 0x4, fixed_abs, tag = 'smem constant byte address 0x4 - core index']
  #allocation1 [shape = 'u32[144,128]{1,0:T(1,128)}', space=vmem, size = 0x12000, scoped, tag = 'internal scratch']
  %s0 = inlined_call_operand.vmem [shape: f32[2,256], index: 0, kind: input, shape index: {}]
  %s1 = inlined_call_operand.vmem [shape: bf16[256,128], index: 1, kind: input, shape index: {}]
  %s2 = inlined_call_operand.vmem [shape: f32[1,128], index: 2, kind: input, shape index: {}]
  %s3 = inlined_call_operand.vmem [shape: bf16[128,384], index: 3, kind: input, shape index: {}]
  %s4 = inlined_call_operand.vmem [shape: f32[1,384], index: 4, kind: input, shape index: {}]
  %s5 = inlined_call_operand.vmem [shape: f32[2,384], index: 5, kind: output, shape index: {}]
  %s6 = sld [smem:[#allocation0]]
  $region30: #{encoder_forward.4} parent=0
    _
  %s8 = ssub.s32 1, %s6
  %s9 = scalar_select 0, %s8, %s6
  // Predicated region
  $region2: #{encoder_forward.4} parent=0 // pred_check
    _
  $region3: #{encoder_forward.4} parent=0 // pred_check_branch
    %11 = sbr.rel (0) target = $region5
  $region4: #{encoder_forward.4} parent=0 // pred_region
    _
  $region5: #{encoder_forward.4} parent=0 // pred_fallthru
    _
  // Predicated region
  $region6: #{encoder_forward.4} parent=0 // pred_check
    _
  $region7: #{encoder_forward.4} parent=0 // pred_check_branch
    %13 = sbr.rel (0) target = $region9
  $region8: #{encoder_forward.4} parent=0 // pred_region
    _
  $region9: #{encoder_forward.4} parent=0 // pred_fallthru
    _
  // Predicated region
  $region10: #{encoder_forward.4} parent=0 // pred_check
    _
  $region11: #{encoder_forward.4} parent=0 // pred_check_branch
    %15 = sbr.rel (0) target = $region13
  $region12: #{encoder_forward.4} parent=0 // pred_region
    _
  $region13: #{encoder_forward.4} parent=0 // pred_fallthru
    _
  // Predicated region
  $region14: #{encoder_forward.4} parent=0 // pred_check
    _
  $region15: #{encoder_forward.4} parent=0 // pred_check_branch
    %17 = sbr.rel (0) target = $region17
  $region16: #{encoder_forward.4} parent=0 // pred_region
    _
  $region17: #{encoder_forward.4} parent=0 // pred_fallthru
    _
  // Predicated region
  $region18: #{encoder_forward.4} parent=0 // pred_check
    _
  $region19: #{encoder_forward.4} parent=0 // pred_check_branch
    %19 = sbr.rel (0) target = $region21
  $region20: #{encoder_forward.4} parent=0 // pred_region
    _
  $region21: #{encoder_forward.4} parent=0 // pred_fallthru
    _
  %v21 = vld [vmem:[%s1] sm:$0xf]
  %v22 = vld [vmem:[%s1 + $0x4] sm:$0xf]
  %v23 = vld [vmem:[%s1 + $0x8] sm:$0xf]
  %v24 = vld [vmem:[%s1 + $0xc] sm:$0xf]
  %v25 = vld [vmem:[%s1 + $0x10] sm:$0xf]
  %v26 = vld [vmem:[%s1 + $0x14] sm:$0xf]
  %v27 = vld [vmem:[%s1 + $0x18] sm:$0xf]
  %v28 = vld [vmem:[%s1 + $0x1c] sm:$0xf]
  %v29 = vld [vmem:[%s1 + $0x20] sm:$0xf]
  %v30 = vld [vmem:[%s1 + $0x24] sm:$0xf]
  %v31 = vld [vmem:[%s1 + $0x28] sm:$0xf]
  %v32 = vld [vmem:[%s1 + $0x2c] sm:$0xf]
  %v33 = vld [vmem:[%s1 + $0x30] sm:$0xf]
  %v34 = vld [vmem:[%s1 + $0x34] sm:$0xf]
  %v35 = vld [vmem:[%s1 + $0x38] sm:$0xf]
  %v36 = vld [vmem:[%s1 + $0x3c] sm:$0xf]
  %v37 = vld [vmem:[%s1 + $0x40] sm:$0xf]
  %v38 = vld [vmem:[%s1 + $0x44] sm:$0xf]
  %v39 = vld [vmem:[%s1 + $0x48] sm:$0xf]
  %v40 = vld [vmem:[%s1 + $0x4c] sm:$0xf]
  %v41 = vld [vmem:[%s1 + $0x50] sm:$0xf]
  %v42 = vld [vmem:[%s1 + $0x54] sm:$0xf]
  %v43 = vld [vmem:[%s1 + $0x58] sm:$0xf]
  %v44 = vld [vmem:[%s1 + $0x5c] sm:$0xf]
  %v45 = vld [vmem:[%s1 + $0x60] sm:$0xf]
  %v46 = vld [vmem:[%s1 + $0x64] sm:$0xf]
  %v47 = vld [vmem:[%s1 + $0x68] sm:$0xf]
  %v48 = vld [vmem:[%s1 + $0x6c] sm:$0xf]
  %v49 = vld [vmem:[%s1 + $0x70] sm:$0xf]
  %v50 = vld [vmem:[%s1 + $0x74] sm:$0xf]
  %v51 = vld [vmem:[%s1 + $0x78] sm:$0xf]
  %v52 = vld [vmem:[%s1 + $0x7c] sm:$0xf]
  %v53 = vld [vmem:[%s3] sm:$0xff]
  %v54 = vld [vmem:[%s3 + $0x8] sm:$0xf]
  %v55 = vld [vmem:[%s3 + $0xc] sm:$0xff]
  %v56 = vld [vmem:[%s3 + $0x14] sm:$0xf]
  %v57 = vld [vmem:[%s3 + $0x18] sm:$0xff]
  %v58 = vld [vmem:[%s3 + $0x20] sm:$0xf]
  %v59 = vld [vmem:[%s3 + $0x24] sm:$0xff]
  %v60 = vld [vmem:[%s3 + $0x2c] sm:$0xf]
  %v61 = vld [vmem:[%s3 + $0x30] sm:$0xff]
  %v62 = vld [vmem:[%s3 + $0x38] sm:$0xf]
  %v63 = vld [vmem:[%s3 + $0x3c] sm:$0xff]
  %v64 = vld [vmem:[%s3 + $0x44] sm:$0xf]
  %v65 = vld [vmem:[%s3 + $0x48] sm:$0xff]
  %v66 = vld [vmem:[%s3 + $0x50] sm:$0xf]
  %v67 = vld [vmem:[%s3 + $0x54] sm:$0xff]
  %v68 = vld [vmem:[%s3 + $0x5c] sm:$0xf]
  %v69 = vld [vmem:[%s3 + $0x60] sm:$0xff]
  %v70 = vld [vmem:[%s3 + $0x68] sm:$0xf]
  %v71 = vld [vmem:[%s3 + $0x6c] sm:$0xff]
  %v72 = vld [vmem:[%s3 + $0x74] sm:$0xf]
  %v73 = vld [vmem:[%s3 + $0x78] sm:$0xff]
  %v74 = vld [vmem:[%s3 + $0x80] sm:$0xf]
  %v75 = vld [vmem:[%s3 + $0x84] sm:$0xff]
  %v76 = vld [vmem:[%s3 + $0x8c] sm:$0xf]
  %v77 = vld [vmem:[%s3 + $0x90] sm:$0xff]
  %v78 = vld [vmem:[%s3 + $0x98] sm:$0xf]
  %v79 = vld [vmem:[%s3 + $0x9c] sm:$0xff]
  %v80 = vld [vmem:[%s3 + $0xa4] sm:$0xf]
  %v81 = vld [vmem:[%s3 + $0xa8] sm:$0xff]
  %v82 = vld [vmem:[%s3 + $0xb0] sm:$0xf]
  %v83 = vld [vmem:[%s3 + $0xb4] sm:$0xff]
  %v84 = vld [vmem:[%s3 + $0xbc] sm:$0xf]
  %v85 = vld [vmem:[%s0] sm:$0xf]
  %v88 = vunpack.c.l.s4 1983009808
  %v89 = vunpack.c.0.s8 %v88
  %v90 = vlaneseq
  %v91 = vshrl.u32 %v90, 7
  %v92 = vsub.s32 %v89, %v91
  %v93 = vrot.slane %v85, %v92
  %v94 = vcombine.high %v93, %v93
  %v97 = vpack.c.bf16 %v93, %v93
  %v98 = vpack.c.bf16 %v94, %v94
  %v99 = vld [vmem:[%s2] sm:$0x1]
  %v101 = vlaneseq
  %v102 = vshrl.u32 %v101, 7
  %v103 = vsub.s32 0, %v102
  %v104 = vrot.slane %v99, %v103
  %v138 = vunpack.c.l.b16 %v21
  %v139 = vunpack.c.l.b16 %v22
  %v140 = vunpack.c.l.b16 %v23
  %v141 = vunpack.c.l.b16 %v24
  %v142 = vunpack.c.l.b16 %v25
  %v143 = vunpack.c.l.b16 %v26
  %v144 = vunpack.c.l.b16 %v27
  %v145 = vunpack.c.l.b16 %v28
  %v146 = vunpack.c.l.b16 %v29
  %v147 = vunpack.c.l.b16 %v30
  %v148 = vunpack.c.l.b16 %v31
  %v149 = vunpack.c.l.b16 %v32
  %v150 = vunpack.c.l.b16 %v33
  %v151 = vunpack.c.l.b16 %v34
  %v152 = vunpack.c.l.b16 %v35
  %v153 = vunpack.c.l.b16 %v36
  %v154 = vunpack.c.l.b16 %v37
  %v155 = vunpack.c.l.b16 %v38
  %v156 = vunpack.c.l.b16 %v39
  %v157 = vunpack.c.l.b16 %v40
  %v158 = vunpack.c.l.b16 %v41
  %v159 = vunpack.c.l.b16 %v42
  %v160 = vunpack.c.l.b16 %v43
  %v161 = vunpack.c.l.b16 %v44
  %v162 = vunpack.c.l.b16 %v45
  %v163 = vunpack.c.l.b16 %v46
  %v164 = vunpack.c.l.b16 %v47
  %v165 = vunpack.c.l.b16 %v48
  %v166 = vunpack.c.l.b16 %v49
  %v167 = vunpack.c.l.b16 %v50
  %v168 = vunpack.c.l.b16 %v51
  %v169 = vunpack.c.l.b16 %v52
  %v170 = vpack.c.b16 %v139, %v138
  %v171 = vpack.c.b16 %v141, %v140
  %v172 = vpack.c.b16 %v143, %v142
  %v173 = vpack.c.b16 %v145, %v144
  %v174 = vpack.c.b16 %v147, %v146
  %v175 = vpack.c.b16 %v149, %v148
  %v176 = vpack.c.b16 %v151, %v150
  %v177 = vpack.c.b16 %v153, %v152
  %v178 = vpack.c.b16 %v155, %v154
  %v179 = vpack.c.b16 %v157, %v156
  %v180 = vpack.c.b16 %v159, %v158
  %v181 = vpack.c.b16 %v161, %v160
  %v182 = vpack.c.b16 %v163, %v162
  %v183 = vpack.c.b16 %v165, %v164
  %v184 = vpack.c.b16 %v167, %v166
  %v185 = vpack.c.b16 %v169, %v168
  %202 = vmatprep.subr.bf16.mxu0 0
  %203 = vmatpush1.bf16.msra.mxu0 %v177
  %204 = vmatprep.subr.bf16.mxu0 0
  %205 = vmatpush1.bf16.msra.mxu0 %v176
  %206 = vmatprep.subr.bf16.mxu0 0
  %207 = vmatpush1.bf16.msra.mxu0 %v175
  %208 = vmatprep.subr.bf16.mxu0 0
  %209 = vmatpush1.bf16.msra.mxu0 %v174
  %210 = vmatprep.subr.bf16.mxu0 0
  %211 = vmatpush1.bf16.msra.mxu0 %v173
  %212 = vmatprep.subr.bf16.mxu0 0
  %213 = vmatpush1.bf16.msra.mxu0 %v172
  %214 = vmatprep.subr.bf16.mxu0 0
  %215 = vmatpush1.bf16.msra.mxu0 %v171
  %216 = vmatprep.subr.bf16.mxu0 0
  %217 = vmatpush1.bf16.msra.mxu0 %v170
  %218 = vmatprep.subr.bf16.mxu0 0
  %219 = vmatpush2.bf16.msra.mxu0 %v185
  %220 = vmatprep.subr.bf16.mxu0 0
  %221 = vmatpush2.bf16.msra.mxu0 %v184
  %222 = vmatprep.subr.bf16.mxu0 0
  %223 = vmatpush2.bf16.msra.mxu0 %v183
  %224 = vmatprep.subr.bf16.mxu0 0
  %225 = vmatpush2.bf16.msra.mxu0 %v182
  %226 = vmatprep.subr.bf16.mxu0 0
  %227 = vmatpush2.bf16.msra.mxu0 %v181
  %228 = vmatprep.subr.bf16.mxu0 0
  %229 = vmatpush2.bf16.msra.mxu0 %v180
  %230 = vmatprep.subr.bf16.mxu0 0
  %231 = vmatpush2.bf16.msra.mxu0 %v179
  %232 = vmatprep.subr.bf16.mxu0 0
  %233 = vmatpush2.bf16.msra.mxu0 %v178
  %234 = vmatprep.mubr.bf16.mxu0 %v98
  %235 = vmatmul.mubr.bf16.gmra.mxu0 %v97
  %v236 = vpop.f32.mrf.mxu0
  %v237 = vadd.f32 %v104, %v236
  %v238 = vpop.f32.mrf.mxu0
  %v239 = vpop.f32.mrf.mxu0
  %v240 = vpop.f32.mrf.mxu0
  %241 = vdwg.mxu0
  %v242 = vpack.c.bf16 %v237, %v237
  %v243 = vld [vmem:[%s4] sm:$0x7]
  %v245 = vlaneseq
  %v246 = vshrl.u32 %v245, 7
  %v247 = vsub.s32 0, %v246
  %v248 = vrot.slane %v243, %v247
  %v249 = vlaneseq
  %v250 = vshrl.u32 %v249, 7
  %v251 = vsub.s32 1, %v250
  %v252 = vrot.slane %v243, %v251
  %v253 = vlaneseq
  %v254 = vshrl.u32 %v253, 7
  %v255 = vsub.s32 2, %v254
  %v256 = vrot.slane %v243, %v255
  %v292 = vunpack.c.l.b16 %v53
  %v293 = vunpack.c.h.b16 %v53
  %v294 = vunpack.c.l.b16 %v54
  %v295 = vunpack.c.l.b16 %v55
  %v296 = vunpack.c.h.b16 %v55
  %v297 = vunpack.c.l.b16 %v56
  %v298 = vunpack.c.l.b16 %v57
  %v299 = vunpack.c.h.b16 %v57
  %v300 = vunpack.c.l.b16 %v58
  %v301 = vunpack.c.l.b16 %v59
  %v302 = vunpack.c.h.b16 %v59
  %v303 = vunpack.c.l.b16 %v60
  %v304 = vunpack.c.l.b16 %v61
  %v305 = vunpack.c.h.b16 %v61
  %v306 = vunpack.c.l.b16 %v62
  %v307 = vunpack.c.l.b16 %v63
  %v308 = vunpack.c.h.b16 %v63
  %v309 = vunpack.c.l.b16 %v64
  %v310 = vunpack.c.l.b16 %v65
  %v311 = vunpack.c.h.b16 %v65
  %v312 = vunpack.c.l.b16 %v66
  %v313 = vunpack.c.l.b16 %v67
  %v314 = vunpack.c.h.b16 %v67
  %v315 = vunpack.c.l.b16 %v68
  %v316 = vunpack.c.l.b16 %v69
  %v317 = vunpack.c.h.b16 %v69
  %v318 = vunpack.c.l.b16 %v70
  %v319 = vunpack.c.l.b16 %v71
  %v320 = vunpack.c.h.b16 %v71
  %v321 = vunpack.c.l.b16 %v72
  %v322 = vunpack.c.l.b16 %v73
  %v323 = vunpack.c.h.b16 %v73
  %v324 = vunpack.c.l.b16 %v74
  %v325 = vunpack.c.l.b16 %v75
  %v326 = vunpack.c.h.b16 %v75
  %v327 = vunpack.c.l.b16 %v76
  %v328 = vunpack.c.l.b16 %v77
  %v329 = vunpack.c.h.b16 %v77
  %v330 = vunpack.c.l.b16 %v78
  %v331 = vunpack.c.l.b16 %v79
  %v332 = vunpack.c.h.b16 %v79
  %v333 = vunpack.c.l.b16 %v80
  %v334 = vunpack.c.l.b16 %v81
  %v335 = vunpack.c.h.b16 %v81
  %v336 = vunpack.c.l.b16 %v82
  %v337 = vunpack.c.l.b16 %v83
  %v338 = vunpack.c.h.b16 %v83
  %v339 = vunpack.c.l.b16 %v84
  %v340 = vpack.c.b16 %v295, %v292
  %v341 = vpack.c.b16 %v296, %v293
  %v342 = vpack.c.b16 %v297, %v294
  %v343 = vpack.c.b16 %v301, %v298
  %v344 = vpack.c.b16 %v302, %v299
  %v345 = vpack.c.b16 %v303, %v300
  %v346 = vpack.c.b16 %v307, %v304
  %v347 = vpack.c.b16 %v308, %v305
  %v348 = vpack.c.b16 %v309, %v306
  %v349 = vpack.c.b16 %v313, %v310
  %v350 = vpack.c.b16 %v314, %v311
  %v351 = vpack.c.b16 %v315, %v312
  %v352 = vpack.c.b16 %v319, %v316
  %v353 = vpack.c.b16 %v320, %v317
  %v354 = vpack.c.b16 %v321, %v318
  %v355 = vpack.c.b16 %v325, %v322
  %v356 = vpack.c.b16 %v326, %v323
  %v357 = vpack.c.b16 %v327, %v324
  %v358 = vpack.c.b16 %v331, %v328
  %v359 = vpack.c.b16 %v332, %v329
  %v360 = vpack.c.b16 %v333, %v330
  %v361 = vpack.c.b16 %v337, %v334
  %v362 = vpack.c.b16 %v338, %v335
  %v363 = vpack.c.b16 %v339, %v336
  %388 = vmatprep.subr.bf16.mxu0 %v362
  %389 = vmatpush1.bf16.msra.mxu0 %v361
  %390 = vmatprep.subr.bf16.mxu0 %v359
  %391 = vmatpush1.bf16.msra.mxu0 %v358
  %392 = vmatprep.subr.bf16.mxu0 %v356
  %393 = vmatpush1.bf16.msra.mxu0 %v355
  %394 = vmatprep.subr.bf16.mxu0 %v353
  %395 = vmatpush1.bf16.msra.mxu0 %v352
  %396 = vmatprep.subr.bf16.mxu0 %v350
  %397 = vmatpush1.bf16.msra.mxu0 %v349
  %398 = vmatprep.subr.bf16.mxu0 %v347
  %399 = vmatpush1.bf16.msra.mxu0 %v346
  %400 = vmatprep.subr.bf16.mxu0 %v344
  %401 = vmatpush1.bf16.msra.mxu0 %v343
  %402 = vmatprep.subr.bf16.mxu0 %v341
  %403 = vmatpush1.bf16.msra.mxu0 %v340
  %404 = vmatprep.subr.bf16.mxu0 0
  %405 = vmatpush2.bf16.msra.mxu0 0
  %406 = vmatprep.subr.bf16.mxu0 0
  %407 = vmatpush2.bf16.msra.mxu0 0
  %408 = vmatprep.subr.bf16.mxu0 0
  %409 = vmatpush2.bf16.msra.mxu0 0
  %410 = vmatprep.subr.bf16.mxu0 0
  %411 = vmatpush2.bf16.msra.mxu0 0
  %412 = vmatprep.subr.bf16.mxu0 0
  %413 = vmatpush2.bf16.msra.mxu0 0
  %414 = vmatprep.subr.bf16.mxu0 0
  %415 = vmatpush2.bf16.msra.mxu0 0
  %416 = vmatprep.subr.bf16.mxu0 0
  %417 = vmatpush2.bf16.msra.mxu0 0
  %418 = vmatprep.subr.bf16.mxu0 0
  %419 = vmatpush2.bf16.msra.mxu0 0
  %420 = vmatprep.mubr.bf16.mxu0 0
  %421 = vmatmul.mubr.bf16.gmra.mxu0 %v242
  %v422 = vpop.f32.mrf.mxu0
  %v423 = vadd.f32 %v248, %v422
  %v424 = vpop.f32.mrf.mxu0
  %v425 = vadd.f32 %v252, %v424
  %v426 = vpop.f32.mrf.mxu0
  %v427 = vpop.f32.mrf.mxu0
  %428 = vdwg.mxu0
  %429 = vmatprep.subr.bf16.mxu0 0
  %430 = vmatpush1.bf16.msra.mxu0 %v363
  %431 = vmatprep.subr.bf16.mxu0 0
  %432 = vmatpush1.bf16.msra.mxu0 %v360
  %433 = vmatprep.subr.bf16.mxu0 0
  %434 = vmatpush1.bf16.msra.mxu0 %v357
  %435 = vmatprep.subr.bf16.mxu0 0
  %436 = vmatpush1.bf16.msra.mxu0 %v354
  %437 = vmatprep.subr.bf16.mxu0 0
  %438 = vmatpush1.bf16.msra.mxu0 %v351
  %439 = vmatprep.subr.bf16.mxu0 0
  %440 = vmatpush1.bf16.msra.mxu0 %v348
  %441 = vmatprep.subr.bf16.mxu0 0
  %442 = vmatpush1.bf16.msra.mxu0 %v345
  %443 = vmatprep.subr.bf16.mxu0 0
  %444 = vmatpush1.bf16.msra.mxu0 %v342
  %445 = vmatprep.subr.bf16.mxu0 0
  %446 = vmatpush2.bf16.msra.mxu0 0
  %447 = vmatprep.subr.bf16.mxu0 0
  %448 = vmatpush2.bf16.msra.mxu0 0
  %449 = vmatprep.subr.bf16.mxu0 0
  %450 = vmatpush2.bf16.msra.mxu0 0
  %451 = vmatprep.subr.bf16.mxu0 0
  %452 = vmatpush2.bf16.msra.mxu0 0
  %453 = vmatprep.subr.bf16.mxu0 0
  %454 = vmatpush2.bf16.msra.mxu0 0
  %455 = vmatprep.subr.bf16.mxu0 0
  %456 = vmatpush2.bf16.msra.mxu0 0
  %457 = vmatprep.subr.bf16.mxu0 0
  %458 = vmatpush2.bf16.msra.mxu0 0
  %459 = vmatprep.subr.bf16.mxu0 0
  %460 = vmatpush2.bf16.msra.mxu0 0
  %461 = vmatprep.mubr.bf16.mxu0 0
  %462 = vmatmul.mubr.bf16.gmra.mxu0 %v242
  %v463 = vpop.f32.mrf.mxu0
  %v464 = vadd.f32 %v256, %v463
  %v465 = vpop.f32.mrf.mxu0
  %v466 = vpop.f32.mrf.mxu0
  %v467 = vpop.f32.mrf.mxu0
  %468 = vdwg.mxu0
  %v472 = vcombine.low %v423, %v425
  %v474 = vunpack.c.l.s4 1983009808
  %v475 = vunpack.c.0.s8 %v474
  %v476 = vlaneseq
  %v477 = vshrl.u32 %v476, 7
  %v478 = vsub.s32 %v475, %v477
  %v479 = vrot.slane %v472, %v478
  %v481 = vunpack.c.l.s4 1983009808
  %v482 = vunpack.c.0.s8 %v481
  %v483 = vlaneseq
  %v484 = vshrl.u32 %v483, 7
  %v485 = vsub.s32 %v482, %v484
  %v486 = vrot.slane %v464, %v485
  %v487 = vcombine.low %v479, %v486
  %489 = vst [vmem:[%s5] sm:$0x3f] %v487
  // Predicated region
  $region22: #{encoder_forward.4} parent=0 // pred_check
    _
  $region23: #{encoder_forward.4} parent=0 // pred_check_branch
    %491 = sbr.rel (0) target = $region25
  $region24: #{encoder_forward.4} parent=0 // pred_region
    _
  $region25: #{encoder_forward.4} parent=0 // pred_fallthru
    _
  // Predicated region
  $region26: #{encoder_forward.4} parent=0 // pred_check
    _
  $region27: #{encoder_forward.4} parent=0 // pred_check_branch
    %493 = sbr.rel (0) target = $region29
  $region28: #{encoder_forward.4} parent=0 // pred_region
    _
  $region29: #{encoder_forward.4} parent=0 // pred_fallthru
    _

// kernel: encoder_forward.6
$region0: #{encoder_forward.6}
  #allocation0 [shape = 'u32[]', space=smem, size = 0x4, offset = 0x4, fixed_abs, tag = 'smem constant byte address 0x4 - core index']
  #allocation1 [shape = 'u32[144,128]{1,0:T(1,128)}', space=vmem, size = 0x12000, scoped, tag = 'internal scratch']
  #allocation2 [shape = 'f32[6,128]{1,0:T(8,128)}', space=vmem, size = 0x1000, scoped, tag = 'scratch operand']
  #allocation3 [shape = 'f32[6,128]{1,0:T(8,128)}', space=vmem, size = 0x1000, scoped, tag = 'scratch operand']
  #allocation4 [shape = 'f32[6,128]{1,0:T(8,128)}', space=vmem, size = 0x1000, scoped, tag = 'scratch operand']
  #allocation5 [shape = 'f32[6,128]{1,0:T(8,128)}', space=vmem, size = 0x1000, scoped, tag = 'scratch operand']
  %s0 = inlined_call_operand.vmem [shape: f32[18,6,512], index: 0, kind: input, shape index: {}]
  %s1 = inlined_call_operand.vmem [shape: s32[6,1], index: 1, kind: input, shape index: {}]
  %s2 = inlined_call_operand.vmem [shape: bf16[128,512], index: 2, kind: input, shape index: {}]
  %s3 = inlined_call_operand.vmem [shape: bf16[256,512], index: 3, kind: input, shape index: {}]
  %s4 = inlined_call_operand.vmem [shape: f32[1,512], index: 4, kind: input, shape index: {}]
  %s5 = inlined_call_operand.vmem [shape: f32[2,6,128], index: 5, kind: output, shape index: {0}]
  %s6 = inlined_call_operand.vmem [shape: f32[2,6,128], index: 6, kind: output, shape index: {1}]
  %7 = xla_tuple %s5, %s6
  %s8 = sld [smem:[#allocation0]]
  $region65: #{encoder_forward.6} parent=0
    _
  %s10 = ssub.s32 1, %s8
  %s11 = scalar_select 0, %s10, %s8
  loop: start=0, step=1, limit=20
  $region2: #{encoder_forward.6} parent=0 // loop_pre_header
    _
  $region3: #{encoder_forward.6} parent=0 // loop_header
    %s13 = sphi 0, %s17
    %p14 = scmp.ge.s32.totalorder %s13, 20
    %s20 = sphi 0, %s32
    %s21 = sphi 0, %s28
    %s22 = sphi 0, %s20
    %s23 = sphi 0, %s21
    %s24 = sphi 0, %s22
    %s25 = sphi 0, %s23
    %s37 = sphi 0, %s39
    %s40 = sphi 0, %s37
    %s41 = sphi 0, %s40
    %s57 = sphi 0, %s41
    %s63 = sphi 0, %s65
    %s66 = sphi 0, %s63
    %s67 = sphi 0, %s66
    %s83 = sphi 0, %s67
    %s87 = sphi 0, %s87
    %s89 = sphi 0, %s87
    %s90 = sphi 0, %s89
    %s104 = sphi 0, %s90
    %s108 = sphi 0, %s108
    %s110 = sphi 0, %s108
    %s111 = sphi 0, %s110
    %s125 = sphi 0, %s111
    %s129 = sphi 0, %s129
    %s131 = sphi 0, %s129
    %s132 = sphi 0, %s131
    %s146 = sphi 0, %s132
    %s152 = sphi 0, %s154
    %s155 = sphi 0, %s152
    %s156 = sphi 0, %s155
    %s172 = sphi 0, %s156
    %s178 = sphi 0, %s180
    %s181 = sphi 0, %s178
    %s182 = sphi 0, %s181
    %s198 = sphi 0, %s182
  $region4: #{encoder_forward.6} parent=0 // loop_header_branch
    %16 = sbr.rel (%p14) target = $region8
  $region5: #{encoder_forward.6} parent=0 // loop_body
    %s18 = ssub.s32 %s13, 1
    %s19 = ssub.s32 %s13, 2
    %s26 = sadd.s32 1, %s21
    %p27 = scmp.ge.s32.totalorder %s26, 18
    %s28 = scalar_select %p27, 0, %s26
    %s29 = sadd.s32 1, %s20
    %s30 = scalar_select %p27, %s29, %s20
    %p31 = scmp.ge.s32.totalorder %s30, 1
    %s32 = scalar_select %p31, 0, %s30
    %s33 = ssub.s32 %s21, %s28
    %s34 = ssub.s32 %s20, %s32
    %s35 = sor.u32 %s33, %s34
    %p36 = scmp.eq.s32.totalorder %s35, 0
    %s38 = sadd.s32 %s37, 1
    %s39 = scalar_select %p36, %s37, %s38
    %p42 = pneg %p36
    %p43 = scmp.eq.s32.totalorder %s13, 17
    %p44 = por %p42, %p43
    %p45 = scmp.ne.s32.totalorder %s37, %s40
    %p46 = scmp.eq.s32.totalorder %s13, 0
    %p47 = por %p45, %p46
    %p48 = scmp.ne.s32.totalorder %s37, %s40
    %p49 = scmp.eq.s32.totalorder %s18, 17
    %p50 = por %p48, %p49
    %p51 = scmp.ne.s32.totalorder %s40, %s41
    %p52 = scmp.eq.s32.totalorder %s18, 0
    %p53 = por %p51, %p52
    %p54 = scmp.ne.s32.totalorder %s40, %s41
    %p55 = scmp.eq.s32.totalorder %s19, 17
    %p56 = por %p54, %p55
    %p58 = scmp.ne.s32.totalorder %s41, %s57
    %p59 = scmp.eq.s32.totalorder %s19, 0
    %p60 = por %p58, %p59
    %s61 = ssub.s32 %s20, %s32
    %p62 = scmp.eq.s32.totalorder %s61, 0
    %s64 = sadd.s32 %s63, 1
    %s65 = scalar_select %p62, %s63, %s64
    %p68 = pneg %p62
    %p69 = scmp.eq.s32.totalorder %s13, 17
    %p70 = por %p68, %p69
    %p71 = scmp.ne.s32.totalorder %s63, %s66
    %p72 = scmp.eq.s32.totalorder %s13, 0
    %p73 = por %p71, %p72
    %p74 = scmp.ne.s32.totalorder %s63, %s66
    %p75 = scmp.eq.s32.totalorder %s18, 17
    %p76 = por %p74, %p75
    %p77 = scmp.ne.s32.totalorder %s66, %s67
    %p78 = scmp.eq.s32.totalorder %s18, 0
    %p79 = por %p77, %p78
    %p80 = scmp.ne.s32.totalorder %s66, %s67
    %p81 = scmp.eq.s32.totalorder %s19, 17
    %p82 = por %p80, %p81
    %p84 = scmp.ne.s32.totalorder %s67, %s83
    %p85 = scmp.eq.s32.totalorder %s19, 0
    %p86 = por %p84, %p85
    %s88 = sadd.s32 %s87, 1
    %p91 = scmp.eq.s32.totalorder %s13, 17
    %p92 = scmp.ne.s32.totalorder %s87, %s89
    %p93 = scmp.eq.s32.totalorder %s13, 0
    %p94 = por %p92, %p93
    %p95 = scmp.ne.s32.totalorder %s87, %s89
    %p96 = scmp.eq.s32.totalorder %s18, 17
    %p97 = por %p95, %p96
    %p98 = scmp.ne.s32.totalorder %s89, %s90
    %p99 = scmp.eq.s32.totalorder %s18, 0
    %p100 = por %p98, %p99
    %p101 = scmp.ne.s32.totalorder %s89, %s90
    %p102 = scmp.eq.s32.totalorder %s19, 17
    %p103 = por %p101, %p102
    %p105 = scmp.ne.s32.totalorder %s90, %s104
    %p106 = scmp.eq.s32.totalorder %s19, 0
    %p107 = por %p105, %p106
    %s109 = sadd.s32 %s108, 1
    %p112 = scmp.eq.s32.totalorder %s13, 17
    %p113 = scmp.ne.s32.totalorder %s108, %s110
    %p114 = scmp.eq.s32.totalorder %s13, 0
    %p115 = por %p113, %p114
    %p116 = scmp.ne.s32.totalorder %s108, %s110
    %p117 = scmp.eq.s32.totalorder %s18, 17
    %p118 = por %p116, %p117
    %p119 = scmp.ne.s32.totalorder %s110, %s111
    %p120 = scmp.eq.s32.totalorder %s18, 0
    %p121 = por %p119, %p120
    %p122 = scmp.ne.s32.totalorder %s110, %s111
    %p123 = scmp.eq.s32.totalorder %s19, 17
    %p124 = por %p122, %p123
    %p126 = scmp.ne.s32.totalorder %s111, %s125
    %p127 = scmp.eq.s32.totalorder %s19, 0
    %p128 = por %p126, %p127
    %s130 = sadd.s32 %s129, 1
    %p133 = scmp.eq.s32.totalorder %s13, 17
    %p134 = scmp.ne.s32.totalorder %s129, %s131
    %p135 = scmp.eq.s32.totalorder %s13, 0
    %p136 = por %p134, %p135
    %p137 = scmp.ne.s32.totalorder %s129, %s131
    %p138 = scmp.eq.s32.totalorder %s18, 17
    %p139 = por %p137, %p138
    %p140 = scmp.ne.s32.totalorder %s131, %s132
    %p141 = scmp.eq.s32.totalorder %s18, 0
    %p142 = por %p140, %p141
    %p143 = scmp.ne.s32.totalorder %s131, %s132
    %p144 = scmp.eq.s32.totalorder %s19, 17
    %p145 = por %p143, %p144
    %p147 = scmp.ne.s32.totalorder %s132, %s146
    %p148 = scmp.eq.s32.totalorder %s19, 0
    %p149 = por %p147, %p148
    %s150 = ssub.s32 %s20, %s32
    %p151 = scmp.eq.s32.totalorder %s150, 0
    %s153 = sadd.s32 %s152, 1
    %s154 = scalar_select %p151, %s152, %s153
    %p157 = pneg %p151
    %p158 = scmp.eq.s32.totalorder %s13, 17
    %p159 = por %p157, %p158
    %p160 = scmp.ne.s32.totalorder %s152, %s155
    %p161 = scmp.eq.s32.totalorder %s13, 0
    %p162 = por %p160, %p161
    %p163 = scmp.ne.s32.totalorder %s152, %s155
    %p164 = scmp.eq.s32.totalorder %s18, 17
    %p165 = por %p163, %p164
    %p166 = scmp.ne.s32.totalorder %s155, %s156
    %p167 = scmp.eq.s32.totalorder %s18, 0
    %p168 = por %p166, %p167
    %p169 = scmp.ne.s32.totalorder %s155, %s156
    %p170 = scmp.eq.s32.totalorder %s19, 17
    %p171 = por %p169, %p170
    %p173 = scmp.ne.s32.totalorder %s156, %s172
    %p174 = scmp.eq.s32.totalorder %s19, 0
    %p175 = por %p173, %p174
    %s176 = ssub.s32 %s20, %s32
    %p177 = scmp.eq.s32.totalorder %s176, 0
    %s179 = sadd.s32 %s178, 1
    %s180 = scalar_select %p177, %s178, %s179
    %p183 = pneg %p177
    %p184 = scmp.eq.s32.totalorder %s13, 17
    %p185 = por %p183, %p184
    %p186 = scmp.ne.s32.totalorder %s178, %s181
    %p187 = scmp.eq.s32.totalorder %s13, 0
    %p188 = por %p186, %p187
    %p189 = scmp.ne.s32.totalorder %s178, %s181
    %p190 = scmp.eq.s32.totalorder %s18, 17
    %p191 = por %p189, %p190
    %p192 = scmp.ne.s32.totalorder %s181, %s182
    %p193 = scmp.eq.s32.totalorder %s18, 0
    %p194 = por %p192, %p193
    %p195 = scmp.ne.s32.totalorder %s181, %s182
    %p196 = scmp.eq.s32.totalorder %s19, 17
    %p197 = por %p195, %p196
    %p199 = scmp.ne.s32.totalorder %s182, %s198
    %p200 = scmp.eq.s32.totalorder %s19, 0
    %p201 = por %p199, %p200
    %p202 = scmp.le.s32.totalorder 1, %s13
    %p203 = scmp.lt.s32.totalorder %s13, 19
    %p204 = pnand %p202, %p203
    %p205 = pneg %p204
    // Predicated region
    $region9: #{encoder_forward.6} parent=5 // pred_check
      _
    $region10: #{encoder_forward.6} parent=5 // pred_check_branch
      %207 = sbr.rel (%p204) target = $region12
    $region11: #{encoder_forward.6} parent=5 // pred_region
      %s208 = ssub.s32 %s13, 1
      // Predicated region
      $region13: #{encoder_forward.6} parent=11 // pred_check
        %p209 = pneg %p79
      $region14: #{encoder_forward.6} parent=11 // pred_check_branch
        %211 = sbr.rel (%p209) target = $region16
      $region15: #{encoder_forward.6} parent=11 // pred_region
        %p212 = scmp.lt.s32.totalorder %s22, 0
        %s213 = scalar_select %p212, %s22, 0
        %s214 = smul.addr %s213, 8
        %s215 = scalar_lea.vmem %s1, %s214
      $region16: #{encoder_forward.6} parent=11 // pred_fallthru
        _
      // Predicated region
      $region17: #{encoder_forward.6} parent=11 // pred_check
        %p216 = pneg %p100
      $region18: #{encoder_forward.6} parent=11 // pred_check_branch
        %218 = sbr.rel (%p216) target = $region20
      $region19: #{encoder_forward.6} parent=11 // pred_region
        _
      $region20: #{encoder_forward.6} parent=11 // pred_fallthru
        _
      // Predicated region
      $region21: #{encoder_forward.6} parent=11 // pred_check
        %p219 = pneg %p121
      $region22: #{encoder_forward.6} parent=11 // pred_check_branch
        %221 = sbr.rel (%p219) target = $region24
      $region23: #{encoder_forward.6} parent=11 // pred_region
        _
      $region24: #{encoder_forward.6} parent=11 // pred_fallthru
        _
      // Predicated region
      $region25: #{encoder_forward.6} parent=11 // pred_check
        %p222 = pneg %p142
      $region26: #{encoder_forward.6} parent=11 // pred_check_branch
        %224 = sbr.rel (%p222) target = $region28
      $region27: #{encoder_forward.6} parent=11 // pred_region
        _
      $region28: #{encoder_forward.6} parent=11 // pred_fallthru
        _
    $region12: #{encoder_forward.6} parent=5 // pred_fallthru
      _
    %p225 = scmp.lt.s32.totalorder %s13, 18
    // Predicated region
    $region29: #{encoder_forward.6} parent=5 // pred_check
      %p226 = pneg %p225
    $region30: #{encoder_forward.6} parent=5 // pred_check_branch
      %228 = sbr.rel (%p226) target = $region32
    $region31: #{encoder_forward.6} parent=5 // pred_region
      // Predicated region
      $region33: #{encoder_forward.6} parent=31 // pred_check
        %p229 = pneg %p47
      $region34: #{encoder_forward.6} parent=31 // pred_check_branch
        %231 = sbr.rel (%p229) target = $region36
      $region35: #{encoder_forward.6} parent=31 // pred_region
        %p232 = scmp.lt.s32.totalorder %s21, 17
        %s233 = scalar_select %p232, %s21, 17
        %p234 = scmp.lt.s32.totalorder %s20, 0
        %s235 = scalar_select %p234, %s20, 0
        %s236 = smul.addr %s235, 4
        %s237 = smul.addr %s233, 4
        %s238 = sadd.s32 %s236, %s237
        %s239 = smul.addr %s238, 8
        %s240 = scalar_lea.vmem %s0, %s239
      $region36: #{encoder_forward.6} parent=31 // pred_fallthru
        _
    $region32: #{encoder_forward.6} parent=5 // pred_fallthru
      _
    %p241 = scmp.le.s32.totalorder 1, %s13
    %p242 = scmp.lt.s32.totalorder %s13, 19
    %p243 = pnand %p241, %p242
    %p244 = pneg %p243
    // Predicated region
    $region37: #{encoder_forward.6} parent=5 // pred_check
      _
    $region38: #{encoder_forward.6} parent=5 // pred_check_branch
      %246 = sbr.rel (%p243) target = $region40
    $region39: #{encoder_forward.6} parent=5 // pred_region
      %s247 = ssub.s32 %s13, 1
      %p248 = scmp.lt.s32.totalorder %s23, 17
      %s249 = scalar_select %p248, %s23, 17
      %p250 = scmp.lt.s32.totalorder %s22, 0
      %s251 = scalar_select %p250, %s22, 0
      %s252 = smul.addr %s251, 4
      %s253 = smul.addr %s249, 4
      %s254 = sadd.s32 %s252, %s253
      %s255 = smul.addr %s254, 8
      %s256 = scalar_lea.vmem %s0, %s255
      %p257 = pneg %p53
      %p258 = pneg %p50
      %p259 = scmp.lt.s32.totalorder %s22, 0
      %s260 = scalar_select %p259, %s22, 0
      %s261 = smul.addr %s260, 8
      %s262 = scalar_lea.vmem %s1, %s261
      %p263 = pneg %p79
      %p264 = pneg %p76
      %p265 = pneg %p100
      %p266 = pneg %p97
      %p267 = pneg %p121
      %p268 = pneg %p118
      %p269 = pneg %p142
      %p270 = pneg %p139
      %p271 = pneg %p168
      %p272 = pneg %p165
      %p273 = scmp.lt.s32.totalorder %s22, 0
      %s274 = scalar_select %p273, %s22, 0
      %s275 = smul.addr %s274, 8
      %s276 = scalar_lea.vmem %s5, %s275
      %p277 = pneg %p194
      %p278 = pneg %p191
      %p279 = scmp.lt.s32.totalorder %s22, 0
      %s280 = scalar_select %p279, %s22, 0
      %s281 = smul.addr %s280, 8
      %s282 = scalar_lea.vmem %s6, %s281
      %p283 = scmp.lt.s32.totalorder %s23, 17
      %s284 = scalar_select %p283, %s23, 17
      %p285 = scmp.lt.s32.totalorder %s22, 0
      %s286 = scalar_select %p285, %s22, 0
      %s287 = smul.addr %s286, 4
      %s288 = smul.addr %s284, 4
      %s289 = sadd.s32 %s287, %s288
      %s290 = smul.addr %s289, 8
      %s291 = scalar_lea.vmem %s0, %s290
      %p292 = scmp.lt.s32.totalorder %s22, 0
      %s293 = scalar_select %p292, %s22, 0
      %s294 = smul.addr %s293, 8
      %s295 = scalar_lea.vmem %s1, %s294
      %p296 = scmp.lt.s32.totalorder %s22, 0
      %s297 = scalar_select %p296, %s22, 0
      %s298 = smul.addr %s297, 8
      %s299 = scalar_lea.vmem %s5, %s298
      %p300 = scmp.lt.s32.totalorder %s22, 0
      %s301 = scalar_select %p300, %s22, 0
      %s302 = smul.addr %s301, 8
      %s303 = scalar_lea.vmem %s6, %s302
      %v305 = vld [vmem:[%s2] sm:$0xff]
      %v306 = vld [vmem:[%s2 + $0x8] sm:$0xff]
      %v307 = vld [vmem:[%s2 + $0x10] sm:$0xff]
      %v308 = vld [vmem:[%s2 + $0x18] sm:$0xff]
      %v309 = vld [vmem:[%s2 + $0x20] sm:$0xff]
      %v310 = vld [vmem:[%s2 + $0x28] sm:$0xff]
      %v311 = vld [vmem:[%s2 + $0x30] sm:$0xff]
      %v312 = vld [vmem:[%s2 + $0x38] sm:$0xff]
      %v313 = vld [vmem:[%s2 + $0x40] sm:$0xff]
      %v314 = vld [vmem:[%s2 + $0x48] sm:$0xff]
      %v315 = vld [vmem:[%s2 + $0x50] sm:$0xff]
      %v316 = vld [vmem:[%s2 + $0x58] sm:$0xff]
      %v317 = vld [vmem:[%s2 + $0x60] sm:$0xff]
      %v318 = vld [vmem:[%s2 + $0x68] sm:$0xff]
      %v319 = vld [vmem:[%s2 + $0x70] sm:$0xff]
      %v320 = vld [vmem:[%s2 + $0x78] sm:$0xff]
      %v321 = vld [vmem:[%s2 + $0x80] sm:$0xff]
      %v322 = vld [vmem:[%s2 + $0x88] sm:$0xff]
      %v323 = vld [vmem:[%s2 + $0x90] sm:$0xff]
      %v324 = vld [vmem:[%s2 + $0x98] sm:$0xff]
      %v325 = vld [vmem:[%s2 + $0xa0] sm:$0xff]
      %v326 = vld [vmem:[%s2 + $0xa8] sm:$0xff]
      %v327 = vld [vmem:[%s2 + $0xb0] sm:$0xff]
      %v328 = vld [vmem:[%s2 + $0xb8] sm:$0xff]
      %v329 = vld [vmem:[%s2 + $0xc0] sm:$0xff]
      %v330 = vld [vmem:[%s2 + $0xc8] sm:$0xff]
      %v331 = vld [vmem:[%s2 + $0xd0] sm:$0xff]
      %v332 = vld [vmem:[%s2 + $0xd8] sm:$0xff]
      %v333 = vld [vmem:[%s2 + $0xe0] sm:$0xff]
      %v334 = vld [vmem:[%s2 + $0xe8] sm:$0xff]
      %v335 = vld [vmem:[%s2 + $0xf0] sm:$0xff]
      %v336 = vld [vmem:[%s2 + $0xf8] sm:$0xff]
      %v337 = vld [vmem:[%s3] sm:$0xff]
      %v338 = vld [vmem:[%s3 + $0x8] sm:$0xff]
      %v339 = vld [vmem:[%s3 + $0x10] sm:$0xff]
      %v340 = vld [vmem:[%s3 + $0x18] sm:$0xff]
      %v341 = vld [vmem:[%s3 + $0x20] sm:$0xff]
      %v342 = vld [vmem:[%s3 + $0x28] sm:$0xff]
      %v343 = vld [vmem:[%s3 + $0x30] sm:$0xff]
      %v344 = vld [vmem:[%s3 + $0x38] sm:$0xff]
      %v345 = vld [vmem:[%s3 + $0x40] sm:$0xff]
      %v346 = vld [vmem:[%s3 + $0x48] sm:$0xff]
      %v347 = vld [vmem:[%s3 + $0x50] sm:$0xff]
      %v348 = vld [vmem:[%s3 + $0x58] sm:$0xff]
      %v349 = vld [vmem:[%s3 + $0x60] sm:$0xff]
      %v350 = vld [vmem:[%s3 + $0x68] sm:$0xff]
      %v351 = vld [vmem:[%s3 + $0x70] sm:$0xff]
      %v352 = vld [vmem:[%s3 + $0x78] sm:$0xff]
      %v353 = vld [vmem:[%s3 + $0x80] sm:$0xff]
      %v354 = vld [vmem:[%s3 + $0x88] sm:$0xff]
      %v355 = vld [vmem:[%s3 + $0x90] sm:$0xff]
      %v356 = vld [vmem:[%s3 + $0x98] sm:$0xff]
      %v357 = vld [vmem:[%s3 + $0xa0] sm:$0xff]
      %v358 = vld [vmem:[%s3 + $0xa8] sm:$0xff]
      %v359 = vld [vmem:[%s3 + $0xb0] sm:$0xff]
      %v360 = vld [vmem:[%s3 + $0xb8] sm:$0xff]
      %v361 = vld [vmem:[%s3 + $0xc0] sm:$0xff]
      %v362 = vld [vmem:[%s3 + $0xc8] sm:$0xff]
      %v363 = vld [vmem:[%s3 + $0xd0] sm:$0xff]
      %v364 = vld [vmem:[%s3 + $0xd8] sm:$0xff]
      %v365 = vld [vmem:[%s3 + $0xe0] sm:$0xff]
      %v366 = vld [vmem:[%s3 + $0xe8] sm:$0xff]
      %v367 = vld [vmem:[%s3 + $0xf0] sm:$0xff]
      %v368 = vld [vmem:[%s3 + $0xf8] sm:$0xff]
      %v369 = vld [vmem:[%s3 + $0x100] sm:$0xff]
      %v370 = vld [vmem:[%s3 + $0x108] sm:$0xff]
      %v371 = vld [vmem:[%s3 + $0x110] sm:$0xff]
      %v372 = vld [vmem:[%s3 + $0x118] sm:$0xff]
      %v373 = vld [vmem:[%s3 + $0x120] sm:$0xff]
      %v374 = vld [vmem:[%s3 + $0x128] sm:$0xff]
      %v375 = vld [vmem:[%s3 + $0x130] sm:$0xff]
      %v376 = vld [vmem:[%s3 + $0x138] sm:$0xff]
      %v377 = vld [vmem:[%s3 + $0x140] sm:$0xff]
      %v378 = vld [vmem:[%s3 + $0x148] sm:$0xff]
      %v379 = vld [vmem:[%s3 + $0x150] sm:$0xff]
      %v380 = vld [vmem:[%s3 + $0x158] sm:$0xff]
      %v381 = vld [vmem:[%s3 + $0x160] sm:$0xff]
      %v382 = vld [vmem:[%s3 + $0x168] sm:$0xff]
      %v383 = vld [vmem:[%s3 + $0x170] sm:$0xff]
      %v384 = vld [vmem:[%s3 + $0x178] sm:$0xff]
      %v385 = vld [vmem:[%s3 + $0x180] sm:$0xff]
      %v386 = vld [vmem:[%s3 + $0x188] sm:$0xff]
      %v387 = vld [vmem:[%s3 + $0x190] sm:$0xff]
      %v388 = vld [vmem:[%s3 + $0x198] sm:$0xff]
      %v389 = vld [vmem:[%s3 + $0x1a0] sm:$0xff]
      %v390 = vld [vmem:[%s3 + $0x1a8] sm:$0xff]
      %v391 = vld [vmem:[%s3 + $0x1b0] sm:$0xff]
      %v392 = vld [vmem:[%s3 + $0x1b8] sm:$0xff]
      %v393 = vld [vmem:[%s3 + $0x1c0] sm:$0xff]
      %v394 = vld [vmem:[%s3 + $0x1c8] sm:$0xff]
      %v395 = vld [vmem:[%s3 + $0x1d0] sm:$0xff]
      %v396 = vld [vmem:[%s3 + $0x1d8] sm:$0xff]
      %v397 = vld [vmem:[%s3 + $0x1e0] sm:$0xff]
      %v398 = vld [vmem:[%s3 + $0x1e8] sm:$0xff]
      %v399 = vld [vmem:[%s3 + $0x1f0] sm:$0xff]
      %v400 = vld [vmem:[%s3 + $0x1f8] sm:$0xff]
      %v401 = vld [vmem:[%s4] sm:$0xf]
      %p402 = scmp.eq.s32.totalorder %s23, 0
      // Predicated region
      $region41: #{encoder_forward.6} parent=39 // pred_check
        %p403 = pneg %p402
      $region42: #{encoder_forward.6} parent=39 // pred_check_branch
        %405 = sbr.rel (%p403) target = $region44
      $region43: #{encoder_forward.6} parent=39 // pred_region
        %406 = vst [vmem:[#allocation2] sm:$0x3f] 0.0
        %407 = vst [vmem:[#allocation3] sm:$0x3f] 0.0
        %408 = vst [vmem:[#allocation4] sm:$0x3f] 0.0
        %409 = vst [vmem:[#allocation5] sm:$0x3f] 0.0
        %410 = vst [vmem:[%s299] sm:$0x3f] 0.0
        %411 = vst [vmem:[%s299 + $0x8] sm:$0x3f] 0.0
        %412 = vst [vmem:[%s303] sm:$0x3f] 0.0
        %413 = vst [vmem:[%s303 + $0x8] sm:$0x3f] 0.0
      $region44: #{encoder_forward.6} parent=39 // pred_fallthru
        _
      %v414 = vld [vmem:[%s291] sm:$0x3f]
      %v415 = vld [vmem:[%s291 + $0x8] sm:$0x3f]
      %v416 = vld [vmem:[%s291 + $0x10] sm:$0x3f]
      %v417 = vld [vmem:[%s291 + $0x18] sm:$0x3f]
      %v418 = vld [vmem:[#allocation2] sm:$0x3f]
      %v419 = vpack.c.bf16 %v418, %v418
      %v452 = vunpack.c.l.b16 %v305
      %v453 = vunpack.c.h.b16 %v305
      %v454 = vunpack.c.l.b16 %v306
      %v455 = vunpack.c.h.b16 %v306
      %v456 = vunpack.c.l.b16 %v307
      %v457 = vunpack.c.h.b16 %v307
      %v458 = vunpack.c.l.b16 %v308
      %v459 = vunpack.c.h.b16 %v308
      %v460 = vunpack.c.l.b16 %v309
      %v461 = vunpack.c.h.b16 %v309
      %v462 = vunpack.c.l.b16 %v310
      %v463 = vunpack.c.h.b16 %v310
      %v464 = vunpack.c.l.b16 %v311
      %v465 = vunpack.c.h.b16 %v311
      %v466 = vunpack.c.l.b16 %v312
      %v467 = vunpack.c.h.b16 %v312
      %v468 = vunpack.c.l.b16 %v313
      %v469 = vunpack.c.h.b16 %v313
      %v470 = vunpack.c.l.b16 %v314
      %v471 = vunpack.c.h.b16 %v314
      %v472 = vunpack.c.l.b16 %v315
      %v473 = vunpack.c.h.b16 %v315
      %v474 = vunpack.c.l.b16 %v316
      %v475 = vunpack.c.h.b16 %v316
      %v476 = vunpack.c.l.b16 %v317
      %v477 = vunpack.c.h.b16 %v317
      %v478 = vunpack.c.l.b16 %v318
      %v479 = vunpack.c.h.b16 %v318
      %v480 = vunpack.c.l.b16 %v319
      %v481 = vunpack.c.h.b16 %v319
      %v482 = vunpack.c.l.b16 %v320
      %v483 = vunpack.c.h.b16 %v320
      %v484 = vunpack.c.l.b16 %v321
      %v485 = vunpack.c.h.b16 %v321
      %v486 = vunpack.c.l.b16 %v322
      %v487 = vunpack.c.h.b16 %v322
      %v488 = vunpack.c.l.b16 %v323
      %v489 = vunpack.c.h.b16 %v323
      %v490 = vunpack.c.l.b16 %v324
      %v491 = vunpack.c.h.b16 %v324
      %v492 = vunpack.c.l.b16 %v325
      %v493 = vunpack.c.h.b16 %v325
      %v494 = vunpack.c.l.b16 %v326
      %v495 = vunpack.c.h.b16 %v326
      %v496 = vunpack.c.l.b16 %v327
      %v497 = vunpack.c.h.b16 %v327
      %v498 = vunpack.c.l.b16 %v328
      %v499 = vunpack.c.h.b16 %v328
      %v500 = vunpack.c.l.b16 %v329
      %v501 = vunpack.c.h.b16 %v329
      %v502 = vunpack.c.l.b16 %v330
      %v503 = vunpack.c.h.b16 %v330
      %v504 = vunpack.c.l.b16 %v331
      %v505 = vunpack.c.h.b16 %v331
      %v506 = vunpack.c.l.b16 %v332
      %v507 = vunpack.c.h.b16 %v332
      %v508 = vunpack.c.l.b16 %v333
      %v509 = vunpack.c.h.b16 %v333
      %v510 = vunpack.c.l.b16 %v334
      %v511 = vunpack.c.h.b16 %v334
      %v512 = vunpack.c.l.b16 %v335
      %v513 = vunpack.c.h.b16 %v335
      %v514 = vunpack.c.l.b16 %v336
      %v515 = vunpack.c.h.b16 %v336
      %v516 = vpack.c.b16 %v456, %v452
      %v517 = vpack.c.b16 %v457, %v453
      %v518 = vpack.c.b16 %v458, %v454
      %v519 = vpack.c.b16 %v459, %v455
      %v520 = vpack.c.b16 %v464, %v460
      %v521 = vpack.c.b16 %v465, %v461
      %v522 = vpack.c.b16 %v466, %v462
      %v523 = vpack.c.b16 %v467, %v463
      %v524 = vpack.c.b16 %v472, %v468
      %v525 = vpack.c.b16 %v473, %v469
      %v526 = vpack.c.b16 %v474, %v470
      %v527 = vpack.c.b16 %v475, %v471
      %v528 = vpack.c.b16 %v480, %v476
      %v529 = vpack.c.b16 %v481, %v477
      %v530 = vpack.c.b16 %v482, %v478
      %v531 = vpack.c.b16 %v483, %v479
      %v532 = vpack.c.b16 %v488, %v484
      %v533 = vpack.c.b16 %v489, %v485
      %v534 = vpack.c.b16 %v490, %v486
      %v535 = vpack.c.b16 %v491, %v487
      %v536 = vpack.c.b16 %v496, %v492
      %v537 = vpack.c.b16 %v497, %v493
      %v538 = vpack.c.b16 %v498, %v494
      %v539 = vpack.c.b16 %v499, %v495
      %v540 = vpack.c.b16 %v504, %v500
      %v541 = vpack.c.b16 %v505, %v501
      %v542 = vpack.c.b16 %v506, %v502
      %v543 = vpack.c.b16 %v507, %v503
      %v544 = vpack.c.b16 %v512, %v508
      %v545 = vpack.c.b16 %v513, %v509
      %v546 = vpack.c.b16 %v514, %v510
      %v547 = vpack.c.b16 %v515, %v511
      %580 = vmatprep.subr.bf16.mxu0 %v545
      %581 = vmatpush1.bf16.msra.mxu0 %v544
      %582 = vmatprep.subr.bf16.mxu0 %v541
      %583 = vmatpush1.bf16.msra.mxu0 %v540
      %584 = vmatprep.subr.bf16.mxu0 %v537
      %585 = vmatpush1.bf16.msra.mxu0 %v536
      %586 = vmatprep.subr.bf16.mxu0 %v533
      %587 = vmatpush1.bf16.msra.mxu0 %v532
      %588 = vmatprep.subr.bf16.mxu0 %v529
      %589 = vmatpush1.bf16.msra.mxu0 %v528
      %590 = vmatprep.subr.bf16.mxu0 %v525
      %591 = vmatpush1.bf16.msra.mxu0 %v524
      %592 = vmatprep.subr.bf16.mxu0 %v521
      %593 = vmatpush1.bf16.msra.mxu0 %v520
      %594 = vmatprep.subr.bf16.mxu0 %v517
      %595 = vmatpush1.bf16.msra.mxu0 %v516
      %596 = vmatprep.subr.bf16.mxu0 0
      %597 = vmatpush2.bf16.msra.mxu0 0
      %598 = vmatprep.subr.bf16.mxu0 0
      %599 = vmatpush2.bf16.msra.mxu0 0
      %600 = vmatprep.subr.bf16.mxu0 0
      %601 = vmatpush2.bf16.msra.mxu0 0
      %602 = vmatprep.subr.bf16.mxu0 0
      %603 = vmatpush2.bf16.msra.mxu0 0
      %604 = vmatprep.subr.bf16.mxu0 0
      %605 = vmatpush2.bf16.msra.mxu0 0
      %606 = vmatprep.subr.bf16.mxu0 0
      %607 = vmatpush2.bf16.msra.mxu0 0
      %608 = vmatprep.subr.bf16.mxu0 0
      %609 = vmatpush2.bf16.msra.mxu0 0
      %610 = vmatprep.subr.bf16.mxu0 0
      %611 = vmatpush2.bf16.msra.mxu0 0
      %612 = vmatprep.mubr.bf16.mxu0 0
      %613 = vmatmul.mubr.bf16.gmra.mxu0 %v419
      %v614 = vpop.f32.mrf.mxu0
      %v615 = vadd.f32 0.0, %v614
      %v616 = vpop.f32.mrf.mxu0
      %v617 = vadd.f32 0.0, %v616
      %v618 = vpop.f32.mrf.mxu0
      %v619 = vpop.f32.mrf.mxu0
      %620 = vdwg.mxu0
      %621 = vmatprep.subr.bf16.mxu0 %v547
      %622 = vmatpush1.bf16.msra.mxu0 %v546
      %623 = vmatprep.subr.bf16.mxu0 %v543
      %624 = vmatpush1.bf16.msra.mxu0 %v542
      %625 = vmatprep.subr.bf16.mxu0 %v539
      %626 = vmatpush1.bf16.msra.mxu0 %v538
      %627 = vmatprep.subr.bf16.mxu0 %v535
      %628 = vmatpush1.bf16.msra.mxu0 %v534
      %629 = vmatprep.subr.bf16.mxu0 %v531
      %630 = vmatpush1.bf16.msra.mxu0 %v530
      %631 = vmatprep.subr.bf16.mxu0 %v527
      %632 = vmatpush1.bf16.msra.mxu0 %v526
      %633 = vmatprep.subr.bf16.mxu0 %v523
      %634 = vmatpush1.bf16.msra.mxu0 %v522
      %635 = vmatprep.subr.bf16.mxu0 %v519
      %636 = vmatpush1.bf16.msra.mxu0 %v518
      %637 = vmatprep.subr.bf16.mxu0 0
      %638 = vmatpush2.bf16.msra.mxu0 0
      %639 = vmatprep.subr.bf16.mxu0 0
      %640 = vmatpush2.bf16.msra.mxu0 0
      %641 = vmatprep.subr.bf16.mxu0 0
      %642 = vmatpush2.bf16.msra.mxu0 0
      %643 = vmatprep.subr.bf16.mxu0 0
      %644 = vmatpush2.bf16.msra.mxu0 0
      %645 = vmatprep.subr.bf16.mxu0 0
      %646 = vmatpush2.bf16.msra.mxu0 0
      %647 = vmatprep.subr.bf16.mxu0 0
      %648 = vmatpush2.bf16.msra.mxu0 0
      %649 = vmatprep.subr.bf16.mxu0 0
      %650 = vmatpush2.bf16.msra.mxu0 0
      %651 = vmatprep.subr.bf16.mxu0 0
      %652 = vmatpush2.bf16.msra.mxu0 0
      %653 = vmatprep.mubr.bf16.mxu0 0
      %654 = vmatmul.mubr.bf16.gmra.mxu0 %v419
      %v655 = vpop.f32.mrf.mxu0
      %v656 = vadd.f32 0.0, %v655
      %v657 = vpop.f32.mrf.mxu0
      %v658 = vadd.f32 0.0, %v657
      %v659 = vpop.f32.mrf.mxu0
      %v660 = vpop.f32.mrf.mxu0
      %661 = vdwg.mxu0
      %v662 = vadd.f32 %v414, %v615
      %v663 = vadd.f32 %v415, %v617
      %v664 = vadd.f32 %v416, %v656
      %v665 = vadd.f32 %v417, %v658
      %v666 = vmul.f32 %v662, 0.5
      %v667 = vtanh.pop %v666
      %v668 = vmul.f32 %v667, 0.5
      %v669 = vadd.f32 %v668, 0.5
      %v670 = vmul.f32 %v663, 0.5
      %v671 = vtanh.pop %v670
      %v672 = vmul.f32 %v671, 0.5
      %v673 = vadd.f32 %v672, 0.5
      %v674 = vtanh.pop %v664
      %v675 = vmul.f32 %v665, 0.5
      %v676 = vtanh.pop %v675
      %v677 = vmul.f32 %v676, 0.5
      %v678 = vadd.f32 %v677, 0.5
      %v679 = vld [vmem:[#allocation3] sm:$0x3f]
      %v680 = vmul.f32 %v673, %v679
      %v681 = vmul.f32 %v669, %v674
      %v682 = vadd.f32 %v680, %v681
      %v683 = vtanh.pop %v682
      %v684 = vmul.f32 %v678, %v683
      %v685 = vld [vmem:[#allocation4] sm:$0x3f]
      %v686 = vpack.c.bf16 %v684, %v684
      %v687 = vpack.c.bf16 %v685, %v685
      %v689 = vlaneseq
      %v690 = vshrl.u32 %v689, 7
      %v691 = vsub.s32 0, %v690
      %v692 = vrot.slane %v401, %v691
      %v693 = vlaneseq
      %v694 = vshrl.u32 %v693, 7
      %v695 = vsub.s32 1, %v694
      %v696 = vrot.slane %v401, %v695
      %v697 = vlaneseq
      %v698 = vshrl.u32 %v697, 7
      %v699 = vsub.s32 2, %v698
      %v700 = vrot.slane %v401, %v699
      %v701 = vlaneseq
      %v702 = vshrl.u32 %v701, 7
      %v703 = vsub.s32 3, %v702
      %v704 = vrot.slane %v401, %v703
      %v773 = vunpack.c.l.b16 %v337
      %v774 = vunpack.c.h.b16 %v337
      %v775 = vunpack.c.l.b16 %v338
      %v776 = vunpack.c.h.b16 %v338
      %v777 = vunpack.c.l.b16 %v339
      %v778 = vunpack.c.h.b16 %v339
      %v779 = vunpack.c.l.b16 %v340
      %v780 = vunpack.c.h.b16 %v340
      %v781 = vunpack.c.l.b16 %v341
      %v782 = vunpack.c.h.b16 %v341
      %v783 = vunpack.c.l.b16 %v342
      %v784 = vunpack.c.h.b16 %v342
      %v785 = vunpack.c.l.b16 %v343
      %v786 = vunpack.c.h.b16 %v343
      %v787 = vunpack.c.l.b16 %v344
      %v788 = vunpack.c.h.b16 %v344
      %v789 = vunpack.c.l.b16 %v345
      %v790 = vunpack.c.h.b16 %v345
      %v791 = vunpack.c.l.b16 %v346
      %v792 = vunpack.c.h.b16 %v346
      %v793 = vunpack.c.l.b16 %v347
      %v794 = vunpack.c.h.b16 %v347
      %v795 = vunpack.c.l.b16 %v348
      %v796 = vunpack.c.h.b16 %v348
      %v797 = vunpack.c.l.b16 %v349
      %v798 = vunpack.c.h.b16 %v349
      %v799 = vunpack.c.l.b16 %v350
      %v800 = vunpack.c.h.b16 %v350
      %v801 = vunpack.c.l.b16 %v351
      %v802 = vunpack.c.h.b16 %v351
      %v803 = vunpack.c.l.b16 %v352
      %v804 = vunpack.c.h.b16 %v352
      %v805 = vunpack.c.l.b16 %v353
      %v806 = vunpack.c.h.b16 %v353
      %v807 = vunpack.c.l.b16 %v354
      %v808 = vunpack.c.h.b16 %v354
      %v809 = vunpack.c.l.b16 %v355
      %v810 = vunpack.c.h.b16 %v355
      %v811 = vunpack.c.l.b16 %v356
      %v812 = vunpack.c.h.b16 %v356
      %v813 = vunpack.c.l.b16 %v357
      %v814 = vunpack.c.h.b16 %v357
      %v815 = vunpack.c.l.b16 %v358
      %v816 = vunpack.c.h.b16 %v358
      %v817 = vunpack.c.l.b16 %v359
      %v818 = vunpack.c.h.b16 %v359
      %v819 = vunpack.c.l.b16 %v360
      %v820 = vunpack.c.h.b16 %v360
      %v821 = vunpack.c.l.b16 %v361
      %v822 = vunpack.c.h.b16 %v361
      %v823 = vunpack.c.l.b16 %v362
      %v824 = vunpack.c.h.b16 %v362
      %v825 = vunpack.c.l.b16 %v363
      %v826 = vunpack.c.h.b16 %v363
      %v827 = vunpack.c.l.b16 %v364
      %v828 = vunpack.c.h.b16 %v364
      %v829 = vunpack.c.l.b16 %v365
      %v830 = vunpack.c.h.b16 %v365
      %v831 = vunpack.c.l.b16 %v366
      %v832 = vunpack.c.h.b16 %v366
      %v833 = vunpack.c.l.b16 %v367
      %v834 = vunpack.c.h.b16 %v367
      %v835 = vunpack.c.l.b16 %v368
      %v836 = vunpack.c.h.b16 %v368
      %v837 = vunpack.c.l.b16 %v369
      %v838 = vunpack.c.h.b16 %v369
      %v839 = vunpack.c.l.b16 %v370
      %v840 = vunpack.c.h.b16 %v370
      %v841 = vunpack.c.l.b16 %v371
      %v842 = vunpack.c.h.b16 %v371
      %v843 = vunpack.c.l.b16 %v372
      %v844 = vunpack.c.h.b16 %v372
      %v845 = vunpack.c.l.b16 %v373
      %v846 = vunpack.c.h.b16 %v373
      %v847 = vunpack.c.l.b16 %v374
      %v848 = vunpack.c.h.b16 %v374
      %v849 = vunpack.c.l.b16 %v375
      %v850 = vunpack.c.h.b16 %v375
      %v851 = vunpack.c.l.b16 %v376
      %v852 = vunpack.c.h.b16 %v376
      %v853 = vunpack.c.l.b16 %v377
      %v854 = vunpack.c.h.b16 %v377
      %v855 = vunpack.c.l.b16 %v378
      %v856 = vunpack.c.h.b16 %v378
      %v857 = vunpack.c.l.b16 %v379
      %v858 = vunpack.c.h.b16 %v379
      %v859 = vunpack.c.l.b16 %v380
      %v860 = vunpack.c.h.b16 %v380
      %v861 = vunpack.c.l.b16 %v381
      %v862 = vunpack.c.h.b16 %v381
      %v863 = vunpack.c.l.b16 %v382
      %v864 = vunpack.c.h.b16 %v382
      %v865 = vunpack.c.l.b16 %v383
      %v866 = vunpack.c.h.b16 %v383
      %v867 = vunpack.c.l.b16 %v384
      %v868 = vunpack.c.h.b16 %v384
      %v869 = vunpack.c.l.b16 %v385
      %v870 = vunpack.c.h.b16 %v385
      %v871 = vunpack.c.l.b16 %v386
      %v872 = vunpack.c.h.b16 %v386
      %v873 = vunpack.c.l.b16 %v387
      %v874 = vunpack.c.h.b16 %v387
      %v875 = vunpack.c.l.b16 %v388
      %v876 = vunpack.c.h.b16 %v388
      %v877 = vunpack.c.l.b16 %v389
      %v878 = vunpack.c.h.b16 %v389
      %v879 = vunpack.c.l.b16 %v390
      %v880 = vunpack.c.h.b16 %v390
      %v881 = vunpack.c.l.b16 %v391
      %v882 = vunpack.c.h.b16 %v391
      %v883 = vunpack.c.l.b16 %v392
      %v884 = vunpack.c.h.b16 %v392
      %v885 = vunpack.c.l.b16 %v393
      %v886 = vunpack.c.h.b16 %v393
      %v887 = vunpack.c.l.b16 %v394
      %v888 = vunpack.c.h.b16 %v394
      %v889 = vunpack.c.l.b16 %v395
      %v890 = vunpack.c.h.b16 %v395
      %v891 = vunpack.c.l.b16 %v396
      %v892 = vunpack.c.h.b16 %v396
      %v893 = vunpack.c.l.b16 %v397
      %v894 = vunpack.c.h.b16 %v397
      %v895 = vunpack.c.l.b16 %v398
      %v896 = vunpack.c.h.b16 %v398
      %v897 = vunpack.c.l.b16 %v399
      %v898 = vunpack.c.h.b16 %v399
      %v899 = vunpack.c.l.b16 %v400
      %v900 = vunpack.c.h.b16 %v400
      %v901 = vpack.c.b16 %v777, %v773
      %v902 = vpack.c.b16 %v778, %v774
      %v903 = vpack.c.b16 %v779, %v775
      %v904 = vpack.c.b16 %v780, %v776
      %v905 = vpack.c.b16 %v785, %v781
      %v906 = vpack.c.b16 %v786, %v782
      %v907 = vpack.c.b16 %v787, %v783
      %v908 = vpack.c.b16 %v788, %v784
      %v909 = vpack.c.b16 %v793, %v789
      %v910 = vpack.c.b16 %v794, %v790
      %v911 = vpack.c.b16 %v795, %v791
      %v912 = vpack.c.b16 %v796, %v792
      %v913 = vpack.c.b16 %v801, %v797
      %v914 = vpack.c.b16 %v802, %v798
      %v915 = vpack.c.b16 %v803, %v799
      %v916 = vpack.c.b16 %v804, %v800
      %v917 = vpack.c.b16 %v809, %v805
      %v918 = vpack.c.b16 %v810, %v806
      %v919 = vpack.c.b16 %v811, %v807
      %v920 = vpack.c.b16 %v812, %v808
      %v921 = vpack.c.b16 %v817, %v813
      %v922 = vpack.c.b16 %v818, %v814
      %v923 = vpack.c.b16 %v819, %v815
      %v924 = vpack.c.b16 %v820, %v816
      %v925 = vpack.c.b16 %v825, %v821
      %v926 = vpack.c.b16 %v826, %v822
      %v927 = vpack.c.b16 %v827, %v823
      %v928 = vpack.c.b16 %v828, %v824
      %v929 = vpack.c.b16 %v833, %v829
      %v930 = vpack.c.b16 %v834, %v830
      %v931 = vpack.c.b16 %v835, %v831
      %v932 = vpack.c.b16 %v836, %v832
      %v933 = vpack.c.b16 %v841, %v837
      %v934 = vpack.c.b16 %v842, %v838
      %v935 = vpack.c.b16 %v843, %v839
      %v936 = vpack.c.b16 %v844, %v840
      %v937 = vpack.c.b16 %v849, %v845
      %v938 = vpack.c.b16 %v850, %v846
      %v939 = vpack.c.b16 %v851, %v847
      %v940 = vpack.c.b16 %v852, %v848
      %v941 = vpack.c.b16 %v857, %v853
      %v942 = vpack.c.b16 %v858, %v854
      %v943 = vpack.c.b16 %v859, %v855
      %v944 = vpack.c.b16 %v860, %v856
      %v945 = vpack.c.b16 %v865, %v861
      %v946 = vpack.c.b16 %v866, %v862
      %v947 = vpack.c.b16 %v867, %v863
      %v948 = vpack.c.b16 %v868, %v864
      %v949 = vpack.c.b16 %v873, %v869
      %v950 = vpack.c.b16 %v874, %v870
      %v951 = vpack.c.b16 %v875, %v871
      %v952 = vpack.c.b16 %v876, %v872
      %v953 = vpack.c.b16 %v881, %v877
      %v954 = vpack.c.b16 %v882, %v878
      %v955 = vpack.c.b16 %v883, %v879
      %v956 = vpack.c.b16 %v884, %v880
      %v957 = vpack.c.b16 %v889, %v885
      %v958 = vpack.c.b16 %v890, %v886
      %v959 = vpack.c.b16 %v891, %v887
      %v960 = vpack.c.b16 %v892, %v888
      %v961 = vpack.c.b16 %v897, %v893
      %v962 = vpack.c.b16 %v898, %v894
      %v963 = vpack.c.b16 %v899, %v895
      %v964 = vpack.c.b16 %v900, %v896
      %1029 = vmatprep.subr.bf16.mxu0 %v930
      %1030 = vmatpush1.bf16.msra.mxu0 %v929
      %1031 = vmatprep.subr.bf16.mxu0 %v926
      %1032 = vmatpush1.bf16.msra.mxu0 %v925
      %1033 = vmatprep.subr.bf16.mxu0 %v922
      %1034 = vmatpush1.bf16.msra.mxu0 %v921
      %1035 = vmatprep.subr.bf16.mxu0 %v918
      %1036 = vmatpush1.bf16.msra.mxu0 %v917
      %1037 = vmatprep.subr.bf16.mxu0 %v914
      %1038 = vmatpush1.bf16.msra.mxu0 %v913
      %1039 = vmatprep.subr.bf16.mxu0 %v910
      %1040 = vmatpush1.bf16.msra.mxu0 %v909
      %1041 = vmatprep.subr.bf16.mxu0 %v906
      %1042 = vmatpush1.bf16.msra.mxu0 %v905
      %1043 = vmatprep.subr.bf16.mxu0 %v902
      %1044 = vmatpush1.bf16.msra.mxu0 %v901
      %1045 = vmatprep.subr.bf16.mxu0 %v962
      %1046 = vmatpush2.bf16.msra.mxu0 %v961
      %1047 = vmatprep.subr.bf16.mxu0 %v958
      %1048 = vmatpush2.bf16.msra.mxu0 %v957
      %1049 = vmatprep.subr.bf16.mxu0 %v954
      %1050 = vmatpush2.bf16.msra.mxu0 %v953
      %1051 = vmatprep.subr.bf16.mxu0 %v950
      %1052 = vmatpush2.bf16.msra.mxu0 %v949
      %1053 = vmatprep.subr.bf16.mxu0 %v946
      %1054 = vmatpush2.bf16.msra.mxu0 %v945
      %1055 = vmatprep.subr.bf16.mxu0 %v942
      %1056 = vmatpush2.bf16.msra.mxu0 %v941
      %1057 = vmatprep.subr.bf16.mxu0 %v938
      %1058 = vmatpush2.bf16.msra.mxu0 %v937
      %1059 = vmatprep.subr.bf16.mxu0 %v934
      %1060 = vmatpush2.bf16.msra.mxu0 %v933
      %1061 = vmatprep.mubr.bf16.mxu0 %v687
      %1062 = vmatmul.mubr.bf16.gmra.mxu0 %v686
      %v1063 = vpop.f32.mrf.mxu0
      %v1064 = vadd.f32 %v692, %v1063
      %v1065 = vpop.f32.mrf.mxu0
      %v1066 = vadd.f32 %v696, %v1065
      %v1067 = vpop.f32.mrf.mxu0
      %v1068 = vpop.f32.mrf.mxu0
      %1069 = vdwg.mxu0
      %1070 = vmatprep.subr.bf16.mxu0 %v932
      %1071 = vmatpush1.bf16.msra.mxu0 %v931
      %1072 = vmatprep.subr.bf16.mxu0 %v928
      %1073 = vmatpush1.bf16.msra.mxu0 %v927
      %1074 = vmatprep.subr.bf16.mxu0 %v924
      %1075 = vmatpush1.bf16.msra.mxu0 %v923
      %1076 = vmatprep.subr.bf16.mxu0 %v920
      %1077 = vmatpush1.bf16.msra.mxu0 %v919
      %1078 = vmatprep.subr.bf16.mxu0 %v916
      %1079 = vmatpush1.bf16.msra.mxu0 %v915
      %1080 = vmatprep.subr.bf16.mxu0 %v912
      %1081 = vmatpush1.bf16.msra.mxu0 %v911
      %1082 = vmatprep.subr.bf16.mxu0 %v908
      %1083 = vmatpush1.bf16.msra.mxu0 %v907
      %1084 = vmatprep.subr.bf16.mxu0 %v904
      %1085 = vmatpush1.bf16.msra.mxu0 %v903
      %1086 = vmatprep.subr.bf16.mxu0 %v964
      %1087 = vmatpush2.bf16.msra.mxu0 %v963
      %1088 = vmatprep.subr.bf16.mxu0 %v960
      %1089 = vmatpush2.bf16.msra.mxu0 %v959
      %1090 = vmatprep.subr.bf16.mxu0 %v956
      %1091 = vmatpush2.bf16.msra.mxu0 %v955
      %1092 = vmatprep.subr.bf16.mxu0 %v952
      %1093 = vmatpush2.bf16.msra.mxu0 %v951
      %1094 = vmatprep.subr.bf16.mxu0 %v948
      %1095 = vmatpush2.bf16.msra.mxu0 %v947
      %1096 = vmatprep.subr.bf16.mxu0 %v944
      %1097 = vmatpush2.bf16.msra.mxu0 %v943
      %1098 = vmatprep.subr.bf16.mxu0 %v940
      %1099 = vmatpush2.bf16.msra.mxu0 %v939
      %1100 = vmatprep.subr.bf16.mxu0 %v936
      %1101 = vmatpush2.bf16.msra.mxu0 %v935
      %1102 = vmatprep.mubr.bf16.mxu0 %v687
      %1103 = vmatmul.mubr.bf16.gmra.mxu0 %v686
      %v1104 = vpop.f32.mrf.mxu0
      %v1105 = vadd.f32 %v700, %v1104
      %v1106 = vpop.f32.mrf.mxu0
      %v1107 = vadd.f32 %v704, %v1106
      %v1108 = vpop.f32.mrf.mxu0
      %v1109 = vpop.f32.mrf.mxu0
      %1110 = vdwg.mxu0
      %v1111 = vmul.f32 %v1064, 0.5
      %v1112 = vtanh.pop %v1111
      %v1113 = vmul.f32 %v1112, 0.5
      %v1114 = vadd.f32 %v1113, 0.5
      %v1115 = vmul.f32 %v1066, 0.5
      %v1116 = vtanh.pop %v1115
      %v1117 = vmul.f32 %v1116, 0.5
      %v1118 = vadd.f32 %v1117, 0.5
      %v1119 = vtanh.pop %v1105
      %v1120 = vmul.f32 %v1107, 0.5
      %v1121 = vtanh.pop %v1120
      %v1122 = vmul.f32 %v1121, 0.5
      %v1123 = vadd.f32 %v1122, 0.5
      %v1124 = vld [vmem:[#allocation5] sm:$0x3f]
      %v1125 = vmul.f32 %v1118, %v1124
      %v1126 = vmul.f32 %v1114, %v1119
      %v1127 = vadd.f32 %v1125, %v1126
      %v1128 = vtanh.pop %v1127
      %v1129 = vmul.f32 %v1123, %v1128
      %1130 = vst [vmem:[#allocation2] sm:$0x3f] %v684
      %1131 = vst [vmem:[#allocation3] sm:$0x3f] %v682
      %1132 = vst [vmem:[#allocation4] sm:$0x3f] %v1129
      %1133 = vst [vmem:[#allocation5] sm:$0x3f] %v1127
      %v1134 = vld [vmem:[%s295] sm:$0x3f]
      %s1135 = sadd.s32 %s23, 1
      %v1136 = vstv %s1135
      %vm1137 = vcmp.eq.s32.totalorder %v1134, %v1136
      %v1138 = vld [vmem:[%s299] sm:$0x3f]
      %v1139 = vsel %vm1137, 1, 0
      %1140 = vset.pattern.permute.xlu0 0
      %1141 = vperm.xlu0 %1140, %v1139
      %v1142 = vpop.permute.xlu0 %1141
      %vm1143 = vcmp.eq.s32.totalorder %v1142, 1
      %v1144 = vsel %vm1143, %v684, %v1138
      %1145 = vst [vmem:[%s299] sm:$0x3f] %v1144
      %v1146 = vld [vmem:[%s303] sm:$0x3f]
      %v1147 = vsel %vm1143, %v682, %v1146
      %1148 = vst [vmem:[%s303] sm:$0x3f] %v1147
      %s1149 = scalar_lea.vmem %s299, 8
      %v1150 = vld [vmem:[%s1149] sm:$0x3f]
      %v1151 = vsel %vm1143, %v1129, %v1150
      %1152 = vst [vmem:[%s1149] sm:$0x3f] %v1151
      %s1153 = scalar_lea.vmem %s303, 8
      %v1154 = vld [vmem:[%s1153] sm:$0x3f]
      %v1155 = vsel %vm1143, %v1127, %v1154
      %1156 = vst [vmem:[%s1153] sm:$0x3f] %v1155
      %p1157 = scmp.lt.s32.totalorder %s22, 0
      %s1158 = scalar_select %p1157, %s22, 0
      %s1159 = smul.addr %s1158, 8
      %s1160 = scalar_lea.vmem %s5, %s1159
      %p1161 = scmp.lt.s32.totalorder %s22, 0
      %s1162 = scalar_select %p1161, %s22, 0
      %s1163 = smul.addr %s1162, 8
      %s1164 = scalar_lea.vmem %s6, %s1163
      // Predicated region
      $region45: #{encoder_forward.6} parent=39 // pred_check
        %p1165 = pneg %p165
      $region46: #{encoder_forward.6} parent=39 // pred_check_branch
        %1167 = sbr.rel (%p1165) target = $region48
      $region47: #{encoder_forward.6} parent=39 // pred_region
        _
      $region48: #{encoder_forward.6} parent=39 // pred_fallthru
        _
      // Predicated region
      $region49: #{encoder_forward.6} parent=39 // pred_check
        %p1168 = pneg %p191
      $region50: #{encoder_forward.6} parent=39 // pred_check_branch
        %1170 = sbr.rel (%p1168) target = $region52
      $region51: #{encoder_forward.6} parent=39 // pred_region
        _
      $region52: #{encoder_forward.6} parent=39 // pred_fallthru
        _
      // Predicated region
      $region53: #{encoder_forward.6} parent=39 // pred_check
        %p1171 = pneg %p165
      $region54: #{encoder_forward.6} parent=39 // pred_check_branch
        %1173 = sbr.rel (%p1171) target = $region56
      $region55: #{encoder_forward.6} parent=39 // pred_region
        %p1174 = scmp.lt.s32.totalorder %s22, 0
        %s1175 = scalar_select %p1174, %s22, 0
        %s1176 = smul.addr %s1175, 8
        %s1177 = scalar_lea.vmem %s5, %s1176
      $region56: #{encoder_forward.6} parent=39 // pred_fallthru
        _
      // Predicated region
      $region57: #{encoder_forward.6} parent=39 // pred_check
        %p1178 = pneg %p191
      $region58: #{encoder_forward.6} parent=39 // pred_check_branch
        %1180 = sbr.rel (%p1178) target = $region60
      $region59: #{encoder_forward.6} parent=39 // pred_region
        %p1181 = scmp.lt.s32.totalorder %s22, 0
        %s1182 = scalar_select %p1181, %s22, 0
        %s1183 = smul.addr %s1182, 8
        %s1184 = scalar_lea.vmem %s6, %s1183
      $region60: #{encoder_forward.6} parent=39 // pred_fallthru
        _
    $region40: #{encoder_forward.6} parent=5 // pred_fallthru
      _
    %p1185 = scmp.le.s32.totalorder 2, %s13
    // Predicated region
    $region61: #{encoder_forward.6} parent=5 // pred_check
      %p1186 = pneg %p1185
    $region62: #{encoder_forward.6} parent=5 // pred_check_branch
      %1188 = sbr.rel (%p1186) target = $region64
    $region63: #{encoder_forward.6} parent=5 // pred_region
      %s1189 = ssub.s32 %s13, 2
    $region64: #{encoder_forward.6} parent=5 // pred_fallthru
      _
  $region6: #{encoder_forward.6} parent=0 // loop_footer
    %s17 = sadd.s32 1, %s13
  $region7: #{encoder_forward.6} parent=0 // loop_footer_branch
    %12 = sbr.rel target = $region3
  $region8: #{encoder_forward.6} parent=0 // loop_exit
    _

// kernel: encoder_forward.7
$region0: #{encoder_forward.7}
  #allocation0 [shape = 'u32[]', space=smem, size = 0x4, offset = 0x4, fixed_abs, tag = 'smem constant byte address 0x4 - core index']
  #allocation1 [shape = 'u32[144,128]{1,0:T(1,128)}', space=vmem, size = 0x12000, scoped, tag = 'internal scratch']
  %s0 = inlined_call_operand.vmem [shape: f32[4,2,128], index: 0, kind: input, shape index: {}]
  %s1 = inlined_call_operand.vmem [shape: bf16[256,512], index: 1, kind: input, shape index: {}]
  %s2 = inlined_call_operand.vmem [shape: f32[1,512], index: 2, kind: input, shape index: {}]
  %s3 = inlined_call_operand.vmem [shape: f32[2,128], index: 3, kind: output, shape index: {0}]
  %s4 = inlined_call_operand.hbm [shape: f32[2,128], index: 4, kind: output, shape index: {1}]
  %5 = xla_tuple %s3, %s4
  %s6 = sld [smem:[#allocation0]]
  $region57: #{encoder_forward.7} parent=0
    _
  %s8 = ssub.s32 1, %s6
  %s9 = scalar_select 0, %s8, %s6
  $region1: #{encoder_forward.7} parent=0
    #allocation2 [shape = 'u8[1024]{0}', space=vmem, size = 0x400, scoped, tag = 'output window, operand 1, single buffered']
    #allocation3 [shape = 's32[2]{0}', space=sflag, size = 0x8, scoped, tag = 'scoped memory for encoder_forward.7']
    %10 = vsyncpa [#allocation3], 0
    loop: start=0, step=1, limit=6
    $region2: #{encoder_forward.7} parent=1 // loop_pre_header
      _
    $region3: #{encoder_forward.7} parent=1 // loop_header
      %s12 = sphi 0, %s16
      %p13 = scmp.ge.s32.totalorder %s12, 6
      %s22 = sphi 0, %s24
      %s25 = sphi 0, %s22
      %s26 = sphi 0, %s25
      %s42 = sphi 0, %s26
      %s46 = sphi 0, %s46
      %s48 = sphi 0, %s46
      %s49 = sphi 0, %s48
      %s63 = sphi 0, %s49
      %s67 = sphi 0, %s67
      %s69 = sphi 0, %s67
      %s70 = sphi 0, %s69
      %s84 = sphi 0, %s70
      %s88 = sphi 0, %s88
      %s90 = sphi 0, %s88
      %s91 = sphi 0, %s90
      %s105 = sphi 0, %s91
      %s109 = sphi 0, %s109
      %s111 = sphi 0, %s109
      %s112 = sphi 0, %s111
      %s126 = sphi 0, %s112
    $region4: #{encoder_forward.7} parent=1 // loop_header_branch
      %15 = sbr.rel (%p13) target = $region8
    $region5: #{encoder_forward.7} parent=1 // loop_body
      %s17 = ssub.s32 %s12, 1
      %s18 = ssub.s32 %s12, 2
      %s19 = sadd.s32 %s12, 1
      %s20 = ssub.s32 %s12, %s19
      %p21 = scmp.eq.s32.totalorder %s20, 0
      %s23 = sadd.s32 %s22, 1
      %s24 = scalar_select %p21, %s22, %s23
      %p27 = pneg %p21
      %p28 = scmp.eq.s32.totalorder %s12, 3
      %p29 = por %p27, %p28
      %p30 = scmp.ne.s32.totalorder %s22, %s25
      %p31 = scmp.eq.s32.totalorder %s12, 0
      %p32 = por %p30, %p31
      %p33 = scmp.ne.s32.totalorder %s22, %s25
      %p34 = scmp.eq.s32.totalorder %s17, 3
      %p35 = por %p33, %p34
      %p36 = scmp.ne.s32.totalorder %s25, %s26
      %p37 = scmp.eq.s32.totalorder %s17, 0
      %p38 = por %p36, %p37
      %p39 = scmp.ne.s32.totalorder %s25, %s26
      %p40 = scmp.eq.s32.totalorder %s18, 3
      %p41 = por %p39, %p40
      %p43 = scmp.ne.s32.totalorder %s26, %s42
      %p44 = scmp.eq.s32.totalorder %s18, 0
      %p45 = por %p43, %p44
      %s47 = sadd.s32 %s46, 1
      %p50 = scmp.eq.s32.totalorder %s12, 3
      %p51 = scmp.ne.s32.totalorder %s46, %s48
      %p52 = scmp.eq.s32.totalorder %s12, 0
      %p53 = por %p51, %p52
      %p54 = scmp.ne.s32.totalorder %s46, %s48
      %p55 = scmp.eq.s32.totalorder %s17, 3
      %p56 = por %p54, %p55
      %p57 = scmp.ne.s32.totalorder %s48, %s49
      %p58 = scmp.eq.s32.totalorder %s17, 0
      %p59 = por %p57, %p58
      %p60 = scmp.ne.s32.totalorder %s48, %s49
      %p61 = scmp.eq.s32.totalorder %s18, 3
      %p62 = por %p60, %p61
      %p64 = scmp.ne.s32.totalorder %s49, %s63
      %p65 = scmp.eq.s32.totalorder %s18, 0
      %p66 = por %p64, %p65
      %s68 = sadd.s32 %s67, 1
      %p71 = scmp.eq.s32.totalorder %s12, 3
      %p72 = scmp.ne.s32.totalorder %s67, %s69
      %p73 = scmp.eq.s32.totalorder %s12, 0
      %p74 = por %p72, %p73
      %p75 = scmp.ne.s32.totalorder %s67, %s69
      %p76 = scmp.eq.s32.totalorder %s17, 3
      %p77 = por %p75, %p76
      %p78 = scmp.ne.s32.totalorder %s69, %s70
      %p79 = scmp.eq.s32.totalorder %s17, 0
      %p80 = por %p78, %p79
      %p81 = scmp.ne.s32.totalorder %s69, %s70
      %p82 = scmp.eq.s32.totalorder %s18, 3
      %p83 = por %p81, %p82
      %p85 = scmp.ne.s32.totalorder %s70, %s84
      %p86 = scmp.eq.s32.totalorder %s18, 0
      %p87 = por %p85, %p86
      %s89 = sadd.s32 %s88, 1
      %p92 = scmp.eq.s32.totalorder %s12, 3
      %p93 = scmp.ne.s32.totalorder %s88, %s90
      %p94 = scmp.eq.s32.totalorder %s12, 0
      %p95 = por %p93, %p94
      %p96 = scmp.ne.s32.totalorder %s88, %s90
      %p97 = scmp.eq.s32.totalorder %s17, 3
      %p98 = por %p96, %p97
      %p99 = scmp.ne.s32.totalorder %s90, %s91
      %p100 = scmp.eq.s32.totalorder %s17, 0
      %p101 = por %p99, %p100
      %p102 = scmp.ne.s32.totalorder %s90, %s91
      %p103 = scmp.eq.s32.totalorder %s18, 3
      %p104 = por %p102, %p103
      %p106 = scmp.ne.s32.totalorder %s91, %s105
      %p107 = scmp.eq.s32.totalorder %s18, 0
      %p108 = por %p106, %p107
      %s110 = sadd.s32 %s109, 1
      %p113 = scmp.eq.s32.totalorder %s12, 3
      %p114 = scmp.ne.s32.totalorder %s109, %s111
      %p115 = scmp.eq.s32.totalorder %s12, 0
      %p116 = por %p114, %p115
      %p117 = scmp.ne.s32.totalorder %s109, %s111
      %p118 = scmp.eq.s32.totalorder %s17, 3
      %p119 = por %p117, %p118
      %p120 = scmp.ne.s32.totalorder %s111, %s112
      %p121 = scmp.eq.s32.totalorder %s17, 0
      %p122 = por %p120, %p121
      %p123 = scmp.ne.s32.totalorder %s111, %s112
      %p124 = scmp.eq.s32.totalorder %s18, 3
      %p125 = por %p123, %p124
      %p127 = scmp.ne.s32.totalorder %s112, %s126
      %p128 = scmp.eq.s32.totalorder %s18, 0
      %p129 = por %p127, %p128
      %p130 = scmp.le.s32.totalorder 1, %s12
      %p131 = scmp.lt.s32.totalorder %s12, 5
      %p132 = pnand %p130, %p131
      %p133 = pneg %p132
      // Predicated region
      $region9: #{encoder_forward.7} parent=5 // pred_check
        _
      $region10: #{encoder_forward.7} parent=5 // pred_check_branch
        %135 = sbr.rel (%p132) target = $region12
      $region11: #{encoder_forward.7} parent=5 // pred_region
        %s136 = ssub.s32 %s12, 1
        // Predicated region
        $region13: #{encoder_forward.7} parent=11 // pred_check
          %p137 = pneg %p59
        $region14: #{encoder_forward.7} parent=11 // pred_check_branch
          %139 = sbr.rel (%p137) target = $region16
        $region15: #{encoder_forward.7} parent=11 // pred_region
          _
        $region16: #{encoder_forward.7} parent=11 // pred_fallthru
          _
        // Predicated region
        $region17: #{encoder_forward.7} parent=11 // pred_check
          %p140 = pneg %p80
        $region18: #{encoder_forward.7} parent=11 // pred_check_branch
          %142 = sbr.rel (%p140) target = $region20
        $region19: #{encoder_forward.7} parent=11 // pred_region
          _
        $region20: #{encoder_forward.7} parent=11 // pred_fallthru
          _
      $region12: #{encoder_forward.7} parent=5 // pred_fallthru
        _
      %p143 = scmp.lt.s32.totalorder %s12, 4
      // Predicated region
      $region21: #{encoder_forward.7} parent=5 // pred_check
        %p144 = pneg %p143
      $region22: #{encoder_forward.7} parent=5 // pred_check_branch
        %146 = sbr.rel (%p144) target = $region24
      $region23: #{encoder_forward.7} parent=5 // pred_region
        // Predicated region
        $region25: #{encoder_forward.7} parent=23 // pred_check
          %p147 = pneg %p32
        $region26: #{encoder_forward.7} parent=23 // pred_check_branch
          %149 = sbr.rel (%p147) target = $region28
        $region27: #{encoder_forward.7} parent=23 // pred_region
          %p150 = scmp.lt.s32.totalorder %s12, 3
          %s151 = scalar_select %p150, %s12, 3
          %s152 = smul.addr %s151, 2
          %s153 = scalar_lea.vmem %s0, %s152
        $region28: #{encoder_forward.7} parent=23 // pred_fallthru
          _
      $region24: #{encoder_forward.7} parent=5 // pred_fallthru
        _
      %p154 = scmp.le.s32.totalorder 1, %s12
      %p155 = scmp.lt.s32.totalorder %s12, 5
      %p156 = pnand %p154, %p155
      %p157 = pneg %p156
      // Predicated region
      $region29: #{encoder_forward.7} parent=5 // pred_check
        _
      $region30: #{encoder_forward.7} parent=5 // pred_check_branch
        %159 = sbr.rel (%p156) target = $region32
      $region31: #{encoder_forward.7} parent=5 // pred_region
        %s160 = ssub.s32 %s12, 1
        %p161 = scmp.lt.s32.totalorder %s17, 3
        %s162 = scalar_select %p161, %s17, 3
        %s163 = smul.addr %s162, 2
        %s164 = scalar_lea.vmem %s0, %s163
        %p165 = pneg %p38
        %p166 = pneg %p35
        %p167 = pneg %p59
        %p168 = pneg %p56
        %p169 = pneg %p80
        %p170 = pneg %p77
        %p171 = pneg %p101
        %p172 = pneg %p98
        %p173 = pneg %p122
        %p174 = pneg %p119
        %p175 = scmp.lt.s32.totalorder %s17, 3
        %s176 = scalar_select %p175, %s17, 3
        %s177 = smul.addr %s176, 2
        %s178 = scalar_lea.vmem %s0, %s177
        %v179 = vld [vmem:[%s1] sm:$0xff]
        %v180 = vld [vmem:[%s1 + $0x8] sm:$0xff]
        %v181 = vld [vmem:[%s1 + $0x10] sm:$0xff]
        %v182 = vld [vmem:[%s1 + $0x18] sm:$0xff]
        %v183 = vld [vmem:[%s1 + $0x20] sm:$0xff]
        %v184 = vld [vmem:[%s1 + $0x28] sm:$0xff]
        %v185 = vld [vmem:[%s1 + $0x30] sm:$0xff]
        %v186 = vld [vmem:[%s1 + $0x38] sm:$0xff]
        %v187 = vld [vmem:[%s1 + $0x40] sm:$0xff]
        %v188 = vld [vmem:[%s1 + $0x48] sm:$0xff]
        %v189 = vld [vmem:[%s1 + $0x50] sm:$0xff]
        %v190 = vld [vmem:[%s1 + $0x58] sm:$0xff]
        %v191 = vld [vmem:[%s1 + $0x60] sm:$0xff]
        %v192 = vld [vmem:[%s1 + $0x68] sm:$0xff]
        %v193 = vld [vmem:[%s1 + $0x70] sm:$0xff]
        %v194 = vld [vmem:[%s1 + $0x78] sm:$0xff]
        %v195 = vld [vmem:[%s1 + $0x80] sm:$0xff]
        %v196 = vld [vmem:[%s1 + $0x88] sm:$0xff]
        %v197 = vld [vmem:[%s1 + $0x90] sm:$0xff]
        %v198 = vld [vmem:[%s1 + $0x98] sm:$0xff]
        %v199 = vld [vmem:[%s1 + $0xa0] sm:$0xff]
        %v200 = vld [vmem:[%s1 + $0xa8] sm:$0xff]
        %v201 = vld [vmem:[%s1 + $0xb0] sm:$0xff]
        %v202 = vld [vmem:[%s1 + $0xb8] sm:$0xff]
        %v203 = vld [vmem:[%s1 + $0xc0] sm:$0xff]
        %v204 = vld [vmem:[%s1 + $0xc8] sm:$0xff]
        %v205 = vld [vmem:[%s1 + $0xd0] sm:$0xff]
        %v206 = vld [vmem:[%s1 + $0xd8] sm:$0xff]
        %v207 = vld [vmem:[%s1 + $0xe0] sm:$0xff]
        %v208 = vld [vmem:[%s1 + $0xe8] sm:$0xff]
        %v209 = vld [vmem:[%s1 + $0xf0] sm:$0xff]
        %v210 = vld [vmem:[%s1 + $0xf8] sm:$0xff]
        %v211 = vld [vmem:[%s1 + $0x100] sm:$0xff]
        %v212 = vld [vmem:[%s1 + $0x108] sm:$0xff]
        %v213 = vld [vmem:[%s1 + $0x110] sm:$0xff]
        %v214 = vld [vmem:[%s1 + $0x118] sm:$0xff]
        %v215 = vld [vmem:[%s1 + $0x120] sm:$0xff]
        %v216 = vld [vmem:[%s1 + $0x128] sm:$0xff]
        %v217 = vld [vmem:[%s1 + $0x130] sm:$0xff]
        %v218 = vld [vmem:[%s1 + $0x138] sm:$0xff]
        %v219 = vld [vmem:[%s1 + $0x140] sm:$0xff]
        %v220 = vld [vmem:[%s1 + $0x148] sm:$0xff]
        %v221 = vld [vmem:[%s1 + $0x150] sm:$0xff]
        %v222 = vld [vmem:[%s1 + $0x158] sm:$0xff]
        %v223 = vld [vmem:[%s1 + $0x160] sm:$0xff]
        %v224 = vld [vmem:[%s1 + $0x168] sm:$0xff]
        %v225 = vld [vmem:[%s1 + $0x170] sm:$0xff]
        %v226 = vld [vmem:[%s1 + $0x178] sm:$0xff]
        %v227 = vld [vmem:[%s1 + $0x180] sm:$0xff]
        %v228 = vld [vmem:[%s1 + $0x188] sm:$0xff]
        %v229 = vld [vmem:[%s1 + $0x190] sm:$0xff]
        %v230 = vld [vmem:[%s1 + $0x198] sm:$0xff]
        %v231 = vld [vmem:[%s1 + $0x1a0] sm:$0xff]
        %v232 = vld [vmem:[%s1 + $0x1a8] sm:$0xff]
        %v233 = vld [vmem:[%s1 + $0x1b0] sm:$0xff]
        %v234 = vld [vmem:[%s1 + $0x1b8] sm:$0xff]
        %v235 = vld [vmem:[%s1 + $0x1c0] sm:$0xff]
        %v236 = vld [vmem:[%s1 + $0x1c8] sm:$0xff]
        %v237 = vld [vmem:[%s1 + $0x1d0] sm:$0xff]
        %v238 = vld [vmem:[%s1 + $0x1d8] sm:$0xff]
        %v239 = vld [vmem:[%s1 + $0x1e0] sm:$0xff]
        %v240 = vld [vmem:[%s1 + $0x1e8] sm:$0xff]
        %v241 = vld [vmem:[%s1 + $0x1f0] sm:$0xff]
        %v242 = vld [vmem:[%s1 + $0x1f8] sm:$0xff]
        %p243 = scmp.eq.s32.totalorder %s17, 0
        // Predicated region
        $region33: #{encoder_forward.7} parent=31 // pred_check
          %p244 = pneg %p243
        $region34: #{encoder_forward.7} parent=31 // pred_check_branch
          %246 = sbr.rel (%p244) target = $region36
        $region35: #{encoder_forward.7} parent=31 // pred_region
          %247 = vst [vmem:[%s3] sm:$0x3] 0.0
          %248 = vst [vmem:[#allocation2] sm:$0x3] 0.0
        $region36: #{encoder_forward.7} parent=31 // pred_fallthru
          _
        %v249 = vld [vmem:[%s178] sm:$0x3]
        %v250 = vld [vmem:[%s3] sm:$0x3]
        %v251 = vpack.c.bf16 %v249, %v249
        %v252 = vpack.c.bf16 %v250, %v250
        %v253 = vld [vmem:[%s2] sm:$0xf]
        %v255 = vlaneseq
        %v256 = vshrl.u32 %v255, 7
        %v257 = vsub.s32 0, %v256
        %v258 = vrot.slane %v253, %v257
        %v259 = vlaneseq
        %v260 = vshrl.u32 %v259, 7
        %v261 = vsub.s32 1, %v260
        %v262 = vrot.slane %v253, %v261
        %v263 = vlaneseq
        %v264 = vshrl.u32 %v263, 7
        %v265 = vsub.s32 2, %v264
        %v266 = vrot.slane %v253, %v265
        %v267 = vlaneseq
        %v268 = vshrl.u32 %v267, 7
        %v269 = vsub.s32 3, %v268
        %v270 = vrot.slane %v253, %v269
        %v339 = vunpack.c.l.b16 %v179
        %v340 = vunpack.c.h.b16 %v179
        %v341 = vunpack.c.l.b16 %v180
        %v342 = vunpack.c.h.b16 %v180
        %v343 = vunpack.c.l.b16 %v181
        %v344 = vunpack.c.h.b16 %v181
        %v345 = vunpack.c.l.b16 %v182
        %v346 = vunpack.c.h.b16 %v182
        %v347 = vunpack.c.l.b16 %v183
        %v348 = vunpack.c.h.b16 %v183
        %v349 = vunpack.c.l.b16 %v184
        %v350 = vunpack.c.h.b16 %v184
        %v351 = vunpack.c.l.b16 %v185
        %v352 = vunpack.c.h.b16 %v185
        %v353 = vunpack.c.l.b16 %v186
        %v354 = vunpack.c.h.b16 %v186
        %v355 = vunpack.c.l.b16 %v187
        %v356 = vunpack.c.h.b16 %v187
        %v357 = vunpack.c.l.b16 %v188
        %v358 = vunpack.c.h.b16 %v188
        %v359 = vunpack.c.l.b16 %v189
        %v360 = vunpack.c.h.b16 %v189
        %v361 = vunpack.c.l.b16 %v190
        %v362 = vunpack.c.h.b16 %v190
        %v363 = vunpack.c.l.b16 %v191
        %v364 = vunpack.c.h.b16 %v191
        %v365 = vunpack.c.l.b16 %v192
        %v366 = vunpack.c.h.b16 %v192
        %v367 = vunpack.c.l.b16 %v193
        %v368 = vunpack.c.h.b16 %v193
        %v369 = vunpack.c.l.b16 %v194
        %v370 = vunpack.c.h.b16 %v194
        %v371 = vunpack.c.l.b16 %v195
        %v372 = vunpack.c.h.b16 %v195
        %v373 = vunpack.c.l.b16 %v196
        %v374 = vunpack.c.h.b16 %v196
        %v375 = vunpack.c.l.b16 %v197
        %v376 = vunpack.c.h.b16 %v197
        %v377 = vunpack.c.l.b16 %v198
        %v378 = vunpack.c.h.b16 %v198
        %v379 = vunpack.c.l.b16 %v199
        %v380 = vunpack.c.h.b16 %v199
        %v381 = vunpack.c.l.b16 %v200
        %v382 = vunpack.c.h.b16 %v200
        %v383 = vunpack.c.l.b16 %v201
        %v384 = vunpack.c.h.b16 %v201
        %v385 = vunpack.c.l.b16 %v202
        %v386 = vunpack.c.h.b16 %v202
        %v387 = vunpack.c.l.b16 %v203
        %v388 = vunpack.c.h.b16 %v203
        %v389 = vunpack.c.l.b16 %v204
        %v390 = vunpack.c.h.b16 %v204
        %v391 = vunpack.c.l.b16 %v205
        %v392 = vunpack.c.h.b16 %v205
        %v393 = vunpack.c.l.b16 %v206
        %v394 = vunpack.c.h.b16 %v206
        %v395 = vunpack.c.l.b16 %v207
        %v396 = vunpack.c.h.b16 %v207
        %v397 = vunpack.c.l.b16 %v208
        %v398 = vunpack.c.h.b16 %v208
        %v399 = vunpack.c.l.b16 %v209
        %v400 = vunpack.c.h.b16 %v209
        %v401 = vunpack.c.l.b16 %v210
        %v402 = vunpack.c.h.b16 %v210
        %v403 = vunpack.c.l.b16 %v211
        %v404 = vunpack.c.h.b16 %v211
        %v405 = vunpack.c.l.b16 %v212
        %v406 = vunpack.c.h.b16 %v212
        %v407 = vunpack.c.l.b16 %v213
        %v408 = vunpack.c.h.b16 %v213
        %v409 = vunpack.c.l.b16 %v214
        %v410 = vunpack.c.h.b16 %v214
        %v411 = vunpack.c.l.b16 %v215
        %v412 = vunpack.c.h.b16 %v215
        %v413 = vunpack.c.l.b16 %v216
        %v414 = vunpack.c.h.b16 %v216
        %v415 = vunpack.c.l.b16 %v217
        %v416 = vunpack.c.h.b16 %v217
        %v417 = vunpack.c.l.b16 %v218
        %v418 = vunpack.c.h.b16 %v218
        %v419 = vunpack.c.l.b16 %v219
        %v420 = vunpack.c.h.b16 %v219
        %v421 = vunpack.c.l.b16 %v220
        %v422 = vunpack.c.h.b16 %v220
        %v423 = vunpack.c.l.b16 %v221
        %v424 = vunpack.c.h.b16 %v221
        %v425 = vunpack.c.l.b16 %v222
        %v426 = vunpack.c.h.b16 %v222
        %v427 = vunpack.c.l.b16 %v223
        %v428 = vunpack.c.h.b16 %v223
        %v429 = vunpack.c.l.b16 %v224
        %v430 = vunpack.c.h.b16 %v224
        %v431 = vunpack.c.l.b16 %v225
        %v432 = vunpack.c.h.b16 %v225
        %v433 = vunpack.c.l.b16 %v226
        %v434 = vunpack.c.h.b16 %v226
        %v435 = vunpack.c.l.b16 %v227
        %v436 = vunpack.c.h.b16 %v227
        %v437 = vunpack.c.l.b16 %v228
        %v438 = vunpack.c.h.b16 %v228
        %v439 = vunpack.c.l.b16 %v229
        %v440 = vunpack.c.h.b16 %v229
        %v441 = vunpack.c.l.b16 %v230
        %v442 = vunpack.c.h.b16 %v230
        %v443 = vunpack.c.l.b16 %v231
        %v444 = vunpack.c.h.b16 %v231
        %v445 = vunpack.c.l.b16 %v232
        %v446 = vunpack.c.h.b16 %v232
        %v447 = vunpack.c.l.b16 %v233
        %v448 = vunpack.c.h.b16 %v233
        %v449 = vunpack.c.l.b16 %v234
        %v450 = vunpack.c.h.b16 %v234
        %v451 = vunpack.c.l.b16 %v235
        %v452 = vunpack.c.h.b16 %v235
        %v453 = vunpack.c.l.b16 %v236
        %v454 = vunpack.c.h.b16 %v236
        %v455 = vunpack.c.l.b16 %v237
        %v456 = vunpack.c.h.b16 %v237
        %v457 = vunpack.c.l.b16 %v238
        %v458 = vunpack.c.h.b16 %v238
        %v459 = vunpack.c.l.b16 %v239
        %v460 = vunpack.c.h.b16 %v239
        %v461 = vunpack.c.l.b16 %v240
        %v462 = vunpack.c.h.b16 %v240
        %v463 = vunpack.c.l.b16 %v241
        %v464 = vunpack.c.h.b16 %v241
        %v465 = vunpack.c.l.b16 %v242
        %v466 = vunpack.c.h.b16 %v242
        %v467 = vpack.c.b16 %v343, %v339
        %v468 = vpack.c.b16 %v344, %v340
        %v469 = vpack.c.b16 %v345, %v341
        %v470 = vpack.c.b16 %v346, %v342
        %v471 = vpack.c.b16 %v351, %v347
        %v472 = vpack.c.b16 %v352, %v348
        %v473 = vpack.c.b16 %v353, %v349
        %v474 = vpack.c.b16 %v354, %v350
        %v475 = vpack.c.b16 %v359, %v355
        %v476 = vpack.c.b16 %v360, %v356
        %v477 = vpack.c.b16 %v361, %v357
        %v478 = vpack.c.b16 %v362, %v358
        %v479 = vpack.c.b16 %v367, %v363
        %v480 = vpack.c.b16 %v368, %v364
        %v481 = vpack.c.b16 %v369, %v365
        %v482 = vpack.c.b16 %v370, %v366
        %v483 = vpack.c.b16 %v375, %v371
        %v484 = vpack.c.b16 %v376, %v372
        %v485 = vpack.c.b16 %v377, %v373
        %v486 = vpack.c.b16 %v378, %v374
        %v487 = vpack.c.b16 %v383, %v379
        %v488 = vpack.c.b16 %v384, %v380
        %v489 = vpack.c.b16 %v385, %v381
        %v490 = vpack.c.b16 %v386, %v382
        %v491 = vpack.c.b16 %v391, %v387
        %v492 = vpack.c.b16 %v392, %v388
        %v493 = vpack.c.b16 %v393, %v389
        %v494 = vpack.c.b16 %v394, %v390
        %v495 = vpack.c.b16 %v399, %v395
        %v496 = vpack.c.b16 %v400, %v396
        %v497 = vpack.c.b16 %v401, %v397
        %v498 = vpack.c.b16 %v402, %v398
        %v499 = vpack.c.b16 %v407, %v403
        %v500 = vpack.c.b16 %v408, %v404
        %v501 = vpack.c.b16 %v409, %v405
        %v502 = vpack.c.b16 %v410, %v406
        %v503 = vpack.c.b16 %v415, %v411
        %v504 = vpack.c.b16 %v416, %v412
        %v505 = vpack.c.b16 %v417, %v413
        %v506 = vpack.c.b16 %v418, %v414
        %v507 = vpack.c.b16 %v423, %v419
        %v508 = vpack.c.b16 %v424, %v420
        %v509 = vpack.c.b16 %v425, %v421
        %v510 = vpack.c.b16 %v426, %v422
        %v511 = vpack.c.b16 %v431, %v427
        %v512 = vpack.c.b16 %v432, %v428
        %v513 = vpack.c.b16 %v433, %v429
        %v514 = vpack.c.b16 %v434, %v430
        %v515 = vpack.c.b16 %v439, %v435
        %v516 = vpack.c.b16 %v440, %v436
        %v517 = vpack.c.b16 %v441, %v437
        %v518 = vpack.c.b16 %v442, %v438
        %v519 = vpack.c.b16 %v447, %v443
        %v520 = vpack.c.b16 %v448, %v444
        %v521 = vpack.c.b16 %v449, %v445
        %v522 = vpack.c.b16 %v450, %v446
        %v523 = vpack.c.b16 %v455, %v451
        %v524 = vpack.c.b16 %v456, %v452
        %v525 = vpack.c.b16 %v457, %v453
        %v526 = vpack.c.b16 %v458, %v454
        %v527 = vpack.c.b16 %v463, %v459
        %v528 = vpack.c.b16 %v464, %v460
        %v529 = vpack.c.b16 %v465, %v461
        %v530 = vpack.c.b16 %v466, %v462
        %595 = vmatprep.subr.bf16.mxu0 %v496
        %596 = vmatpush1.bf16.msra.mxu0 %v495
        %597 = vmatprep.subr.bf16.mxu0 %v492
        %598 = vmatpush1.bf16.msra.mxu0 %v491
        %599 = vmatprep.subr.bf16.mxu0 %v488
        %600 = vmatpush1.bf16.msra.mxu0 %v487
        %601 = vmatprep.subr.bf16.mxu0 %v484
        %602 = vmatpush1.bf16.msra.mxu0 %v483
        %603 = vmatprep.subr.bf16.mxu0 %v480
        %604 = vmatpush1.bf16.msra.mxu0 %v479
        %605 = vmatprep.subr.bf16.mxu0 %v476
        %606 = vmatpush1.bf16.msra.mxu0 %v475
        %607 = vmatprep.subr.bf16.mxu0 %v472
        %608 = vmatpush1.bf16.msra.mxu0 %v471
        %609 = vmatprep.subr.bf16.mxu0 %v468
        %610 = vmatpush1.bf16.msra.mxu0 %v467
        %611 = vmatprep.subr.bf16.mxu0 %v528
        %612 = vmatpush2.bf16.msra.mxu0 %v527
        %613 = vmatprep.subr.bf16.mxu0 %v524
        %614 = vmatpush2.bf16.msra.mxu0 %v523
        %615 = vmatprep.subr.bf16.mxu0 %v520
        %616 = vmatpush2.bf16.msra.mxu0 %v519
        %617 = vmatprep.subr.bf16.mxu0 %v516
        %618 = vmatpush2.bf16.msra.mxu0 %v515
        %619 = vmatprep.subr.bf16.mxu0 %v512
        %620 = vmatpush2.bf16.msra.mxu0 %v511
        %621 = vmatprep.subr.bf16.mxu0 %v508
        %622 = vmatpush2.bf16.msra.mxu0 %v507
        %623 = vmatprep.subr.bf16.mxu0 %v504
        %624 = vmatpush2.bf16.msra.mxu0 %v503
        %625 = vmatprep.subr.bf16.mxu0 %v500
        %626 = vmatpush2.bf16.msra.mxu0 %v499
        %627 = vmatprep.mubr.bf16.mxu0 %v252
        %628 = vmatmul.mubr.bf16.gmra.mxu0 %v251
        %v629 = vpop.f32.mrf.mxu0
        %v630 = vadd.f32 %v258, %v629
        %v631 = vpop.f32.mrf.mxu0
        %v632 = vadd.f32 %v262, %v631
        %v633 = vpop.f32.mrf.mxu0
        %v634 = vpop.f32.mrf.mxu0
        %635 = vdwg.mxu0
        %636 = vmatprep.subr.bf16.mxu0 %v498
        %637 = vmatpush1.bf16.msra.mxu0 %v497
        %638 = vmatprep.subr.bf16.mxu0 %v494
        %639 = vmatpush1.bf16.msra.mxu0 %v493
        %640 = vmatprep.subr.bf16.mxu0 %v490
        %641 = vmatpush1.bf16.msra.mxu0 %v489
        %642 = vmatprep.subr.bf16.mxu0 %v486
        %643 = vmatpush1.bf16.msra.mxu0 %v485
        %644 = vmatprep.subr.bf16.mxu0 %v482
        %645 = vmatpush1.bf16.msra.mxu0 %v481
        %646 = vmatprep.subr.bf16.mxu0 %v478
        %647 = vmatpush1.bf16.msra.mxu0 %v477
        %648 = vmatprep.subr.bf16.mxu0 %v474
        %649 = vmatpush1.bf16.msra.mxu0 %v473
        %650 = vmatprep.subr.bf16.mxu0 %v470
        %651 = vmatpush1.bf16.msra.mxu0 %v469
        %652 = vmatprep.subr.bf16.mxu0 %v530
        %653 = vmatpush2.bf16.msra.mxu0 %v529
        %654 = vmatprep.subr.bf16.mxu0 %v526
        %655 = vmatpush2.bf16.msra.mxu0 %v525
        %656 = vmatprep.subr.bf16.mxu0 %v522
        %657 = vmatpush2.bf16.msra.mxu0 %v521
        %658 = vmatprep.subr.bf16.mxu0 %v518
        %659 = vmatpush2.bf16.msra.mxu0 %v517
        %660 = vmatprep.subr.bf16.mxu0 %v514
        %661 = vmatpush2.bf16.msra.mxu0 %v513
        %662 = vmatprep.subr.bf16.mxu0 %v510
        %663 = vmatpush2.bf16.msra.mxu0 %v509
        %664 = vmatprep.subr.bf16.mxu0 %v506
        %665 = vmatpush2.bf16.msra.mxu0 %v505
        %666 = vmatprep.subr.bf16.mxu0 %v502
        %667 = vmatpush2.bf16.msra.mxu0 %v501
        %668 = vmatprep.mubr.bf16.mxu0 %v252
        %669 = vmatmul.mubr.bf16.gmra.mxu0 %v251
        %v670 = vpop.f32.mrf.mxu0
        %v671 = vadd.f32 %v266, %v670
        %v672 = vpop.f32.mrf.mxu0
        %v673 = vadd.f32 %v270, %v672
        %v674 = vpop.f32.mrf.mxu0
        %v675 = vpop.f32.mrf.mxu0
        %676 = vdwg.mxu0
        %v677 = vmul.f32 %v630, 0.5
        %v678 = vtanh.pop %v677
        %v679 = vmul.f32 %v678, 0.5
        %v680 = vadd.f32 %v679, 0.5
        %v681 = vmul.f32 %v632, 0.5
        %v682 = vtanh.pop %v681
        %v683 = vmul.f32 %v682, 0.5
        %v684 = vadd.f32 %v683, 0.5
        %v685 = vtanh.pop %v671
        %v686 = vmul.f32 %v673, 0.5
        %v687 = vtanh.pop %v686
        %v688 = vmul.f32 %v687, 0.5
        %v689 = vadd.f32 %v688, 0.5
        %v690 = vld [vmem:[#allocation2] sm:$0x3]
        %v691 = vmul.f32 %v684, %v690
        %v692 = vmul.f32 %v680, %v685
        %v693 = vadd.f32 %v691, %v692
        %v694 = vtanh.pop %v693
        %v695 = vmul.f32 %v689, %v694
        %696 = vst [vmem:[%s3] sm:$0x3] %v695
        %697 = vst [vmem:[#allocation2] sm:$0x3] %v693
        // Predicated region
        $region37: #{encoder_forward.7} parent=31 // pred_check
          %p698 = pneg %p98
        $region38: #{encoder_forward.7} parent=31 // pred_check_branch
          %700 = sbr.rel (%p698) target = $region40
        $region39: #{encoder_forward.7} parent=31 // pred_region
          _
        $region40: #{encoder_forward.7} parent=31 // pred_fallthru
          _
        // Predicated region
        $region41: #{encoder_forward.7} parent=31 // pred_check
          %p701 = pneg %p119
        $region42: #{encoder_forward.7} parent=31 // pred_check_branch
          %703 = sbr.rel (%p701) target = $region44
        $region43: #{encoder_forward.7} parent=31 // pred_region
          %s705 = ssub.s32 32, 32
          %706 = vsyncadd [#allocation3], %s705
          %s708 = sshll.u32 [#allocation2], 4
          %s709 = int_to_ptr.vmem [resolvable:$true] %s708
          %711 = dma.vmem_to_hbm [thread:$0]  %s709, 32, %s4, [#allocation3]
        $region44: #{encoder_forward.7} parent=31 // pred_fallthru
          _
        // Predicated region
        $region45: #{encoder_forward.7} parent=31 // pred_check
          %p712 = pneg %p98
        $region46: #{encoder_forward.7} parent=31 // pred_check_branch
          %714 = sbr.rel (%p712) target = $region48
        $region47: #{encoder_forward.7} parent=31 // pred_region
          _
        $region48: #{encoder_forward.7} parent=31 // pred_fallthru
          _
        // Predicated region
        $region49: #{encoder_forward.7} parent=31 // pred_check
          %p715 = pneg %p119
        $region50: #{encoder_forward.7} parent=31 // pred_check_branch
          %717 = sbr.rel (%p715) target = $region52
        $region51: #{encoder_forward.7} parent=31 // pred_region
          %718 = dma.done [#allocation3], 32
        $region52: #{encoder_forward.7} parent=31 // pred_fallthru
          _
      $region32: #{encoder_forward.7} parent=5 // pred_fallthru
        _
      %p719 = scmp.le.s32.totalorder 2, %s12
      // Predicated region
      $region53: #{encoder_forward.7} parent=5 // pred_check
        %p720 = pneg %p719
      $region54: #{encoder_forward.7} parent=5 // pred_check_branch
        %722 = sbr.rel (%p720) target = $region56
      $region55: #{encoder_forward.7} parent=5 // pred_region
        %s723 = ssub.s32 %s12, 2
      $region56: #{encoder_forward.7} parent=5 // pred_fallthru
        _
    $region6: #{encoder_forward.7} parent=1 // loop_footer
      %s16 = sadd.s32 1, %s12
    $region7: #{encoder_forward.7} parent=1 // loop_footer_branch
      %11 = sbr.rel target = $region3
    $region8: #{encoder_forward.7} parent=1 // loop_exit
      _
    %724 = vsyncpa [#allocation3], 1
    %s725 = scalar_lea.sflag [#allocation3], 1
    %726 = vsyncpa %s725, 1

</llo_original>
